<compile_context>
chip_gen: v6e
topology: v6e:2x2x1
jax: 0.10.0
libtpu: 0.0.40
codegen_flags: <defaults>
</compile_context>

<pallas_src>
import math
import numpy as np
import jax
import jax.numpy as jnp
from jax.experimental import pallas as pl
from jax.experimental.pallas import tpu as pltpu

LOCAL_C = 64          # channels of local_feat (conv1's per-point part)
NUM_SEG_OUT = 2       # real segmentation output channels
OUT_C_PAD = 8         # final layer padded 2 -> 8 output channels (sublane minimum)
TN_MAX = 1024         # max point tile (lane axis)


def _round_up(x, m):
    return (x + m - 1) // m * m


def _pick_tile(n_pts, batch_size):
    """Pad N to a multiple of 128, then pick the largest tile tn <= TN_MAX dividing it.
    For B < 2 keep >= 2 point blocks when possible so both v7x TensorCores get work."""
    n_pad = _round_up(max(n_pts, 1), 128)
    m = n_pad // 128
    max_d = TN_MAX // 128
    if batch_size < 2 and m >= 2:
        max_d = min(max_d, m // 2)
    d = 1
    for cand in range(1, min(max_d, m) + 1):
        if m % cand == 0:
            d = cand
    return n_pad, 128 * d


def _pointseg_kernel(x_ref, g_ref, w1, w2, b2, w3, b3, w4, b4, w5, b5, out_ref):
    # x_ref: (1, 64, TN) f32 local features (native NCL layout);
    # g_ref: (1, 512, 1) f32 per-batch bias (hoisted global-feat/one-hot part of conv1
    #        plus the folded conv1/BN bias).
    # Weights: (Cout, Cin) bf16; biases: (Cout, 1) f32.
    # Each layer: (Cout,Cin)@(Cin,TN) on the MXU with f32 accumulation; bias+ReLU in f32;
    # result cast to bf16 before the next matmul.
    x = x_ref[0].astype(jnp.bfloat16)                                   # (64, TN)
    h = jnp.maximum(jnp.dot(w1[...], x, preferred_element_type=jnp.float32)
                    + g_ref[0], 0.0).astype(jnp.bfloat16)               # (512, TN)
    h = jnp.maximum(jnp.dot(w2[...], h, preferred_element_type=jnp.float32)
                    + b2[...], 0.0).astype(jnp.bfloat16)                # (256, TN)
    h = jnp.maximum(jnp.dot(w3[...], h, preferred_element_type=jnp.float32)
                    + b3[...], 0.0).astype(jnp.bfloat16)                # (128, TN)
    h = jnp.maximum(jnp.dot(w4[...], h, preferred_element_type=jnp.float32)
                    + b4[...], 0.0).astype(jnp.bfloat16)                # (128, TN)
    # Dropout(p=0.5) -> identity in inference mode.
    out_ref[0] = (jnp.dot(w5[...], h, preferred_element_type=jnp.float32)
                  + b5[...]).astype(out_ref.dtype)                      # (8, TN)


def pointseg_mlp(x_bcn, g_bias, params, tn):
    """x_bcn: (B, 64, Np) f32 local feats with Np % tn == 0; g_bias: (B, 512, 1) f32."""
    B, C, N = x_bcn.shape
    w1 = params['w1_local']
    (w2, b2), (w3, b3), (w4, b4), (w5, b5) = params['layers']

    def xmap(b, i):
        return (b, 0, i)

    def gmap(b, i):
        return (b, 0, 0)

    def wmap(b, i):
        return (0, 0)

    in_specs = [pl.BlockSpec((1, C, tn), xmap),
                pl.BlockSpec((1, g_bias.shape[1], 1), gmap),
                pl.BlockSpec(w1.shape, wmap)]
    for w, bb in ((w2, b2), (w3, b3), (w4, b4), (w5, b5)):
        in_specs.append(pl.BlockSpec(w.shape, wmap))
        in_specs.append(pl.BlockSpec(bb.shape, wmap))
    out_specs = pl.BlockSpec((1, OUT_C_PAD, tn), xmap)

    flops = 2 * B * N * (C * 512 + 512 * 256 + 256 * 128 + 128 * 128 + 128 * OUT_C_PAD)
    weight_bytes = sum(int(np.prod(a.shape)) * 2 for a in (w1, w2, w3, w4, w5))
    bias_bytes = sum(int(np.prod(a.shape)) * 4 for a in (b2, b3, b4, b5))
    bytes_accessed = (int(x_bcn.size) * 4 + B * OUT_C_PAD * N * 4
                      + int(g_bias.size) * 4 + weight_bytes + bias_bytes)

    return pl.pallas_call(
        _pointseg_kernel,
        out_shape=jax.ShapeDtypeStruct((B, OUT_C_PAD, N), jnp.float32),
        grid_spec=pltpu.PrefetchScalarGridSpec(
            num_scalar_prefetch=0,
            grid=(B, N // tn),
            in_specs=in_specs,
            out_specs=out_specs,
        ),
        compiler_params=pltpu.CompilerParams(
            dimension_semantics=("parallel", "parallel"),
            vmem_limit_bytes=32 * 1024 * 1024),
        cost_estimate=pl.CostEstimate(flops=flops, transcendentals=0,
                                      bytes_accessed=bytes_accessed),
    )(x_bcn, g_bias, w1, w2, b2, w3, b3, w4, b4, w5, b5)


def init_params(key, num_classes):
    """Deterministic synthetic params; BN folded into the 1x1-conv weights (inference)."""
    c0 = 1088 + num_classes
    dims = [(c0, 512), (512, 256), (256, 128), (128, 128), (128, 2)]
    has_bn = [True, True, True, True, False]
    eps = 1e-5
    folded = []  # (W (Cout, Cin) f32, b (Cout,) f32) per layer
    for (cin, cout), bn in zip(dims, has_bn):
        key, kw, kb, kg, kbeta, km, kv = jax.random.split(key, 7)
        bound = 1.0 / math.sqrt(cin)
        W = jax.random.uniform(kw, (cout, cin), jnp.float32, -bound, bound)
        b = jax.random.uniform(kb, (cout,), jnp.float32, -bound, bound)
        if bn:
            gamma = jax.random.uniform(kg, (cout,), jnp.float32, 0.5, 1.5)
            beta = 0.1 * jax.random.normal(kbeta, (cout,), jnp.float32)
            rmean = 0.1 * jax.random.normal(km, (cout,), jnp.float32)
            rvar = jax.random.uniform(kv, (cout,), jnp.float32, 0.5, 1.5)
            scale = gamma / jnp.sqrt(rvar + eps)
            W = W * scale[:, None]
            b = (b - rmean) * scale + beta
        folded.append((W, b))

    # Layer 1 split: per-point local part (Cout, 64) bf16 vs per-batch global part (f32).
    w1, b1 = folded[0]
    w1_local = w1[:, :LOCAL_C].astype(jnp.bfloat16)        # (512, 64)
    w1_global = w1[:, LOCAL_C:]                            # (512, 1024 + nc) f32

    layers = []
    for i in range(1, 5):
        w, b = folded[i]
        if i == 4:  # pad final layer 2 -> 8 output channels (sublane minimum)
            w = jnp.pad(w, ((0, OUT_C_PAD - w.shape[0]), (0, 0)))
            b = jnp.pad(b, (0, OUT_C_PAD - b.shape[0]))
        layers.append((w.astype(jnp.bfloat16), b.reshape(-1, 1)))   # bf16 W, f32 (Cout,1) bias

    return {'w1_local': w1_local, 'w1_global': w1_global, 'b1': b1.reshape(-1, 1),
            'layers': layers, 'folded_f32': folded, 'num_classes': num_classes}


def _global_bias(data_dict, params):
    """Per-batch hoisted contribution of conv1: global/one-hot channels, + folded bias.
    Returns (B, 512, 1) f32."""
    bs = data_dict['batch_size']
    global_vec = jnp.concatenate(
        [data_dict['global_feat'].reshape(bs, -1),
         data_dict['cls_pred'].reshape(bs, -1)], axis=1)               # (B, 1024 + nc)
    g = jnp.einsum('bc,oc->bo', global_vec, params['w1_global']) + params['b1'].reshape(1, -1)
    return g[:, :, None]                                               # (B, 512, 1)


def pointseg_forward(data_dict, params):
    bs = data_dict['batch_size']
    n_pts = data_dict['points'].shape[2]

    g_bias = _global_bias(data_dict, params).astype(jnp.float32)       # (B, 512, 1)

    # local_feat stays in its native (B, 64, N) layout -- no wrapper transpose/cast.
    local = data_dict['local_feat']
    n_pad, tn = _pick_tile(n_pts, bs)
    if n_pad != n_pts:
        local = jnp.pad(local, ((0, 0), (0, 0), (0, n_pad - n_pts)))

    out = pointseg_mlp(local, g_bias, params, tn)                      # (B, 8, n_pad) f32
    # seg_pred == x.transpose(2, 1) in the original module: (B, N, 2)
    seg_pred = jnp.transpose(out[:, :NUM_SEG_OUT, :n_pts], (0, 2, 1))

    new_dict = dict(data_dict)
    new_dict['seg_logits'] = seg_pred
    new_dict.pop('global_feat')
    new_dict.pop('local_feat')
    return new_dict


def _reference_seg_logits(data_dict, params):
    """Pure-JAX reference mirroring the kernel math (bf16 operands, f32 accumulation)."""
    g_bias = _global_bias(data_dict, params)                           # (B, 512, 1)
    x = data_dict['local_feat'].astype(jnp.bfloat16)                   # (B, 64, N)
    h = jnp.maximum(jnp.einsum('oc,bcn->bon', params['w1_local'], x,
                               preferred_element_type=jnp.float32) + g_bias, 0.0)
    for i, (w, b) in enumerate(params['layers']):
        h = jnp.einsum('oc,bcn->bon', w, h.astype(jnp.bfloat16),
                       preferred_element_type=jnp.float32) + b
        if i < 3:
            h = jnp.maximum(h, 0.0)
    return jnp.transpose(h[:, :NUM_SEG_OUT, :], (0, 2, 1))


def _reference_seg_logits_torchlike(data_dict, params):
    """f32 reference following the original PyTorch forward (concat + tile + folded BN)."""
    bs = data_dict['batch_size']
    n_pts = data_dict['points'].shape[2]
    expand_one_hot_vec = data_dict['cls_pred'].reshape(bs, -1, 1)
    expand_global_feat = jnp.concatenate(
        [data_dict['global_feat'], expand_one_hot_vec], axis=1)
    expand_global_feat_repeat = jnp.tile(
        expand_global_feat.reshape(bs, -1, 1), (1, 1, n_pts))
    concat_feat = jnp.concatenate(
        [data_dict['local_feat'], expand_global_feat_repeat], axis=1)  # (B, C0, N)
    h = concat_feat
    for i, (w, b) in enumerate(params['folded_f32']):
        h = jnp.einsum('oc,bcn->bon', w, h) + b.reshape(1, -1, 1)
        if i < 4:
            h = jnp.maximum(h, 0.0)
    return jnp.transpose(h, (0, 2, 1))                                 # (B, N, 2)


if __name__ == "__main__":
    key = jax.random.PRNGKey(0)
    num_classes = 3
    bs, n_pts = 2, 256
    k1, k2, k3, k4, kp = jax.random.split(key, 5)

    data_dict = {
        'batch_size': bs,
        'points': jax.random.normal(k1, (bs, 4, n_pts), jnp.float32),
        'local_feat': jax.random.normal(k2, (bs, 64, n_pts), jnp.float32),
        'global_feat': jax.random.normal(k3, (bs, 1024, 1), jnp.float32),
        'cls_pred': jax.random.normal(k4, (bs, num_classes), jnp.float32),
    }
    params = init_params(kp, num_classes)

    out_dict = pointseg_forward(data_dict, params)
    seg = jax.block_until_ready(out_dict['seg_logits'])
    assert seg.shape == (bs, n_pts, NUM_SEG_OUT), seg.shape
    assert 'global_feat' not in out_dict and 'local_feat' not in out_dict

    ref = jax.block_until_ready(_reference_seg_logits(data_dict, params))
    assert np.allclose(np.asarray(seg), np.asarray(ref), atol=2e-3, rtol=2e-3)

    ref32 = jax.block_until_ready(_reference_seg_logits_torchlike(data_dict, params))
    assert np.allclose(np.asarray(seg), np.asarray(ref32), atol=5e-2, rtol=5e-2)

    print("KERNEL_OK")
</pallas_src>

<mosaic_0001>
module attributes {stable_mosaic.version = 11 : i64} {
  func.func @_pointseg_kernel(%arg0: i32, %arg1: i32, %arg2: memref<1x64x256xf32, #tpu.memory_space<vmem>>, %arg3: memref<1x512x1xf32, #tpu.memory_space<vmem>>, %arg4: memref<512x64xbf16, #tpu.memory_space<vmem>>, %arg5: memref<256x512xbf16, #tpu.memory_space<vmem>>, %arg6: memref<256x1xf32, #tpu.memory_space<vmem>>, %arg7: memref<128x256xbf16, #tpu.memory_space<vmem>>, %arg8: memref<128x1xf32, #tpu.memory_space<vmem>>, %arg9: memref<128x128xbf16, #tpu.memory_space<vmem>>, %arg10: memref<128x1xf32, #tpu.memory_space<vmem>>, %arg11: memref<8x128xbf16, #tpu.memory_space<vmem>>, %arg12: memref<8x1xf32, #tpu.memory_space<vmem>>, %arg13: memref<1x8x256xf32, #tpu.memory_space<vmem>>) attributes {dimension_semantics = [#tpu.dimension_semantics<parallel>, #tpu.dimension_semantics<parallel>], iteration_bounds = array<i64: 2, 1>, scalar_prefetch = 0 : i64, scratch_operands = 0 : i64, tpu.core_type = #tpu.core_type<tc>, window_params = [{transform_indices = @transform_0, window_bounds = array<i64: 1, 64, 256>}, {transform_indices = @transform_1, window_bounds = array<i64: 1, 512, 1>}, {pipeline_mode = #tpu.pipeline_mode<synchronous>, transform_indices = @transform_2, window_bounds = array<i64: 512, 64>}, {pipeline_mode = #tpu.pipeline_mode<synchronous>, transform_indices = @transform_3, window_bounds = array<i64: 256, 512>}, {pipeline_mode = #tpu.pipeline_mode<synchronous>, transform_indices = @transform_4, window_bounds = array<i64: 256, 1>}, {pipeline_mode = #tpu.pipeline_mode<synchronous>, transform_indices = @transform_5, window_bounds = array<i64: 128, 256>}, {pipeline_mode = #tpu.pipeline_mode<synchronous>, transform_indices = @transform_6, window_bounds = array<i64: 128, 1>}, {pipeline_mode = #tpu.pipeline_mode<synchronous>, transform_indices = @transform_7, window_bounds = array<i64: 128, 128>}, {pipeline_mode = #tpu.pipeline_mode<synchronous>, transform_indices = @transform_8, window_bounds = array<i64: 128, 1>}, {pipeline_mode = #tpu.pipeline_mode<synchronous>, transform_indices = @transform_9, window_bounds = array<i64: 8, 128>}, {pipeline_mode = #tpu.pipeline_mode<synchronous>, transform_indices = @transform_10, window_bounds = array<i64: 8, 1>}, {transform_indices = @transform_11, window_bounds = array<i64: 1, 8, 256>}]} {
    %c0 = arith.constant 0 : index
    %c0_0 = arith.constant 0 : index
    %c0_1 = arith.constant 0 : index
    %0 = vector.load %arg2[%c0, %c0_0, %c0_1] : memref<1x64x256xf32, #tpu.memory_space<vmem>>, vector<1x64x256xf32>
    %1 = vector.shape_cast %0 : vector<1x64x256xf32> to vector<64x256xf32>
    %2 = arith.truncf %1 : vector<64x256xf32> to vector<64x256xbf16>
    %c0_2 = arith.constant 0 : index
    %c0_3 = arith.constant 0 : index
    %3 = vector.load %arg4[%c0_2, %c0_3] : memref<512x64xbf16, #tpu.memory_space<vmem>>, vector<512x64xbf16>
    %cst = arith.constant dense<0.000000e+00> : vector<512x256xf32>
    %4 = tpu.matmul %3, %2, %cst {dimension_numbers = #tpu.dot_dimension_numbers<[1], [0], [0], [1], [0, 0, 1, 1], [], []>} : vector<512x64xbf16>, vector<64x256xbf16>, vector<512x256xf32> -> vector<512x256xf32>
    %c0_4 = arith.constant 0 : index
    %c0_5 = arith.constant 0 : index
    %c0_6 = arith.constant 0 : index
    %5 = vector.load %arg3[%c0_4, %c0_5, %c0_6] : memref<1x512x1xf32, #tpu.memory_space<vmem>>, vector<1x512x1xf32>
    %6 = vector.shape_cast %5 : vector<1x512x1xf32> to vector<512x1xf32>
    %7 = vector.broadcast %6 : vector<512x1xf32> to vector<512x256xf32>
    %8 = arith.addf %4, %7 : vector<512x256xf32>
    %cst_7 = arith.constant 0.000000e+00 : f32
    %9 = vector.broadcast %cst_7 : f32 to vector<512x256xf32>
    %10 = arith.maximumf %8, %9 : vector<512x256xf32>
    %11 = arith.truncf %10 : vector<512x256xf32> to vector<512x256xbf16>
    %c0_8 = arith.constant 0 : index
    %c0_9 = arith.constant 0 : index
    %12 = vector.load %arg5[%c0_8, %c0_9] : memref<256x512xbf16, #tpu.memory_space<vmem>>, vector<256x512xbf16>
    %cst_10 = arith.constant dense<0.000000e+00> : vector<256x256xf32>
    %13 = tpu.matmul %12, %11, %cst_10 {dimension_numbers = #tpu.dot_dimension_numbers<[1], [0], [0], [1], [0, 0, 1, 1], [], []>} : vector<256x512xbf16>, vector<512x256xbf16>, vector<256x256xf32> -> vector<256x256xf32>
    %c0_11 = arith.constant 0 : index
    %c0_12 = arith.constant 0 : index
    %14 = vector.load %arg6[%c0_11, %c0_12] : memref<256x1xf32, #tpu.memory_space<vmem>>, vector<256x1xf32>
    %15 = vector.broadcast %14 : vector<256x1xf32> to vector<256x256xf32>
    %16 = arith.addf %13, %15 : vector<256x256xf32>
    %cst_13 = arith.constant 0.000000e+00 : f32
    %17 = vector.broadcast %cst_13 : f32 to vector<256x256xf32>
    %18 = arith.maximumf %16, %17 : vector<256x256xf32>
    %19 = arith.truncf %18 : vector<256x256xf32> to vector<256x256xbf16>
    %c0_14 = arith.constant 0 : index
    %c0_15 = arith.constant 0 : index
    %20 = vector.load %arg7[%c0_14, %c0_15] : memref<128x256xbf16, #tpu.memory_space<vmem>>, vector<128x256xbf16>
    %cst_16 = arith.constant dense<0.000000e+00> : vector<128x256xf32>
    %21 = tpu.matmul %20, %19, %cst_16 {dimension_numbers = #tpu.dot_dimension_numbers<[1], [0], [0], [1], [0, 0, 1, 1], [], []>} : vector<128x256xbf16>, vector<256x256xbf16>, vector<128x256xf32> -> vector<128x256xf32>
    %c0_17 = arith.constant 0 : index
    %c0_18 = arith.constant 0 : index
    %22 = vector.load %arg8[%c0_17, %c0_18] : memref<128x1xf32, #tpu.memory_space<vmem>>, vector<128x1xf32>
    %23 = vector.broadcast %22 : vector<128x1xf32> to vector<128x256xf32>
    %24 = arith.addf %21, %23 : vector<128x256xf32>
    %cst_19 = arith.constant 0.000000e+00 : f32
    %25 = vector.broadcast %cst_19 : f32 to vector<128x256xf32>
    %26 = arith.maximumf %24, %25 : vector<128x256xf32>
    %27 = arith.truncf %26 : vector<128x256xf32> to vector<128x256xbf16>
    %c0_20 = arith.constant 0 : index
    %c0_21 = arith.constant 0 : index
    %28 = vector.load %arg9[%c0_20, %c0_21] : memref<128x128xbf16, #tpu.memory_space<vmem>>, vector<128x128xbf16>
    %cst_22 = arith.constant dense<0.000000e+00> : vector<128x256xf32>
    %29 = tpu.matmul %28, %27, %cst_22 {dimension_numbers = #tpu.dot_dimension_numbers<[1], [0], [0], [1], [0, 0, 1, 1], [], []>} : vector<128x128xbf16>, vector<128x256xbf16>, vector<128x256xf32> -> vector<128x256xf32>
    %c0_23 = arith.constant 0 : index
    %c0_24 = arith.constant 0 : index
    %30 = vector.load %arg10[%c0_23, %c0_24] : memref<128x1xf32, #tpu.memory_space<vmem>>, vector<128x1xf32>
    %31 = vector.broadcast %30 : vector<128x1xf32> to vector<128x256xf32>
    %32 = arith.addf %29, %31 : vector<128x256xf32>
    %cst_25 = arith.constant 0.000000e+00 : f32
    %33 = vector.broadcast %cst_25 : f32 to vector<128x256xf32>
    %34 = arith.maximumf %32, %33 : vector<128x256xf32>
    %35 = arith.truncf %34 : vector<128x256xf32> to vector<128x256xbf16>
    %c0_26 = arith.constant 0 : index
    %c0_27 = arith.constant 0 : index
    %36 = vector.load %arg11[%c0_26, %c0_27] : memref<8x128xbf16, #tpu.memory_space<vmem>>, vector<8x128xbf16>
    %cst_28 = arith.constant dense<0.000000e+00> : vector<8x256xf32>
    %37 = tpu.matmul %36, %35, %cst_28 {dimension_numbers = #tpu.dot_dimension_numbers<[1], [0], [0], [1], [0, 0, 1, 1], [], []>} : vector<8x128xbf16>, vector<128x256xbf16>, vector<8x256xf32> -> vector<8x256xf32>
    %c0_29 = arith.constant 0 : index
    %c0_30 = arith.constant 0 : index
    %38 = vector.load %arg12[%c0_29, %c0_30] : memref<8x1xf32, #tpu.memory_space<vmem>>, vector<8x1xf32>
    %39 = vector.broadcast %38 : vector<8x1xf32> to vector<8x256xf32>
    %40 = arith.addf %37, %39 : vector<8x256xf32>
    %c0_31 = arith.constant 0 : index
    %c0_32 = arith.constant 0 : index
    %c0_33 = arith.constant 0 : index
    %41 = vector.load %arg13[%c0_31, %c0_32, %c0_33] : memref<1x8x256xf32, #tpu.memory_space<vmem>>, vector<1x8x256xf32>
    %42 = vector.shape_cast %41 : vector<1x8x256xf32> to vector<8x256xf32>
    %43 = vector.shape_cast %40 : vector<8x256xf32> to vector<1x8x256xf32>
    tpu.vector_store %arg13[%c0_31, %c0_32, %c0_33], %43 {strides = array<i32>} : memref<1x8x256xf32, #tpu.memory_space<vmem>>, vector<1x8x256xf32>,
    return
  }
  func.func @transform_0(%arg0: i32, %arg1: i32) -> (i32, i32, i32) {
    %c0_i32 = arith.constant 0 : i32
    %c0_i32_0 = arith.constant 0 : i32
    return %arg0, %c0_i32, %arg1 : i32, i32, i32
  }
  func.func @transform_1(%arg0: i32, %arg1: i32) -> (i32, i32, i32) {
    %c0_i32 = arith.constant 0 : i32
    %c0_i32_0 = arith.constant 0 : i32
    %c0_i32_1 = arith.constant 0 : i32
    return %arg0, %c0_i32, %c0_i32_0 : i32, i32, i32
  }
  func.func @transform_2(%arg0: i32, %arg1: i32) -> (i32, i32) {
    %c0_i32 = arith.constant 0 : i32
    %c0_i32_0 = arith.constant 0 : i32
    %c0_i32_1 = arith.constant 0 : i32
    return %c0_i32, %c0_i32_0 : i32, i32
  }
  func.func @transform_3(%arg0: i32, %arg1: i32) -> (i32, i32) {
    %c0_i32 = arith.constant 0 : i32
    %c0_i32_0 = arith.constant 0 : i32
    %c0_i32_1 = arith.constant 0 : i32
    return %c0_i32, %c0_i32_0 : i32, i32
  }
  func.func @transform_4(%arg0: i32, %arg1: i32) -> (i32, i32) {
    %c0_i32 = arith.constant 0 : i32
    %c0_i32_0 = arith.constant 0 : i32
    %c0_i32_1 = arith.constant 0 : i32
    return %c0_i32, %c0_i32_0 : i32, i32
  }
  func.func @transform_5(%arg0: i32, %arg1: i32) -> (i32, i32) {
    %c0_i32 = arith.constant 0 : i32
    %c0_i32_0 = arith.constant 0 : i32
    %c0_i32_1 = arith.constant 0 : i32
    return %c0_i32, %c0_i32_0 : i32, i32
  }
  func.func @transform_6(%arg0: i32, %arg1: i32) -> (i32, i32) {
    %c0_i32 = arith.constant 0 : i32
    %c0_i32_0 = arith.constant 0 : i32
    %c0_i32_1 = arith.constant 0 : i32
    return %c0_i32, %c0_i32_0 : i32, i32
  }
  func.func @transform_7(%arg0: i32, %arg1: i32) -> (i32, i32) {
    %c0_i32 = arith.constant 0 : i32
    %c0_i32_0 = arith.constant 0 : i32
    %c0_i32_1 = arith.constant 0 : i32
    return %c0_i32, %c0_i32_0 : i32, i32
  }
  func.func @transform_8(%arg0: i32, %arg1: i32) -> (i32, i32) {
    %c0_i32 = arith.constant 0 : i32
    %c0_i32_0 = arith.constant 0 : i32
    %c0_i32_1 = arith.constant 0 : i32
    return %c0_i32, %c0_i32_0 : i32, i32
  }
  func.func @transform_9(%arg0: i32, %arg1: i32) -> (i32, i32) {
    %c0_i32 = arith.constant 0 : i32
    %c0_i32_0 = arith.constant 0 : i32
    %c0_i32_1 = arith.constant 0 : i32
    return %c0_i32, %c0_i32_0 : i32, i32
  }
  func.func @transform_10(%arg0: i32, %arg1: i32) -> (i32, i32) {
    %c0_i32 = arith.constant 0 : i32
    %c0_i32_0 = arith.constant 0 : i32
    %c0_i32_1 = arith.constant 0 : i32
    return %c0_i32, %c0_i32_0 : i32, i32
  }
  func.func @transform_11(%arg0: i32, %arg1: i32) -> (i32, i32, i32) {
    %c0_i32 = arith.constant 0 : i32
    %c0_i32_0 = arith.constant 0 : i32
    return %arg0, %c0_i32, %arg1 : i32, i32, i32
  }
}

</mosaic_0001>

<llo_original>
// kernel: tpu_custom_call.1
$region0: #{tpu_custom_call.1}
  #allocation0 [shape = 'u32[]', space=smem, size = 0x4, offset = 0x4, fixed_abs, tag = 'smem constant byte address 0x4 - core index']
  #allocation1 [shape = 'u32[144,128]{1,0:T(1,128)}', space=vmem, size = 0x12000, scoped, tag = 'internal scratch']
  %s0 = inlined_call_operand.vmem [shape: f32[2,64,256], index: 0, kind: input, shape index: {}]
  %s1 = inlined_call_operand.vmem [shape: f32[2,512,1], index: 1, kind: input, shape index: {}]
  %s2 = inlined_call_operand.vmem [shape: bf16[512,64], index: 2, kind: input, shape index: {}]
  %s3 = inlined_call_operand.vmem [shape: bf16[256,512], index: 3, kind: input, shape index: {}]
  %s4 = inlined_call_operand.vmem [shape: f32[256,1], index: 4, kind: input, shape index: {}]
  %s5 = inlined_call_operand.vmem [shape: bf16[128,256], index: 5, kind: input, shape index: {}]
  %s6 = inlined_call_operand.vmem [shape: f32[128,1], index: 6, kind: input, shape index: {}]
  %s7 = inlined_call_operand.vmem [shape: bf16[128,128], index: 7, kind: input, shape index: {}]
  %s8 = inlined_call_operand.vmem [shape: f32[128,1], index: 8, kind: input, shape index: {}]
  %s9 = inlined_call_operand.vmem [shape: bf16[8,128], index: 9, kind: input, shape index: {}]
  %s10 = inlined_call_operand.vmem [shape: f32[8,1], index: 10, kind: input, shape index: {}]
  %s11 = inlined_call_operand.hbm [shape: f32[2,8,256], index: 11, kind: output, shape index: {}]
  %s12 = sld [smem:[#allocation0]]
  $region77: #{tpu_custom_call.1} parent=0
    _
  %s14 = ssub.s32 1, %s12
  %s15 = scalar_select 0, %s14, %s12
  $region1: #{tpu_custom_call.1} parent=0
    #allocation2 [shape = 'u8[16384]{0}', space=vmem, size = 0x4000, scoped, tag = 'output window, operand 0']
    #allocation3 [shape = 's32[2]{0}', space=sflag, size = 0x8, scoped, tag = 'scoped memory for tpu_custom_call.1']
    %16 = vsyncpa [#allocation3], 0
    %s17 = scalar_lea.sflag [#allocation3], 1
    %18 = vsyncpa %s17, 0
    loop: start=0, step=1, limit=4
    $region2: #{tpu_custom_call.1} parent=1 // loop_pre_header
      _
    $region3: #{tpu_custom_call.1} parent=1 // loop_header
      %s20 = sphi 0, %s24
      %p21 = scmp.ge.s32.totalorder %s20, 4
      %s27 = sphi 0, %s39
      %s28 = sphi 0, %s35
      %s29 = sphi 0, %s27
      %s30 = sphi 0, %s28
      %s31 = sphi 0, %s29
      %s32 = sphi 0, %s30
      %s44 = sphi 0, %s46
      %s47 = sphi 0, %s44
      %s48 = sphi 0, %s47
      %s64 = sphi 0, %s48
      %s70 = sphi 0, %s72
      %s73 = sphi 0, %s70
      %s74 = sphi 0, %s73
      %s90 = sphi 0, %s74
      %s94 = sphi 0, %s94
      %s96 = sphi 0, %s94
      %s97 = sphi 0, %s96
      %s111 = sphi 0, %s97
      %s115 = sphi 0, %s115
      %s117 = sphi 0, %s115
      %s118 = sphi 0, %s117
      %s132 = sphi 0, %s118
      %s136 = sphi 0, %s136
      %s138 = sphi 0, %s136
      %s139 = sphi 0, %s138
      %s153 = sphi 0, %s139
      %s157 = sphi 0, %s157
      %s159 = sphi 0, %s157
      %s160 = sphi 0, %s159
      %s174 = sphi 0, %s160
      %s178 = sphi 0, %s178
      %s180 = sphi 0, %s178
      %s181 = sphi 0, %s180
      %s195 = sphi 0, %s181
      %s199 = sphi 0, %s199
      %s201 = sphi 0, %s199
      %s202 = sphi 0, %s201
      %s216 = sphi 0, %s202
      %s220 = sphi 0, %s220
      %s222 = sphi 0, %s220
      %s223 = sphi 0, %s222
      %s237 = sphi 0, %s223
      %s241 = sphi 0, %s241
      %s243 = sphi 0, %s241
      %s244 = sphi 0, %s243
      %s258 = sphi 0, %s244
      %s262 = sphi 0, %s262
      %s264 = sphi 0, %s262
      %s265 = sphi 0, %s264
      %s279 = sphi 0, %s265
      %s287 = sphi 0, %s289
      %s290 = sphi 0, %s287
      %s291 = sphi 0, %s290
      %s307 = sphi 0, %s291
    $region4: #{tpu_custom_call.1} parent=1 // loop_header_branch
      %23 = sbr.rel (%p21) target = $region8
    $region5: #{tpu_custom_call.1} parent=1 // loop_body
      %s25 = ssub.s32 %s20, 1
      %s26 = ssub.s32 %s20, 2
      %s33 = sadd.s32 1, %s28
      %p34 = scmp.ge.s32.totalorder %s33, 1
      %s35 = scalar_select %p34, 0, %s33
      %s36 = sadd.s32 1, %s27
      %s37 = scalar_select %p34, %s36, %s27
      %p38 = scmp.ge.s32.totalorder %s37, 2
      %s39 = scalar_select %p38, 0, %s37
      %s40 = ssub.s32 %s27, %s39
      %s41 = ssub.s32 %s28, %s35
      %s42 = sor.u32 %s40, %s41
      %p43 = scmp.eq.s32.totalorder %s42, 0
      %s45 = sadd.s32 %s44, 1
      %s46 = scalar_select %p43, %s44, %s45
      %p49 = pneg %p43
      %p50 = scmp.eq.s32.totalorder %s20, 1
      %p51 = por %p49, %p50
      %p52 = scmp.ne.s32.totalorder %s44, %s47
      %p53 = scmp.eq.s32.totalorder %s20, 0
      %p54 = por %p52, %p53
      %p55 = scmp.ne.s32.totalorder %s44, %s47
      %p56 = scmp.eq.s32.totalorder %s25, 1
      %p57 = por %p55, %p56
      %p58 = scmp.ne.s32.totalorder %s47, %s48
      %p59 = scmp.eq.s32.totalorder %s25, 0
      %p60 = por %p58, %p59
      %p61 = scmp.ne.s32.totalorder %s47, %s48
      %p62 = scmp.eq.s32.totalorder %s26, 1
      %p63 = por %p61, %p62
      %p65 = scmp.ne.s32.totalorder %s48, %s64
      %p66 = scmp.eq.s32.totalorder %s26, 0
      %p67 = por %p65, %p66
      %s68 = ssub.s32 %s27, %s39
      %p69 = scmp.eq.s32.totalorder %s68, 0
      %s71 = sadd.s32 %s70, 1
      %s72 = scalar_select %p69, %s70, %s71
      %p75 = pneg %p69
      %p76 = scmp.eq.s32.totalorder %s20, 1
      %p77 = por %p75, %p76
      %p78 = scmp.ne.s32.totalorder %s70, %s73
      %p79 = scmp.eq.s32.totalorder %s20, 0
      %p80 = por %p78, %p79
      %p81 = scmp.ne.s32.totalorder %s70, %s73
      %p82 = scmp.eq.s32.totalorder %s25, 1
      %p83 = por %p81, %p82
      %p84 = scmp.ne.s32.totalorder %s73, %s74
      %p85 = scmp.eq.s32.totalorder %s25, 0
      %p86 = por %p84, %p85
      %p87 = scmp.ne.s32.totalorder %s73, %s74
      %p88 = scmp.eq.s32.totalorder %s26, 1
      %p89 = por %p87, %p88
      %p91 = scmp.ne.s32.totalorder %s74, %s90
      %p92 = scmp.eq.s32.totalorder %s26, 0
      %p93 = por %p91, %p92
      %s95 = sadd.s32 %s94, 1
      %p98 = scmp.eq.s32.totalorder %s20, 1
      %p99 = scmp.ne.s32.totalorder %s94, %s96
      %p100 = scmp.eq.s32.totalorder %s20, 0
      %p101 = por %p99, %p100
      %p102 = scmp.ne.s32.totalorder %s94, %s96
      %p103 = scmp.eq.s32.totalorder %s25, 1
      %p104 = por %p102, %p103
      %p105 = scmp.ne.s32.totalorder %s96, %s97
      %p106 = scmp.eq.s32.totalorder %s25, 0
      %p107 = por %p105, %p106
      %p108 = scmp.ne.s32.totalorder %s96, %s97
      %p109 = scmp.eq.s32.totalorder %s26, 1
      %p110 = por %p108, %p109
      %p112 = scmp.ne.s32.totalorder %s97, %s111
      %p113 = scmp.eq.s32.totalorder %s26, 0
      %p114 = por %p112, %p113
      %s116 = sadd.s32 %s115, 1
      %p119 = scmp.eq.s32.totalorder %s20, 1
      %p120 = scmp.ne.s32.totalorder %s115, %s117
      %p121 = scmp.eq.s32.totalorder %s20, 0
      %p122 = por %p120, %p121
      %p123 = scmp.ne.s32.totalorder %s115, %s117
      %p124 = scmp.eq.s32.totalorder %s25, 1
      %p125 = por %p123, %p124
      %p126 = scmp.ne.s32.totalorder %s117, %s118
      %p127 = scmp.eq.s32.totalorder %s25, 0
      %p128 = por %p126, %p127
      %p129 = scmp.ne.s32.totalorder %s117, %s118
      %p130 = scmp.eq.s32.totalorder %s26, 1
      %p131 = por %p129, %p130
      %p133 = scmp.ne.s32.totalorder %s118, %s132
      %p134 = scmp.eq.s32.totalorder %s26, 0
      %p135 = por %p133, %p134
      %s137 = sadd.s32 %s136, 1
      %p140 = scmp.eq.s32.totalorder %s20, 1
      %p141 = scmp.ne.s32.totalorder %s136, %s138
      %p142 = scmp.eq.s32.totalorder %s20, 0
      %p143 = por %p141, %p142
      %p144 = scmp.ne.s32.totalorder %s136, %s138
      %p145 = scmp.eq.s32.totalorder %s25, 1
      %p146 = por %p144, %p145
      %p147 = scmp.ne.s32.totalorder %s138, %s139
      %p148 = scmp.eq.s32.totalorder %s25, 0
      %p149 = por %p147, %p148
      %p150 = scmp.ne.s32.totalorder %s138, %s139
      %p151 = scmp.eq.s32.totalorder %s26, 1
      %p152 = por %p150, %p151
      %p154 = scmp.ne.s32.totalorder %s139, %s153
      %p155 = scmp.eq.s32.totalorder %s26, 0
      %p156 = por %p154, %p155
      %s158 = sadd.s32 %s157, 1
      %p161 = scmp.eq.s32.totalorder %s20, 1
      %p162 = scmp.ne.s32.totalorder %s157, %s159
      %p163 = scmp.eq.s32.totalorder %s20, 0
      %p164 = por %p162, %p163
      %p165 = scmp.ne.s32.totalorder %s157, %s159
      %p166 = scmp.eq.s32.totalorder %s25, 1
      %p167 = por %p165, %p166
      %p168 = scmp.ne.s32.totalorder %s159, %s160
      %p169 = scmp.eq.s32.totalorder %s25, 0
      %p170 = por %p168, %p169
      %p171 = scmp.ne.s32.totalorder %s159, %s160
      %p172 = scmp.eq.s32.totalorder %s26, 1
      %p173 = por %p171, %p172
      %p175 = scmp.ne.s32.totalorder %s160, %s174
      %p176 = scmp.eq.s32.totalorder %s26, 0
      %p177 = por %p175, %p176
      %s179 = sadd.s32 %s178, 1
      %p182 = scmp.eq.s32.totalorder %s20, 1
      %p183 = scmp.ne.s32.totalorder %s178, %s180
      %p184 = scmp.eq.s32.totalorder %s20, 0
      %p185 = por %p183, %p184
      %p186 = scmp.ne.s32.totalorder %s178, %s180
      %p187 = scmp.eq.s32.totalorder %s25, 1
      %p188 = por %p186, %p187
      %p189 = scmp.ne.s32.totalorder %s180, %s181
      %p190 = scmp.eq.s32.totalorder %s25, 0
      %p191 = por %p189, %p190
      %p192 = scmp.ne.s32.totalorder %s180, %s181
      %p193 = scmp.eq.s32.totalorder %s26, 1
      %p194 = por %p192, %p193
      %p196 = scmp.ne.s32.totalorder %s181, %s195
      %p197 = scmp.eq.s32.totalorder %s26, 0
      %p198 = por %p196, %p197
      %s200 = sadd.s32 %s199, 1
      %p203 = scmp.eq.s32.totalorder %s20, 1
      %p204 = scmp.ne.s32.totalorder %s199, %s201
      %p205 = scmp.eq.s32.totalorder %s20, 0
      %p206 = por %p204, %p205
      %p207 = scmp.ne.s32.totalorder %s199, %s201
      %p208 = scmp.eq.s32.totalorder %s25, 1
      %p209 = por %p207, %p208
      %p210 = scmp.ne.s32.totalorder %s201, %s202
      %p211 = scmp.eq.s32.totalorder %s25, 0
      %p212 = por %p210, %p211
      %p213 = scmp.ne.s32.totalorder %s201, %s202
      %p214 = scmp.eq.s32.totalorder %s26, 1
      %p215 = por %p213, %p214
      %p217 = scmp.ne.s32.totalorder %s202, %s216
      %p218 = scmp.eq.s32.totalorder %s26, 0
      %p219 = por %p217, %p218
      %s221 = sadd.s32 %s220, 1
      %p224 = scmp.eq.s32.totalorder %s20, 1
      %p225 = scmp.ne.s32.totalorder %s220, %s222
      %p226 = scmp.eq.s32.totalorder %s20, 0
      %p227 = por %p225, %p226
      %p228 = scmp.ne.s32.totalorder %s220, %s222
      %p229 = scmp.eq.s32.totalorder %s25, 1
      %p230 = por %p228, %p229
      %p231 = scmp.ne.s32.totalorder %s222, %s223
      %p232 = scmp.eq.s32.totalorder %s25, 0
      %p233 = por %p231, %p232
      %p234 = scmp.ne.s32.totalorder %s222, %s223
      %p235 = scmp.eq.s32.totalorder %s26, 1
      %p236 = por %p234, %p235
      %p238 = scmp.ne.s32.totalorder %s223, %s237
      %p239 = scmp.eq.s32.totalorder %s26, 0
      %p240 = por %p238, %p239
      %s242 = sadd.s32 %s241, 1
      %p245 = scmp.eq.s32.totalorder %s20, 1
      %p246 = scmp.ne.s32.totalorder %s241, %s243
      %p247 = scmp.eq.s32.totalorder %s20, 0
      %p248 = por %p246, %p247
      %p249 = scmp.ne.s32.totalorder %s241, %s243
      %p250 = scmp.eq.s32.totalorder %s25, 1
      %p251 = por %p249, %p250
      %p252 = scmp.ne.s32.totalorder %s243, %s244
      %p253 = scmp.eq.s32.totalorder %s25, 0
      %p254 = por %p252, %p253
      %p255 = scmp.ne.s32.totalorder %s243, %s244
      %p256 = scmp.eq.s32.totalorder %s26, 1
      %p257 = por %p255, %p256
      %p259 = scmp.ne.s32.totalorder %s244, %s258
      %p260 = scmp.eq.s32.totalorder %s26, 0
      %p261 = por %p259, %p260
      %s263 = sadd.s32 %s262, 1
      %p266 = scmp.eq.s32.totalorder %s20, 1
      %p267 = scmp.ne.s32.totalorder %s262, %s264
      %p268 = scmp.eq.s32.totalorder %s20, 0
      %p269 = por %p267, %p268
      %p270 = scmp.ne.s32.totalorder %s262, %s264
      %p271 = scmp.eq.s32.totalorder %s25, 1
      %p272 = por %p270, %p271
      %p273 = scmp.ne.s32.totalorder %s264, %s265
      %p274 = scmp.eq.s32.totalorder %s25, 0
      %p275 = por %p273, %p274
      %p276 = scmp.ne.s32.totalorder %s264, %s265
      %p277 = scmp.eq.s32.totalorder %s26, 1
      %p278 = por %p276, %p277
      %p280 = scmp.ne.s32.totalorder %s265, %s279
      %p281 = scmp.eq.s32.totalorder %s26, 0
      %p282 = por %p280, %p281
      %s283 = ssub.s32 %s27, %s39
      %s284 = ssub.s32 %s28, %s35
      %s285 = sor.u32 %s283, %s284
      %p286 = scmp.eq.s32.totalorder %s285, 0
      %s288 = sadd.s32 %s287, 1
      %s289 = scalar_select %p286, %s287, %s288
      %p292 = pneg %p286
      %p293 = scmp.eq.s32.totalorder %s20, 1
      %p294 = por %p292, %p293
      %p295 = scmp.ne.s32.totalorder %s287, %s290
      %p296 = scmp.eq.s32.totalorder %s20, 0
      %p297 = por %p295, %p296
      %p298 = scmp.ne.s32.totalorder %s287, %s290
      %p299 = scmp.eq.s32.totalorder %s25, 1
      %p300 = por %p298, %p299
      %p301 = scmp.ne.s32.totalorder %s290, %s291
      %p302 = scmp.eq.s32.totalorder %s25, 0
      %p303 = por %p301, %p302
      %p304 = scmp.ne.s32.totalorder %s290, %s291
      %p305 = scmp.eq.s32.totalorder %s26, 1
      %p306 = por %p304, %p305
      %p308 = scmp.ne.s32.totalorder %s291, %s307
      %p309 = scmp.eq.s32.totalorder %s26, 0
      %p310 = por %p308, %p309
      %p311 = scmp.le.s32.totalorder 1, %s20
      %p312 = scmp.lt.s32.totalorder %s20, 3
      %p313 = pnand %p311, %p312
      %p314 = pneg %p313
      // Predicated region
      $region9: #{tpu_custom_call.1} parent=5 // pred_check
        _
      $region10: #{tpu_custom_call.1} parent=5 // pred_check_branch
        %316 = sbr.rel (%p313) target = $region12
      $region11: #{tpu_custom_call.1} parent=5 // pred_region
        %s317 = ssub.s32 %s20, 1
        // Predicated region
        $region13: #{tpu_custom_call.1} parent=11 // pred_check
          %p318 = pneg %p107
        $region14: #{tpu_custom_call.1} parent=11 // pred_check_branch
          %320 = sbr.rel (%p318) target = $region16
        $region15: #{tpu_custom_call.1} parent=11 // pred_region
          _
        $region16: #{tpu_custom_call.1} parent=11 // pred_fallthru
          _
        // Predicated region
        $region17: #{tpu_custom_call.1} parent=11 // pred_check
          %p321 = pneg %p128
        $region18: #{tpu_custom_call.1} parent=11 // pred_check_branch
          %323 = sbr.rel (%p321) target = $region20
        $region19: #{tpu_custom_call.1} parent=11 // pred_region
          _
        $region20: #{tpu_custom_call.1} parent=11 // pred_fallthru
          _
        // Predicated region
        $region21: #{tpu_custom_call.1} parent=11 // pred_check
          %p324 = pneg %p149
        $region22: #{tpu_custom_call.1} parent=11 // pred_check_branch
          %326 = sbr.rel (%p324) target = $region24
        $region23: #{tpu_custom_call.1} parent=11 // pred_region
          _
        $region24: #{tpu_custom_call.1} parent=11 // pred_fallthru
          _
        // Predicated region
        $region25: #{tpu_custom_call.1} parent=11 // pred_check
          %p327 = pneg %p170
        $region26: #{tpu_custom_call.1} parent=11 // pred_check_branch
          %329 = sbr.rel (%p327) target = $region28
        $region27: #{tpu_custom_call.1} parent=11 // pred_region
          _
        $region28: #{tpu_custom_call.1} parent=11 // pred_fallthru
          _
        // Predicated region
        $region29: #{tpu_custom_call.1} parent=11 // pred_check
          %p330 = pneg %p191
        $region30: #{tpu_custom_call.1} parent=11 // pred_check_branch
          %332 = sbr.rel (%p330) target = $region32
        $region31: #{tpu_custom_call.1} parent=11 // pred_region
          _
        $region32: #{tpu_custom_call.1} parent=11 // pred_fallthru
          _
        // Predicated region
        $region33: #{tpu_custom_call.1} parent=11 // pred_check
          %p333 = pneg %p212
        $region34: #{tpu_custom_call.1} parent=11 // pred_check_branch
          %335 = sbr.rel (%p333) target = $region36
        $region35: #{tpu_custom_call.1} parent=11 // pred_region
          _
        $region36: #{tpu_custom_call.1} parent=11 // pred_fallthru
          _
        // Predicated region
        $region37: #{tpu_custom_call.1} parent=11 // pred_check
          %p336 = pneg %p233
        $region38: #{tpu_custom_call.1} parent=11 // pred_check_branch
          %338 = sbr.rel (%p336) target = $region40
        $region39: #{tpu_custom_call.1} parent=11 // pred_region
          _
        $region40: #{tpu_custom_call.1} parent=11 // pred_fallthru
          _
        // Predicated region
        $region41: #{tpu_custom_call.1} parent=11 // pred_check
          %p339 = pneg %p254
        $region42: #{tpu_custom_call.1} parent=11 // pred_check_branch
          %341 = sbr.rel (%p339) target = $region44
        $region43: #{tpu_custom_call.1} parent=11 // pred_region
          _
        $region44: #{tpu_custom_call.1} parent=11 // pred_fallthru
          _
        // Predicated region
        $region45: #{tpu_custom_call.1} parent=11 // pred_check
          %p342 = pneg %p275
        $region46: #{tpu_custom_call.1} parent=11 // pred_check_branch
          %344 = sbr.rel (%p342) target = $region48
        $region47: #{tpu_custom_call.1} parent=11 // pred_region
          _
        $region48: #{tpu_custom_call.1} parent=11 // pred_fallthru
          _
      $region12: #{tpu_custom_call.1} parent=5 // pred_fallthru
        _
      %p345 = scmp.lt.s32.totalorder %s20, 2
      // Predicated region
      $region49: #{tpu_custom_call.1} parent=5 // pred_check
        %p346 = pneg %p345
      $region50: #{tpu_custom_call.1} parent=5 // pred_check_branch
        %348 = sbr.rel (%p346) target = $region52
      $region51: #{tpu_custom_call.1} parent=5 // pred_region
        // Predicated region
        $region53: #{tpu_custom_call.1} parent=51 // pred_check
          %p349 = pneg %p54
        $region54: #{tpu_custom_call.1} parent=51 // pred_check_branch
          %351 = sbr.rel (%p349) target = $region56
        $region55: #{tpu_custom_call.1} parent=51 // pred_region
          %s352 = smul.u32 2, %s28
          %p353 = scmp.lt.s32.totalorder %s27, 1
          %s354 = scalar_select %p353, %s27, 1
          %p355 = scmp.lt.s32.totalorder %s352, 1
          %s356 = scalar_select %p355, %s352, 1
          %s357 = smul.addr %s354, 16
          %s358 = sadd.s32 %s356, %s357
          %s359 = smul.addr %s358, 8
          %s360 = scalar_lea.vmem %s0, %s359
          %s361 = smul.u32 2, %s28
        $region56: #{tpu_custom_call.1} parent=51 // pred_fallthru
          _
        // Predicated region
        $region57: #{tpu_custom_call.1} parent=51 // pred_check
          %p362 = pneg %p80
        $region58: #{tpu_custom_call.1} parent=51 // pred_check_branch
          %364 = sbr.rel (%p362) target = $region60
        $region59: #{tpu_custom_call.1} parent=51 // pred_region
          %p365 = scmp.lt.s32.totalorder %s27, 1
          %s366 = scalar_select %p365, %s27, 1
          %s367 = smul.addr %s366, 64
          %s368 = smul.addr %s367, 8
          %s369 = scalar_lea.vmem %s1, %s368
        $region60: #{tpu_custom_call.1} parent=51 // pred_fallthru
          _
      $region52: #{tpu_custom_call.1} parent=5 // pred_fallthru
        _
      %p370 = scmp.le.s32.totalorder 1, %s20
      %p371 = scmp.lt.s32.totalorder %s20, 3
      %p372 = pnand %p370, %p371
      %p373 = pneg %p372
      // Predicated region
      $region61: #{tpu_custom_call.1} parent=5 // pred_check
        _
      $region62: #{tpu_custom_call.1} parent=5 // pred_check_branch
        %375 = sbr.rel (%p372) target = $region64
      $region63: #{tpu_custom_call.1} parent=5 // pred_region
        %s376 = ssub.s32 %s20, 1
        %s377 = smul.u32 2, %s30
        %p378 = scmp.lt.s32.totalorder %s29, 1
        %s379 = scalar_select %p378, %s29, 1
        %p380 = scmp.lt.s32.totalorder %s377, 1
        %s381 = scalar_select %p380, %s377, 1
        %s382 = smul.addr %s379, 16
        %s383 = sadd.s32 %s381, %s382
        %s384 = smul.addr %s383, 8
        %s385 = scalar_lea.vmem %s0, %s384
        %p386 = pneg %p60
        %p387 = pneg %p57
        %p388 = scmp.lt.s32.totalorder %s29, 1
        %s389 = scalar_select %p388, %s29, 1
        %s390 = smul.addr %s389, 64
        %s391 = smul.addr %s390, 8
        %s392 = scalar_lea.vmem %s1, %s391
        %p393 = pneg %p86
        %p394 = pneg %p83
        %p395 = pneg %p107
        %p396 = pneg %p104
        %p397 = pneg %p128
        %p398 = pneg %p125
        %p399 = pneg %p149
        %p400 = pneg %p146
        %p401 = pneg %p170
        %p402 = pneg %p167
        %p403 = pneg %p191
        %p404 = pneg %p188
        %p405 = pneg %p212
        %p406 = pneg %p209
        %p407 = pneg %p233
        %p408 = pneg %p230
        %p409 = pneg %p254
        %p410 = pneg %p251
        %p411 = pneg %p275
        %p412 = pneg %p272
        %p413 = pneg %p303
        %p414 = pneg %p300
        %s415 = sand.u32 %s290, 1
        %s416 = scalar_lea.sflag [#allocation3], %s415
        %s417 = sand.u32 %s290, 1
        %s418 = smul.addr %s417, 16
        %s419 = scalar_lea.vmem [#allocation2], %s418
        %s420 = smul.u32 2, %s30
        %p421 = scmp.lt.s32.totalorder %s29, 1
        %s422 = scalar_select %p421, %s29, 1
        %p423 = scmp.lt.s32.totalorder %s420, 1
        %s424 = scalar_select %p423, %s420, 1
        %s425 = smul.addr %s422, 16
        %s426 = sadd.s32 %s424, %s425
        %s427 = smul.addr %s426, 8
        %s428 = scalar_lea.vmem %s0, %s427
        %s429 = smul.u32 2, %s30
        %p430 = scmp.lt.s32.totalorder %s29, 1
        %s431 = scalar_select %p430, %s29, 1
        %s432 = smul.addr %s431, 64
        %s433 = smul.addr %s432, 8
        %s434 = scalar_lea.vmem %s1, %s433
        %s435 = smul.u32 2, %s30
        %v437 = vld [vmem:[%s428] sm:$0xff]
        %v438 = vld [vmem:[%s428 + $0x8] sm:$0xff]
        %v439 = vld [vmem:[%s428 + $0x10] sm:$0xff]
        %v440 = vld [vmem:[%s428 + $0x18] sm:$0xff]
        %v441 = vld [vmem:[%s428 + $0x20] sm:$0xff]
        %v442 = vld [vmem:[%s428 + $0x28] sm:$0xff]
        %v443 = vld [vmem:[%s428 + $0x30] sm:$0xff]
        %v444 = vld [vmem:[%s428 + $0x38] sm:$0xff]
        %v445 = vld [vmem:[%s428 + $0x40] sm:$0xff]
        %v446 = vld [vmem:[%s428 + $0x48] sm:$0xff]
        %v447 = vld [vmem:[%s428 + $0x50] sm:$0xff]
        %v448 = vld [vmem:[%s428 + $0x58] sm:$0xff]
        %v449 = vld [vmem:[%s428 + $0x60] sm:$0xff]
        %v450 = vld [vmem:[%s428 + $0x68] sm:$0xff]
        %v451 = vld [vmem:[%s428 + $0x70] sm:$0xff]
        %v452 = vld [vmem:[%s428 + $0x78] sm:$0xff]
        %v453 = vpack.c.bf16 %v439, %v437
        %v454 = vpack.c.bf16 %v440, %v438
        %v455 = vpack.c.bf16 %v443, %v441
        %v456 = vpack.c.bf16 %v444, %v442
        %v457 = vpack.c.bf16 %v447, %v445
        %v458 = vpack.c.bf16 %v448, %v446
        %v459 = vpack.c.bf16 %v451, %v449
        %v460 = vpack.c.bf16 %v452, %v450
        %v461 = vld [vmem:[%s2] sm:$0xf]
        %v462 = vld [vmem:[%s2 + $0x4] sm:$0xf]
        %v463 = vld [vmem:[%s2 + $0x8] sm:$0xf]
        %v464 = vld [vmem:[%s2 + $0xc] sm:$0xf]
        %v465 = vld [vmem:[%s2 + $0x10] sm:$0xf]
        %v466 = vld [vmem:[%s2 + $0x14] sm:$0xf]
        %v467 = vld [vmem:[%s2 + $0x18] sm:$0xf]
        %v468 = vld [vmem:[%s2 + $0x1c] sm:$0xf]
        %v469 = vld [vmem:[%s2 + $0x20] sm:$0xf]
        %v470 = vld [vmem:[%s2 + $0x24] sm:$0xf]
        %v471 = vld [vmem:[%s2 + $0x28] sm:$0xf]
        %v472 = vld [vmem:[%s2 + $0x2c] sm:$0xf]
        %v473 = vld [vmem:[%s2 + $0x30] sm:$0xf]
        %v474 = vld [vmem:[%s2 + $0x34] sm:$0xf]
        %v475 = vld [vmem:[%s2 + $0x38] sm:$0xf]
        %v476 = vld [vmem:[%s2 + $0x3c] sm:$0xf]
        %v477 = vld [vmem:[%s2 + $0x40] sm:$0xf]
        %v478 = vld [vmem:[%s2 + $0x44] sm:$0xf]
        %v479 = vld [vmem:[%s2 + $0x48] sm:$0xf]
        %v480 = vld [vmem:[%s2 + $0x4c] sm:$0xf]
        %v481 = vld [vmem:[%s2 + $0x50] sm:$0xf]
        %v482 = vld [vmem:[%s2 + $0x54] sm:$0xf]
        %v483 = vld [vmem:[%s2 + $0x58] sm:$0xf]
        %v484 = vld [vmem:[%s2 + $0x5c] sm:$0xf]
        %v485 = vld [vmem:[%s2 + $0x60] sm:$0xf]
        %v486 = vld [vmem:[%s2 + $0x64] sm:$0xf]
        %v487 = vld [vmem:[%s2 + $0x68] sm:$0xf]
        %v488 = vld [vmem:[%s2 + $0x6c] sm:$0xf]
        %v489 = vld [vmem:[%s2 + $0x70] sm:$0xf]
        %v490 = vld [vmem:[%s2 + $0x74] sm:$0xf]
        %v491 = vld [vmem:[%s2 + $0x78] sm:$0xf]
        %v492 = vld [vmem:[%s2 + $0x7c] sm:$0xf]
        %v493 = vld [vmem:[%s2 + $0x80] sm:$0xf]
        %v494 = vld [vmem:[%s2 + $0x84] sm:$0xf]
        %v495 = vld [vmem:[%s2 + $0x88] sm:$0xf]
        %v496 = vld [vmem:[%s2 + $0x8c] sm:$0xf]
        %v497 = vld [vmem:[%s2 + $0x90] sm:$0xf]
        %v498 = vld [vmem:[%s2 + $0x94] sm:$0xf]
        %v499 = vld [vmem:[%s2 + $0x98] sm:$0xf]
        %v500 = vld [vmem:[%s2 + $0x9c] sm:$0xf]
        %v501 = vld [vmem:[%s2 + $0xa0] sm:$0xf]
        %v502 = vld [vmem:[%s2 + $0xa4] sm:$0xf]
        %v503 = vld [vmem:[%s2 + $0xa8] sm:$0xf]
        %v504 = vld [vmem:[%s2 + $0xac] sm:$0xf]
        %v505 = vld [vmem:[%s2 + $0xb0] sm:$0xf]
        %v506 = vld [vmem:[%s2 + $0xb4] sm:$0xf]
        %v507 = vld [vmem:[%s2 + $0xb8] sm:$0xf]
        %v508 = vld [vmem:[%s2 + $0xbc] sm:$0xf]
        %v509 = vld [vmem:[%s2 + $0xc0] sm:$0xf]
        %v510 = vld [vmem:[%s2 + $0xc4] sm:$0xf]
        %v511 = vld [vmem:[%s2 + $0xc8] sm:$0xf]
        %v512 = vld [vmem:[%s2 + $0xcc] sm:$0xf]
        %v513 = vld [vmem:[%s2 + $0xd0] sm:$0xf]
        %v514 = vld [vmem:[%s2 + $0xd4] sm:$0xf]
        %v515 = vld [vmem:[%s2 + $0xd8] sm:$0xf]
        %v516 = vld [vmem:[%s2 + $0xdc] sm:$0xf]
        %v517 = vld [vmem:[%s2 + $0xe0] sm:$0xf]
        %v518 = vld [vmem:[%s2 + $0xe4] sm:$0xf]
        %v519 = vld [vmem:[%s2 + $0xe8] sm:$0xf]
        %v520 = vld [vmem:[%s2 + $0xec] sm:$0xf]
        %v521 = vld [vmem:[%s2 + $0xf0] sm:$0xf]
        %v522 = vld [vmem:[%s2 + $0xf4] sm:$0xf]
        %v523 = vld [vmem:[%s2 + $0xf8] sm:$0xf]
        %v524 = vld [vmem:[%s2 + $0xfc] sm:$0xf]
        %v525 = vld [vmem:[%s434] sm:$0xff]
        %v526 = vld [vmem:[%s434 + $0x8] sm:$0xff]
        %v527 = vld [vmem:[%s434 + $0x10] sm:$0xff]
        %v528 = vld [vmem:[%s434 + $0x18] sm:$0xff]
        %v529 = vld [vmem:[%s434 + $0x20] sm:$0xff]
        %v530 = vld [vmem:[%s434 + $0x28] sm:$0xff]
        %v531 = vld [vmem:[%s434 + $0x30] sm:$0xff]
        %v532 = vld [vmem:[%s434 + $0x38] sm:$0xff]
        %v533 = vld [vmem:[%s434 + $0x40] sm:$0xff]
        %v534 = vld [vmem:[%s434 + $0x48] sm:$0xff]
        %v535 = vld [vmem:[%s434 + $0x50] sm:$0xff]
        %v536 = vld [vmem:[%s434 + $0x58] sm:$0xff]
        %v537 = vld [vmem:[%s434 + $0x60] sm:$0xff]
        %v538 = vld [vmem:[%s434 + $0x68] sm:$0xff]
        %v539 = vld [vmem:[%s434 + $0x70] sm:$0xff]
        %v540 = vld [vmem:[%s434 + $0x78] sm:$0xff]
        %v541 = vld [vmem:[%s434 + $0x80] sm:$0xff]
        %v542 = vld [vmem:[%s434 + $0x88] sm:$0xff]
        %v543 = vld [vmem:[%s434 + $0x90] sm:$0xff]
        %v544 = vld [vmem:[%s434 + $0x98] sm:$0xff]
        %v545 = vld [vmem:[%s434 + $0xa0] sm:$0xff]
        %v546 = vld [vmem:[%s434 + $0xa8] sm:$0xff]
        %v547 = vld [vmem:[%s434 + $0xb0] sm:$0xff]
        %v548 = vld [vmem:[%s434 + $0xb8] sm:$0xff]
        %v549 = vld [vmem:[%s434 + $0xc0] sm:$0xff]
        %v550 = vld [vmem:[%s434 + $0xc8] sm:$0xff]
        %v551 = vld [vmem:[%s434 + $0xd0] sm:$0xff]
        %v552 = vld [vmem:[%s434 + $0xd8] sm:$0xff]
        %v553 = vld [vmem:[%s434 + $0xe0] sm:$0xff]
        %v554 = vld [vmem:[%s434 + $0xe8] sm:$0xff]
        %v555 = vld [vmem:[%s434 + $0xf0] sm:$0xff]
        %v556 = vld [vmem:[%s434 + $0xf8] sm:$0xff]
        %v557 = vld [vmem:[%s434 + $0x100] sm:$0xff]
        %v558 = vld [vmem:[%s434 + $0x108] sm:$0xff]
        %v559 = vld [vmem:[%s434 + $0x110] sm:$0xff]
        %v560 = vld [vmem:[%s434 + $0x118] sm:$0xff]
        %v561 = vld [vmem:[%s434 + $0x120] sm:$0xff]
        %v562 = vld [vmem:[%s434 + $0x128] sm:$0xff]
        %v563 = vld [vmem:[%s434 + $0x130] sm:$0xff]
        %v564 = vld [vmem:[%s434 + $0x138] sm:$0xff]
        %v565 = vld [vmem:[%s434 + $0x140] sm:$0xff]
        %v566 = vld [vmem:[%s434 + $0x148] sm:$0xff]
        %v567 = vld [vmem:[%s434 + $0x150] sm:$0xff]
        %v568 = vld [vmem:[%s434 + $0x158] sm:$0xff]
        %v569 = vld [vmem:[%s434 + $0x160] sm:$0xff]
        %v570 = vld [vmem:[%s434 + $0x168] sm:$0xff]
        %v571 = vld [vmem:[%s434 + $0x170] sm:$0xff]
        %v572 = vld [vmem:[%s434 + $0x178] sm:$0xff]
        %v573 = vld [vmem:[%s434 + $0x180] sm:$0xff]
        %v574 = vld [vmem:[%s434 + $0x188] sm:$0xff]
        %v575 = vld [vmem:[%s434 + $0x190] sm:$0xff]
        %v576 = vld [vmem:[%s434 + $0x198] sm:$0xff]
        %v577 = vld [vmem:[%s434 + $0x1a0] sm:$0xff]
        %v578 = vld [vmem:[%s434 + $0x1a8] sm:$0xff]
        %v579 = vld [vmem:[%s434 + $0x1b0] sm:$0xff]
        %v580 = vld [vmem:[%s434 + $0x1b8] sm:$0xff]
        %v581 = vld [vmem:[%s434 + $0x1c0] sm:$0xff]
        %v582 = vld [vmem:[%s434 + $0x1c8] sm:$0xff]
        %v583 = vld [vmem:[%s434 + $0x1d0] sm:$0xff]
        %v584 = vld [vmem:[%s434 + $0x1d8] sm:$0xff]
        %v585 = vld [vmem:[%s434 + $0x1e0] sm:$0xff]
        %v586 = vld [vmem:[%s434 + $0x1e8] sm:$0xff]
        %v587 = vld [vmem:[%s434 + $0x1f0] sm:$0xff]
        %v588 = vld [vmem:[%s434 + $0x1f8] sm:$0xff]
        %590 = vset.pattern.permute.xlu0 0
        %591 = vperm.xlu0 %590, %v525
        %v592 = vpop.permute.xlu0 %591
        %595 = vset.pattern.permute.xlu0 0
        %596 = vperm.xlu0 %595, %v526
        %v597 = vpop.permute.xlu0 %596
        %600 = vset.pattern.permute.xlu0 0
        %601 = vperm.xlu0 %600, %v527
        %v602 = vpop.permute.xlu0 %601
        %605 = vset.pattern.permute.xlu0 0
        %606 = vperm.xlu0 %605, %v528
        %v607 = vpop.permute.xlu0 %606
        %610 = vset.pattern.permute.xlu0 0
        %611 = vperm.xlu0 %610, %v529
        %v612 = vpop.permute.xlu0 %611
        %615 = vset.pattern.permute.xlu0 0
        %616 = vperm.xlu0 %615, %v530
        %v617 = vpop.permute.xlu0 %616
        %620 = vset.pattern.permute.xlu0 0
        %621 = vperm.xlu0 %620, %v531
        %v622 = vpop.permute.xlu0 %621
        %625 = vset.pattern.permute.xlu0 0
        %626 = vperm.xlu0 %625, %v532
        %v627 = vpop.permute.xlu0 %626
        %630 = vset.pattern.permute.xlu0 0
        %631 = vperm.xlu0 %630, %v533
        %v632 = vpop.permute.xlu0 %631
        %635 = vset.pattern.permute.xlu0 0
        %636 = vperm.xlu0 %635, %v534
        %v637 = vpop.permute.xlu0 %636
        %640 = vset.pattern.permute.xlu0 0
        %641 = vperm.xlu0 %640, %v535
        %v642 = vpop.permute.xlu0 %641
        %645 = vset.pattern.permute.xlu0 0
        %646 = vperm.xlu0 %645, %v536
        %v647 = vpop.permute.xlu0 %646
        %650 = vset.pattern.permute.xlu0 0
        %651 = vperm.xlu0 %650, %v537
        %v652 = vpop.permute.xlu0 %651
        %655 = vset.pattern.permute.xlu0 0
        %656 = vperm.xlu0 %655, %v538
        %v657 = vpop.permute.xlu0 %656
        %660 = vset.pattern.permute.xlu0 0
        %661 = vperm.xlu0 %660, %v539
        %v662 = vpop.permute.xlu0 %661
        %665 = vset.pattern.permute.xlu0 0
        %666 = vperm.xlu0 %665, %v540
        %v667 = vpop.permute.xlu0 %666
        %670 = vset.pattern.permute.xlu0 0
        %671 = vperm.xlu0 %670, %v541
        %v672 = vpop.permute.xlu0 %671
        %675 = vset.pattern.permute.xlu0 0
        %676 = vperm.xlu0 %675, %v542
        %v677 = vpop.permute.xlu0 %676
        %680 = vset.pattern.permute.xlu0 0
        %681 = vperm.xlu0 %680, %v543
        %v682 = vpop.permute.xlu0 %681
        %685 = vset.pattern.permute.xlu0 0
        %686 = vperm.xlu0 %685, %v544
        %v687 = vpop.permute.xlu0 %686
        %690 = vset.pattern.permute.xlu0 0
        %691 = vperm.xlu0 %690, %v545
        %v692 = vpop.permute.xlu0 %691
        %695 = vset.pattern.permute.xlu0 0
        %696 = vperm.xlu0 %695, %v546
        %v697 = vpop.permute.xlu0 %696
        %700 = vset.pattern.permute.xlu0 0
        %701 = vperm.xlu0 %700, %v547
        %v702 = vpop.permute.xlu0 %701
        %705 = vset.pattern.permute.xlu0 0
        %706 = vperm.xlu0 %705, %v548
        %v707 = vpop.permute.xlu0 %706
        %710 = vset.pattern.permute.xlu0 0
        %711 = vperm.xlu0 %710, %v549
        %v712 = vpop.permute.xlu0 %711
        %715 = vset.pattern.permute.xlu0 0
        %716 = vperm.xlu0 %715, %v550
        %v717 = vpop.permute.xlu0 %716
        %720 = vset.pattern.permute.xlu0 0
        %721 = vperm.xlu0 %720, %v551
        %v722 = vpop.permute.xlu0 %721
        %725 = vset.pattern.permute.xlu0 0
        %726 = vperm.xlu0 %725, %v552
        %v727 = vpop.permute.xlu0 %726
        %730 = vset.pattern.permute.xlu0 0
        %731 = vperm.xlu0 %730, %v553
        %v732 = vpop.permute.xlu0 %731
        %735 = vset.pattern.permute.xlu0 0
        %736 = vperm.xlu0 %735, %v554
        %v737 = vpop.permute.xlu0 %736
        %740 = vset.pattern.permute.xlu0 0
        %741 = vperm.xlu0 %740, %v555
        %v742 = vpop.permute.xlu0 %741
        %745 = vset.pattern.permute.xlu0 0
        %746 = vperm.xlu0 %745, %v556
        %v747 = vpop.permute.xlu0 %746
        %750 = vset.pattern.permute.xlu0 0
        %751 = vperm.xlu0 %750, %v557
        %v752 = vpop.permute.xlu0 %751
        %755 = vset.pattern.permute.xlu0 0
        %756 = vperm.xlu0 %755, %v558
        %v757 = vpop.permute.xlu0 %756
        %760 = vset.pattern.permute.xlu0 0
        %761 = vperm.xlu0 %760, %v559
        %v762 = vpop.permute.xlu0 %761
        %765 = vset.pattern.permute.xlu0 0
        %766 = vperm.xlu0 %765, %v560
        %v767 = vpop.permute.xlu0 %766
        %770 = vset.pattern.permute.xlu0 0
        %771 = vperm.xlu0 %770, %v561
        %v772 = vpop.permute.xlu0 %771
        %775 = vset.pattern.permute.xlu0 0
        %776 = vperm.xlu0 %775, %v562
        %v777 = vpop.permute.xlu0 %776
        %780 = vset.pattern.permute.xlu0 0
        %781 = vperm.xlu0 %780, %v563
        %v782 = vpop.permute.xlu0 %781
        %785 = vset.pattern.permute.xlu0 0
        %786 = vperm.xlu0 %785, %v564
        %v787 = vpop.permute.xlu0 %786
        %790 = vset.pattern.permute.xlu0 0
        %791 = vperm.xlu0 %790, %v565
        %v792 = vpop.permute.xlu0 %791
        %795 = vset.pattern.permute.xlu0 0
        %796 = vperm.xlu0 %795, %v566
        %v797 = vpop.permute.xlu0 %796
        %800 = vset.pattern.permute.xlu0 0
        %801 = vperm.xlu0 %800, %v567
        %v802 = vpop.permute.xlu0 %801
        %805 = vset.pattern.permute.xlu0 0
        %806 = vperm.xlu0 %805, %v568
        %v807 = vpop.permute.xlu0 %806
        %810 = vset.pattern.permute.xlu0 0
        %811 = vperm.xlu0 %810, %v569
        %v812 = vpop.permute.xlu0 %811
        %815 = vset.pattern.permute.xlu0 0
        %816 = vperm.xlu0 %815, %v570
        %v817 = vpop.permute.xlu0 %816
        %820 = vset.pattern.permute.xlu0 0
        %821 = vperm.xlu0 %820, %v571
        %v822 = vpop.permute.xlu0 %821
        %825 = vset.pattern.permute.xlu0 0
        %826 = vperm.xlu0 %825, %v572
        %v827 = vpop.permute.xlu0 %826
        %830 = vset.pattern.permute.xlu0 0
        %831 = vperm.xlu0 %830, %v573
        %v832 = vpop.permute.xlu0 %831
        %835 = vset.pattern.permute.xlu0 0
        %836 = vperm.xlu0 %835, %v574
        %v837 = vpop.permute.xlu0 %836
        %840 = vset.pattern.permute.xlu0 0
        %841 = vperm.xlu0 %840, %v575
        %v842 = vpop.permute.xlu0 %841
        %845 = vset.pattern.permute.xlu0 0
        %846 = vperm.xlu0 %845, %v576
        %v847 = vpop.permute.xlu0 %846
        %850 = vset.pattern.permute.xlu0 0
        %851 = vperm.xlu0 %850, %v577
        %v852 = vpop.permute.xlu0 %851
        %855 = vset.pattern.permute.xlu0 0
        %856 = vperm.xlu0 %855, %v578
        %v857 = vpop.permute.xlu0 %856
        %860 = vset.pattern.permute.xlu0 0
        %861 = vperm.xlu0 %860, %v579
        %v862 = vpop.permute.xlu0 %861
        %865 = vset.pattern.permute.xlu0 0
        %866 = vperm.xlu0 %865, %v580
        %v867 = vpop.permute.xlu0 %866
        %870 = vset.pattern.permute.xlu0 0
        %871 = vperm.xlu0 %870, %v581
        %v872 = vpop.permute.xlu0 %871
        %875 = vset.pattern.permute.xlu0 0
        %876 = vperm.xlu0 %875, %v582
        %v877 = vpop.permute.xlu0 %876
        %880 = vset.pattern.permute.xlu0 0
        %881 = vperm.xlu0 %880, %v583
        %v882 = vpop.permute.xlu0 %881
        %885 = vset.pattern.permute.xlu0 0
        %886 = vperm.xlu0 %885, %v584
        %v887 = vpop.permute.xlu0 %886
        %890 = vset.pattern.permute.xlu0 0
        %891 = vperm.xlu0 %890, %v585
        %v892 = vpop.permute.xlu0 %891
        %895 = vset.pattern.permute.xlu0 0
        %896 = vperm.xlu0 %895, %v586
        %v897 = vpop.permute.xlu0 %896
        %900 = vset.pattern.permute.xlu0 0
        %901 = vperm.xlu0 %900, %v587
        %v902 = vpop.permute.xlu0 %901
        %905 = vset.pattern.permute.xlu0 0
        %906 = vperm.xlu0 %905, %v588
        %v907 = vpop.permute.xlu0 %906
        %v973 = vunpack.c.l.b16 %v461
        %v974 = vunpack.c.l.b16 %v462
        %v975 = vunpack.c.l.b16 %v463
        %v976 = vunpack.c.l.b16 %v464
        %v977 = vunpack.c.l.b16 %v465
        %v978 = vunpack.c.l.b16 %v466
        %v979 = vunpack.c.l.b16 %v467
        %v980 = vunpack.c.l.b16 %v468
        %v981 = vunpack.c.l.b16 %v469
        %v982 = vunpack.c.l.b16 %v470
        %v983 = vunpack.c.l.b16 %v471
        %v984 = vunpack.c.l.b16 %v472
        %v985 = vunpack.c.l.b16 %v473
        %v986 = vunpack.c.l.b16 %v474
        %v987 = vunpack.c.l.b16 %v475
        %v988 = vunpack.c.l.b16 %v476
        %v989 = vunpack.c.l.b16 %v477
        %v990 = vunpack.c.l.b16 %v478
        %v991 = vunpack.c.l.b16 %v479
        %v992 = vunpack.c.l.b16 %v480
        %v993 = vunpack.c.l.b16 %v481
        %v994 = vunpack.c.l.b16 %v482
        %v995 = vunpack.c.l.b16 %v483
        %v996 = vunpack.c.l.b16 %v484
        %v997 = vunpack.c.l.b16 %v485
        %v998 = vunpack.c.l.b16 %v486
        %v999 = vunpack.c.l.b16 %v487
        %v1000 = vunpack.c.l.b16 %v488
        %v1001 = vunpack.c.l.b16 %v489
        %v1002 = vunpack.c.l.b16 %v490
        %v1003 = vunpack.c.l.b16 %v491
        %v1004 = vunpack.c.l.b16 %v492
        %v1005 = vunpack.c.l.b16 %v493
        %v1006 = vunpack.c.l.b16 %v494
        %v1007 = vunpack.c.l.b16 %v495
        %v1008 = vunpack.c.l.b16 %v496
        %v1009 = vunpack.c.l.b16 %v497
        %v1010 = vunpack.c.l.b16 %v498
        %v1011 = vunpack.c.l.b16 %v499
        %v1012 = vunpack.c.l.b16 %v500
        %v1013 = vunpack.c.l.b16 %v501
        %v1014 = vunpack.c.l.b16 %v502
        %v1015 = vunpack.c.l.b16 %v503
        %v1016 = vunpack.c.l.b16 %v504
        %v1017 = vunpack.c.l.b16 %v505
        %v1018 = vunpack.c.l.b16 %v506
        %v1019 = vunpack.c.l.b16 %v507
        %v1020 = vunpack.c.l.b16 %v508
        %v1021 = vunpack.c.l.b16 %v509
        %v1022 = vunpack.c.l.b16 %v510
        %v1023 = vunpack.c.l.b16 %v511
        %v1024 = vunpack.c.l.b16 %v512
        %v1025 = vunpack.c.l.b16 %v513
        %v1026 = vunpack.c.l.b16 %v514
        %v1027 = vunpack.c.l.b16 %v515
        %v1028 = vunpack.c.l.b16 %v516
        %v1029 = vunpack.c.l.b16 %v517
        %v1030 = vunpack.c.l.b16 %v518
        %v1031 = vunpack.c.l.b16 %v519
        %v1032 = vunpack.c.l.b16 %v520
        %v1033 = vunpack.c.l.b16 %v521
        %v1034 = vunpack.c.l.b16 %v522
        %v1035 = vunpack.c.l.b16 %v523
        %v1036 = vunpack.c.l.b16 %v524
        %v1037 = vpack.c.b16 %v974, %v973
        %v1038 = vpack.c.b16 %v976, %v975
        %v1039 = vpack.c.b16 %v978, %v977
        %v1040 = vpack.c.b16 %v980, %v979
        %v1041 = vpack.c.b16 %v982, %v981
        %v1042 = vpack.c.b16 %v984, %v983
        %v1043 = vpack.c.b16 %v986, %v985
        %v1044 = vpack.c.b16 %v988, %v987
        %v1045 = vpack.c.b16 %v990, %v989
        %v1046 = vpack.c.b16 %v992, %v991
        %v1047 = vpack.c.b16 %v994, %v993
        %v1048 = vpack.c.b16 %v996, %v995
        %v1049 = vpack.c.b16 %v998, %v997
        %v1050 = vpack.c.b16 %v1000, %v999
        %v1051 = vpack.c.b16 %v1002, %v1001
        %v1052 = vpack.c.b16 %v1004, %v1003
        %v1053 = vpack.c.b16 %v1006, %v1005
        %v1054 = vpack.c.b16 %v1008, %v1007
        %v1055 = vpack.c.b16 %v1010, %v1009
        %v1056 = vpack.c.b16 %v1012, %v1011
        %v1057 = vpack.c.b16 %v1014, %v1013
        %v1058 = vpack.c.b16 %v1016, %v1015
        %v1059 = vpack.c.b16 %v1018, %v1017
        %v1060 = vpack.c.b16 %v1020, %v1019
        %v1061 = vpack.c.b16 %v1022, %v1021
        %v1062 = vpack.c.b16 %v1024, %v1023
        %v1063 = vpack.c.b16 %v1026, %v1025
        %v1064 = vpack.c.b16 %v1028, %v1027
        %v1065 = vpack.c.b16 %v1030, %v1029
        %v1066 = vpack.c.b16 %v1032, %v1031
        %v1067 = vpack.c.b16 %v1034, %v1033
        %v1068 = vpack.c.b16 %v1036, %v1035
        %vm1069 = vcmask 523264
        %v1071 = vsel %vm1069, %v1037, 0
        %v1074 = vsel %vm1069, %v1038, 0
        %v1077 = vsel %vm1069, %v1039, 0
        %v1080 = vsel %vm1069, %v1040, 0
        %v1083 = vsel %vm1069, %v1041, 0
        %v1086 = vsel %vm1069, %v1042, 0
        %v1089 = vsel %vm1069, %v1043, 0
        %v1092 = vsel %vm1069, %v1044, 0
        %v1095 = vsel %vm1069, %v1045, 0
        %v1098 = vsel %vm1069, %v1046, 0
        %v1101 = vsel %vm1069, %v1047, 0
        %v1104 = vsel %vm1069, %v1048, 0
        %v1107 = vsel %vm1069, %v1049, 0
        %v1110 = vsel %vm1069, %v1050, 0
        %v1113 = vsel %vm1069, %v1051, 0
        %v1116 = vsel %vm1069, %v1052, 0
        %v1119 = vsel %vm1069, %v1053, 0
        %v1122 = vsel %vm1069, %v1054, 0
        %v1125 = vsel %vm1069, %v1055, 0
        %v1128 = vsel %vm1069, %v1056, 0
        %v1131 = vsel %vm1069, %v1057, 0
        %v1134 = vsel %vm1069, %v1058, 0
        %v1137 = vsel %vm1069, %v1059, 0
        %v1140 = vsel %vm1069, %v1060, 0
        %v1143 = vsel %vm1069, %v1061, 0
        %v1146 = vsel %vm1069, %v1062, 0
        %v1149 = vsel %vm1069, %v1063, 0
        %v1152 = vsel %vm1069, %v1064, 0
        %v1155 = vsel %vm1069, %v1065, 0
        %v1158 = vsel %vm1069, %v1066, 0
        %v1161 = vsel %vm1069, %v1067, 0
        %v1164 = vsel %vm1069, %v1068, 0
        %1166 = vmatprep.subr.bf16.mxu0 0
        %1167 = vmatpush1.bf16.msra.mxu0 0
        %1168 = vmatprep.subr.bf16.mxu0 0
        %1169 = vmatpush1.bf16.msra.mxu0 0
        %1170 = vmatprep.subr.bf16.mxu0 0
        %1171 = vmatpush1.bf16.msra.mxu0 0
        %1172 = vmatprep.subr.bf16.mxu0 0
        %1173 = vmatpush1.bf16.msra.mxu0 0
        %1174 = vmatprep.subr.bf16.mxu0 %v460
        %1175 = vmatpush1.bf16.msra.mxu0 %v459
        %1176 = vmatprep.subr.bf16.mxu0 %v458
        %1177 = vmatpush1.bf16.msra.mxu0 %v457
        %1178 = vmatprep.subr.bf16.mxu0 %v456
        %1179 = vmatpush1.bf16.msra.mxu0 %v455
        %1180 = vmatprep.subr.bf16.mxu0 %v454
        %1181 = vmatpush1.bf16.msra.mxu0 %v453
        %1182 = vmatprep.subr.bf16.mxu0 0
        %1183 = vmatpush2.bf16.msra.mxu0 0
        %1184 = vmatprep.subr.bf16.mxu0 0
        %1185 = vmatpush2.bf16.msra.mxu0 0
        %1186 = vmatprep.subr.bf16.mxu0 0
        %1187 = vmatpush2.bf16.msra.mxu0 0
        %1188 = vmatprep.subr.bf16.mxu0 0
        %1189 = vmatpush2.bf16.msra.mxu0 0
        %1190 = vmatprep.subr.bf16.mxu0 0
        %1191 = vmatpush2.bf16.msra.mxu0 0
        %1192 = vmatprep.subr.bf16.mxu0 0
        %1193 = vmatpush2.bf16.msra.mxu0 0
        %1194 = vmatprep.subr.bf16.mxu0 0
        %1195 = vmatpush2.bf16.msra.mxu0 0
        %1196 = vmatprep.subr.bf16.mxu0 0
        %1197 = vmatpush2.bf16.msra.mxu0 0
        %1198 = vmatprep.mubr.bf16.mxu0 0
        %1199 = vmatmul.mubr.bf16.gmra.mxu0 %v1071
        %v1200 = vpop.f32.mrf.mxu0
        %v1201 = vadd.f32 %v592, %v1200
        %v1202 = vpop.f32.mrf.mxu0
        %v1203 = vadd.f32 %v592, %v1202
        %v1204 = vpop.f32.mrf.mxu0
        %v1205 = vadd.f32 %v597, %v1204
        %v1206 = vpop.f32.mrf.mxu0
        %v1207 = vadd.f32 %v597, %v1206
        %1208 = vmatprep.mubr.bf16.mxu0 0
        %1209 = vmatmul.mubr.bf16.gmra.mxu0 %v1074
        %v1210 = vpop.f32.mrf.mxu0
        %v1211 = vadd.f32 %v602, %v1210
        %v1212 = vpop.f32.mrf.mxu0
        %v1213 = vadd.f32 %v602, %v1212
        %v1214 = vpop.f32.mrf.mxu0
        %v1215 = vadd.f32 %v607, %v1214
        %v1216 = vpop.f32.mrf.mxu0
        %v1217 = vadd.f32 %v607, %v1216
        %1218 = vmatprep.mubr.bf16.mxu0 0
        %1219 = vmatmul.mubr.bf16.gmra.mxu0 %v1077
        %v1220 = vpop.f32.mrf.mxu0
        %v1221 = vadd.f32 %v612, %v1220
        %v1222 = vpop.f32.mrf.mxu0
        %v1223 = vadd.f32 %v612, %v1222
        %v1224 = vpop.f32.mrf.mxu0
        %v1225 = vadd.f32 %v617, %v1224
        %v1226 = vpop.f32.mrf.mxu0
        %v1227 = vadd.f32 %v617, %v1226
        %1228 = vmatprep.mubr.bf16.mxu0 0
        %1229 = vmatmul.mubr.bf16.gmra.mxu0 %v1080
        %v1230 = vpop.f32.mrf.mxu0
        %v1231 = vadd.f32 %v622, %v1230
        %v1232 = vpop.f32.mrf.mxu0
        %v1233 = vadd.f32 %v622, %v1232
        %v1234 = vpop.f32.mrf.mxu0
        %v1235 = vadd.f32 %v627, %v1234
        %v1236 = vpop.f32.mrf.mxu0
        %v1237 = vadd.f32 %v627, %v1236
        %1238 = vmatprep.mubr.bf16.mxu0 0
        %1239 = vmatmul.mubr.bf16.gmra.mxu0 %v1083
        %v1240 = vpop.f32.mrf.mxu0
        %v1241 = vadd.f32 %v632, %v1240
        %v1242 = vpop.f32.mrf.mxu0
        %v1243 = vadd.f32 %v632, %v1242
        %v1244 = vpop.f32.mrf.mxu0
        %v1245 = vadd.f32 %v637, %v1244
        %v1246 = vpop.f32.mrf.mxu0
        %v1247 = vadd.f32 %v637, %v1246
        %1248 = vmatprep.mubr.bf16.mxu0 0
        %1249 = vmatmul.mubr.bf16.gmra.mxu0 %v1086
        %v1250 = vpop.f32.mrf.mxu0
        %v1251 = vadd.f32 %v642, %v1250
        %v1252 = vpop.f32.mrf.mxu0
        %v1253 = vadd.f32 %v642, %v1252
        %v1254 = vpop.f32.mrf.mxu0
        %v1255 = vadd.f32 %v647, %v1254
        %v1256 = vpop.f32.mrf.mxu0
        %v1257 = vadd.f32 %v647, %v1256
        %1258 = vmatprep.mubr.bf16.mxu0 0
        %1259 = vmatmul.mubr.bf16.gmra.mxu0 %v1089
        %v1260 = vpop.f32.mrf.mxu0
        %v1261 = vadd.f32 %v652, %v1260
        %v1262 = vpop.f32.mrf.mxu0
        %v1263 = vadd.f32 %v652, %v1262
        %v1264 = vpop.f32.mrf.mxu0
        %v1265 = vadd.f32 %v657, %v1264
        %v1266 = vpop.f32.mrf.mxu0
        %v1267 = vadd.f32 %v657, %v1266
        %1268 = vmatprep.mubr.bf16.mxu0 0
        %1269 = vmatmul.mubr.bf16.gmra.mxu0 %v1092
        %v1270 = vpop.f32.mrf.mxu0
        %v1271 = vadd.f32 %v662, %v1270
        %v1272 = vpop.f32.mrf.mxu0
        %v1273 = vadd.f32 %v662, %v1272
        %v1274 = vpop.f32.mrf.mxu0
        %v1275 = vadd.f32 %v667, %v1274
        %v1276 = vpop.f32.mrf.mxu0
        %v1277 = vadd.f32 %v667, %v1276
        %1278 = vmatprep.mubr.bf16.mxu0 0
        %1279 = vmatmul.mubr.bf16.gmra.mxu0 %v1095
        %v1280 = vpop.f32.mrf.mxu0
        %v1281 = vadd.f32 %v672, %v1280
        %v1282 = vpop.f32.mrf.mxu0
        %v1283 = vadd.f32 %v672, %v1282
        %v1284 = vpop.f32.mrf.mxu0
        %v1285 = vadd.f32 %v677, %v1284
        %v1286 = vpop.f32.mrf.mxu0
        %v1287 = vadd.f32 %v677, %v1286
        %1288 = vmatprep.mubr.bf16.mxu0 0
        %1289 = vmatmul.mubr.bf16.gmra.mxu0 %v1098
        %v1290 = vpop.f32.mrf.mxu0
        %v1291 = vadd.f32 %v682, %v1290
        %v1292 = vpop.f32.mrf.mxu0
        %v1293 = vadd.f32 %v682, %v1292
        %v1294 = vpop.f32.mrf.mxu0
        %v1295 = vadd.f32 %v687, %v1294
        %v1296 = vpop.f32.mrf.mxu0
        %v1297 = vadd.f32 %v687, %v1296
        %1298 = vmatprep.mubr.bf16.mxu0 0
        %1299 = vmatmul.mubr.bf16.gmra.mxu0 %v1101
        %v1300 = vpop.f32.mrf.mxu0
        %v1301 = vadd.f32 %v692, %v1300
        %v1302 = vpop.f32.mrf.mxu0
        %v1303 = vadd.f32 %v692, %v1302
        %v1304 = vpop.f32.mrf.mxu0
        %v1305 = vadd.f32 %v697, %v1304
        %v1306 = vpop.f32.mrf.mxu0
        %v1307 = vadd.f32 %v697, %v1306
        %1308 = vmatprep.mubr.bf16.mxu0 0
        %1309 = vmatmul.mubr.bf16.gmra.mxu0 %v1104
        %v1310 = vpop.f32.mrf.mxu0
        %v1311 = vadd.f32 %v702, %v1310
        %v1312 = vpop.f32.mrf.mxu0
        %v1313 = vadd.f32 %v702, %v1312
        %v1314 = vpop.f32.mrf.mxu0
        %v1315 = vadd.f32 %v707, %v1314
        %v1316 = vpop.f32.mrf.mxu0
        %v1317 = vadd.f32 %v707, %v1316
        %1318 = vmatprep.mubr.bf16.mxu0 0
        %1319 = vmatmul.mubr.bf16.gmra.mxu0 %v1107
        %v1320 = vpop.f32.mrf.mxu0
        %v1321 = vadd.f32 %v712, %v1320
        %v1322 = vpop.f32.mrf.mxu0
        %v1323 = vadd.f32 %v712, %v1322
        %v1324 = vpop.f32.mrf.mxu0
        %v1325 = vadd.f32 %v717, %v1324
        %v1326 = vpop.f32.mrf.mxu0
        %v1327 = vadd.f32 %v717, %v1326
        %1328 = vmatprep.mubr.bf16.mxu0 0
        %1329 = vmatmul.mubr.bf16.gmra.mxu0 %v1110
        %v1330 = vpop.f32.mrf.mxu0
        %v1331 = vadd.f32 %v722, %v1330
        %v1332 = vpop.f32.mrf.mxu0
        %v1333 = vadd.f32 %v722, %v1332
        %v1334 = vpop.f32.mrf.mxu0
        %v1335 = vadd.f32 %v727, %v1334
        %v1336 = vpop.f32.mrf.mxu0
        %v1337 = vadd.f32 %v727, %v1336
        %1338 = vmatprep.mubr.bf16.mxu0 0
        %1339 = vmatmul.mubr.bf16.gmra.mxu0 %v1113
        %v1340 = vpop.f32.mrf.mxu0
        %v1341 = vadd.f32 %v732, %v1340
        %v1342 = vpop.f32.mrf.mxu0
        %v1343 = vadd.f32 %v732, %v1342
        %v1344 = vpop.f32.mrf.mxu0
        %v1345 = vadd.f32 %v737, %v1344
        %v1346 = vpop.f32.mrf.mxu0
        %v1347 = vadd.f32 %v737, %v1346
        %1348 = vmatprep.mubr.bf16.mxu0 0
        %1349 = vmatmul.mubr.bf16.gmra.mxu0 %v1116
        %v1350 = vpop.f32.mrf.mxu0
        %v1351 = vadd.f32 %v742, %v1350
        %v1352 = vpop.f32.mrf.mxu0
        %v1353 = vadd.f32 %v742, %v1352
        %v1354 = vpop.f32.mrf.mxu0
        %v1355 = vadd.f32 %v747, %v1354
        %v1356 = vpop.f32.mrf.mxu0
        %v1357 = vadd.f32 %v747, %v1356
        %1358 = vmatprep.mubr.bf16.mxu0 0
        %1359 = vmatmul.mubr.bf16.gmra.mxu0 %v1119
        %v1360 = vpop.f32.mrf.mxu0
        %v1361 = vadd.f32 %v752, %v1360
        %v1362 = vpop.f32.mrf.mxu0
        %v1363 = vadd.f32 %v752, %v1362
        %v1364 = vpop.f32.mrf.mxu0
        %v1365 = vadd.f32 %v757, %v1364
        %v1366 = vpop.f32.mrf.mxu0
        %v1367 = vadd.f32 %v757, %v1366
        %1368 = vmatprep.mubr.bf16.mxu0 0
        %1369 = vmatmul.mubr.bf16.gmra.mxu0 %v1122
        %v1370 = vpop.f32.mrf.mxu0
        %v1371 = vadd.f32 %v762, %v1370
        %v1372 = vpop.f32.mrf.mxu0
        %v1373 = vadd.f32 %v762, %v1372
        %v1374 = vpop.f32.mrf.mxu0
        %v1375 = vadd.f32 %v767, %v1374
        %v1376 = vpop.f32.mrf.mxu0
        %v1377 = vadd.f32 %v767, %v1376
        %1378 = vmatprep.mubr.bf16.mxu0 0
        %1379 = vmatmul.mubr.bf16.gmra.mxu0 %v1125
        %v1380 = vpop.f32.mrf.mxu0
        %v1381 = vadd.f32 %v772, %v1380
        %v1382 = vpop.f32.mrf.mxu0
        %v1383 = vadd.f32 %v772, %v1382
        %v1384 = vpop.f32.mrf.mxu0
        %v1385 = vadd.f32 %v777, %v1384
        %v1386 = vpop.f32.mrf.mxu0
        %v1387 = vadd.f32 %v777, %v1386
        %1388 = vmatprep.mubr.bf16.mxu0 0
        %1389 = vmatmul.mubr.bf16.gmra.mxu0 %v1128
        %v1390 = vpop.f32.mrf.mxu0
        %v1391 = vadd.f32 %v782, %v1390
        %v1392 = vpop.f32.mrf.mxu0
        %v1393 = vadd.f32 %v782, %v1392
        %v1394 = vpop.f32.mrf.mxu0
        %v1395 = vadd.f32 %v787, %v1394
        %v1396 = vpop.f32.mrf.mxu0
        %v1397 = vadd.f32 %v787, %v1396
        %1398 = vmatprep.mubr.bf16.mxu0 0
        %1399 = vmatmul.mubr.bf16.gmra.mxu0 %v1131
        %v1400 = vpop.f32.mrf.mxu0
        %v1401 = vadd.f32 %v792, %v1400
        %v1402 = vpop.f32.mrf.mxu0
        %v1403 = vadd.f32 %v792, %v1402
        %v1404 = vpop.f32.mrf.mxu0
        %v1405 = vadd.f32 %v797, %v1404
        %v1406 = vpop.f32.mrf.mxu0
        %v1407 = vadd.f32 %v797, %v1406
        %1408 = vmatprep.mubr.bf16.mxu0 0
        %1409 = vmatmul.mubr.bf16.gmra.mxu0 %v1134
        %v1410 = vpop.f32.mrf.mxu0
        %v1411 = vadd.f32 %v802, %v1410
        %v1412 = vpop.f32.mrf.mxu0
        %v1413 = vadd.f32 %v802, %v1412
        %v1414 = vpop.f32.mrf.mxu0
        %v1415 = vadd.f32 %v807, %v1414
        %v1416 = vpop.f32.mrf.mxu0
        %v1417 = vadd.f32 %v807, %v1416
        %1418 = vmatprep.mubr.bf16.mxu0 0
        %1419 = vmatmul.mubr.bf16.gmra.mxu0 %v1137
        %v1420 = vpop.f32.mrf.mxu0
        %v1421 = vadd.f32 %v812, %v1420
        %v1422 = vpop.f32.mrf.mxu0
        %v1423 = vadd.f32 %v812, %v1422
        %v1424 = vpop.f32.mrf.mxu0
        %v1425 = vadd.f32 %v817, %v1424
        %v1426 = vpop.f32.mrf.mxu0
        %v1427 = vadd.f32 %v817, %v1426
        %1428 = vmatprep.mubr.bf16.mxu0 0
        %1429 = vmatmul.mubr.bf16.gmra.mxu0 %v1140
        %v1430 = vpop.f32.mrf.mxu0
        %v1431 = vadd.f32 %v822, %v1430
        %v1432 = vpop.f32.mrf.mxu0
        %v1433 = vadd.f32 %v822, %v1432
        %v1434 = vpop.f32.mrf.mxu0
        %v1435 = vadd.f32 %v827, %v1434
        %v1436 = vpop.f32.mrf.mxu0
        %v1437 = vadd.f32 %v827, %v1436
        %1438 = vmatprep.mubr.bf16.mxu0 0
        %1439 = vmatmul.mubr.bf16.gmra.mxu0 %v1143
        %v1440 = vpop.f32.mrf.mxu0
        %v1441 = vadd.f32 %v832, %v1440
        %v1442 = vpop.f32.mrf.mxu0
        %v1443 = vadd.f32 %v832, %v1442
        %v1444 = vpop.f32.mrf.mxu0
        %v1445 = vadd.f32 %v837, %v1444
        %v1446 = vpop.f32.mrf.mxu0
        %v1447 = vadd.f32 %v837, %v1446
        %1448 = vmatprep.mubr.bf16.mxu0 0
        %1449 = vmatmul.mubr.bf16.gmra.mxu0 %v1146
        %v1450 = vpop.f32.mrf.mxu0
        %v1451 = vadd.f32 %v842, %v1450
        %v1452 = vpop.f32.mrf.mxu0
        %v1453 = vadd.f32 %v842, %v1452
        %v1454 = vpop.f32.mrf.mxu0
        %v1455 = vadd.f32 %v847, %v1454
        %v1456 = vpop.f32.mrf.mxu0
        %v1457 = vadd.f32 %v847, %v1456
        %1458 = vmatprep.mubr.bf16.mxu0 0
        %1459 = vmatmul.mubr.bf16.gmra.mxu0 %v1149
        %v1460 = vpop.f32.mrf.mxu0
        %v1461 = vadd.f32 %v852, %v1460
        %v1462 = vpop.f32.mrf.mxu0
        %v1463 = vadd.f32 %v852, %v1462
        %v1464 = vpop.f32.mrf.mxu0
        %v1465 = vadd.f32 %v857, %v1464
        %v1466 = vpop.f32.mrf.mxu0
        %v1467 = vadd.f32 %v857, %v1466
        %1468 = vmatprep.mubr.bf16.mxu0 0
        %1469 = vmatmul.mubr.bf16.gmra.mxu0 %v1152
        %v1470 = vpop.f32.mrf.mxu0
        %v1471 = vadd.f32 %v862, %v1470
        %v1472 = vpop.f32.mrf.mxu0
        %v1473 = vadd.f32 %v862, %v1472
        %v1474 = vpop.f32.mrf.mxu0
        %v1475 = vadd.f32 %v867, %v1474
        %v1476 = vpop.f32.mrf.mxu0
        %v1477 = vadd.f32 %v867, %v1476
        %1478 = vmatprep.mubr.bf16.mxu0 0
        %1479 = vmatmul.mubr.bf16.gmra.mxu0 %v1155
        %v1480 = vpop.f32.mrf.mxu0
        %v1481 = vadd.f32 %v872, %v1480
        %v1482 = vpop.f32.mrf.mxu0
        %v1483 = vadd.f32 %v872, %v1482
        %v1484 = vpop.f32.mrf.mxu0
        %v1485 = vadd.f32 %v877, %v1484
        %v1486 = vpop.f32.mrf.mxu0
        %v1487 = vadd.f32 %v877, %v1486
        %1488 = vmatprep.mubr.bf16.mxu0 0
        %1489 = vmatmul.mubr.bf16.gmra.mxu0 %v1158
        %v1490 = vpop.f32.mrf.mxu0
        %v1491 = vadd.f32 %v882, %v1490
        %v1492 = vpop.f32.mrf.mxu0
        %v1493 = vadd.f32 %v882, %v1492
        %v1494 = vpop.f32.mrf.mxu0
        %v1495 = vadd.f32 %v887, %v1494
        %v1496 = vpop.f32.mrf.mxu0
        %v1497 = vadd.f32 %v887, %v1496
        %1498 = vmatprep.mubr.bf16.mxu0 0
        %1499 = vmatmul.mubr.bf16.gmra.mxu0 %v1161
        %v1500 = vpop.f32.mrf.mxu0
        %v1501 = vadd.f32 %v892, %v1500
        %v1502 = vpop.f32.mrf.mxu0
        %v1503 = vadd.f32 %v892, %v1502
        %v1504 = vpop.f32.mrf.mxu0
        %v1505 = vadd.f32 %v897, %v1504
        %v1506 = vpop.f32.mrf.mxu0
        %v1507 = vadd.f32 %v897, %v1506
        %1508 = vmatprep.mubr.bf16.mxu0 0
        %1509 = vmatmul.mubr.bf16.gmra.mxu0 %v1164
        %v1510 = vpop.f32.mrf.mxu0
        %v1511 = vadd.f32 %v902, %v1510
        %v1512 = vpop.f32.mrf.mxu0
        %v1513 = vadd.f32 %v902, %v1512
        %v1514 = vpop.f32.mrf.mxu0
        %v1515 = vadd.f32 %v907, %v1514
        %v1516 = vpop.f32.mrf.mxu0
        %v1517 = vadd.f32 %v907, %v1516
        %1518 = vdwg.mxu0
        %v1519 = vmax.f32 %v1201, 0.0
        %v1520 = vmax.f32 %v1203, 0.0
        %v1521 = vmax.f32 %v1205, 0.0
        %v1522 = vmax.f32 %v1207, 0.0
        %v1523 = vmax.f32 %v1211, 0.0
        %v1524 = vmax.f32 %v1213, 0.0
        %v1525 = vmax.f32 %v1215, 0.0
        %v1526 = vmax.f32 %v1217, 0.0
        %v1527 = vmax.f32 %v1221, 0.0
        %v1528 = vmax.f32 %v1223, 0.0
        %v1529 = vmax.f32 %v1225, 0.0
        %v1530 = vmax.f32 %v1227, 0.0
        %v1531 = vmax.f32 %v1231, 0.0
        %v1532 = vmax.f32 %v1233, 0.0
        %v1533 = vmax.f32 %v1235, 0.0
        %v1534 = vmax.f32 %v1237, 0.0
        %v1535 = vmax.f32 %v1241, 0.0
        %v1536 = vmax.f32 %v1243, 0.0
        %v1537 = vmax.f32 %v1245, 0.0
        %v1538 = vmax.f32 %v1247, 0.0
        %v1539 = vmax.f32 %v1251, 0.0
        %v1540 = vmax.f32 %v1253, 0.0
        %v1541 = vmax.f32 %v1255, 0.0
        %v1542 = vmax.f32 %v1257, 0.0
        %v1543 = vmax.f32 %v1261, 0.0
        %v1544 = vmax.f32 %v1263, 0.0
        %v1545 = vmax.f32 %v1265, 0.0
        %v1546 = vmax.f32 %v1267, 0.0
        %v1547 = vmax.f32 %v1271, 0.0
        %v1548 = vmax.f32 %v1273, 0.0
        %v1549 = vmax.f32 %v1275, 0.0
        %v1550 = vmax.f32 %v1277, 0.0
        %v1551 = vmax.f32 %v1281, 0.0
        %v1552 = vmax.f32 %v1283, 0.0
        %v1553 = vmax.f32 %v1285, 0.0
        %v1554 = vmax.f32 %v1287, 0.0
        %v1555 = vmax.f32 %v1291, 0.0
        %v1556 = vmax.f32 %v1293, 0.0
        %v1557 = vmax.f32 %v1295, 0.0
        %v1558 = vmax.f32 %v1297, 0.0
        %v1559 = vmax.f32 %v1301, 0.0
        %v1560 = vmax.f32 %v1303, 0.0
        %v1561 = vmax.f32 %v1305, 0.0
        %v1562 = vmax.f32 %v1307, 0.0
        %v1563 = vmax.f32 %v1311, 0.0
        %v1564 = vmax.f32 %v1313, 0.0
        %v1565 = vmax.f32 %v1315, 0.0
        %v1566 = vmax.f32 %v1317, 0.0
        %v1567 = vmax.f32 %v1321, 0.0
        %v1568 = vmax.f32 %v1323, 0.0
        %v1569 = vmax.f32 %v1325, 0.0
        %v1570 = vmax.f32 %v1327, 0.0
        %v1571 = vmax.f32 %v1331, 0.0
        %v1572 = vmax.f32 %v1333, 0.0
        %v1573 = vmax.f32 %v1335, 0.0
        %v1574 = vmax.f32 %v1337, 0.0
        %v1575 = vmax.f32 %v1341, 0.0
        %v1576 = vmax.f32 %v1343, 0.0
        %v1577 = vmax.f32 %v1345, 0.0
        %v1578 = vmax.f32 %v1347, 0.0
        %v1579 = vmax.f32 %v1351, 0.0
        %v1580 = vmax.f32 %v1353, 0.0
        %v1581 = vmax.f32 %v1355, 0.0
        %v1582 = vmax.f32 %v1357, 0.0
        %v1583 = vmax.f32 %v1361, 0.0
        %v1584 = vmax.f32 %v1363, 0.0
        %v1585 = vmax.f32 %v1365, 0.0
        %v1586 = vmax.f32 %v1367, 0.0
        %v1587 = vmax.f32 %v1371, 0.0
        %v1588 = vmax.f32 %v1373, 0.0
        %v1589 = vmax.f32 %v1375, 0.0
        %v1590 = vmax.f32 %v1377, 0.0
        %v1591 = vmax.f32 %v1381, 0.0
        %v1592 = vmax.f32 %v1383, 0.0
        %v1593 = vmax.f32 %v1385, 0.0
        %v1594 = vmax.f32 %v1387, 0.0
        %v1595 = vmax.f32 %v1391, 0.0
        %v1596 = vmax.f32 %v1393, 0.0
        %v1597 = vmax.f32 %v1395, 0.0
        %v1598 = vmax.f32 %v1397, 0.0
        %v1599 = vmax.f32 %v1401, 0.0
        %v1600 = vmax.f32 %v1403, 0.0
        %v1601 = vmax.f32 %v1405, 0.0
        %v1602 = vmax.f32 %v1407, 0.0
        %v1603 = vmax.f32 %v1411, 0.0
        %v1604 = vmax.f32 %v1413, 0.0
        %v1605 = vmax.f32 %v1415, 0.0
        %v1606 = vmax.f32 %v1417, 0.0
        %v1607 = vmax.f32 %v1421, 0.0
        %v1608 = vmax.f32 %v1423, 0.0
        %v1609 = vmax.f32 %v1425, 0.0
        %v1610 = vmax.f32 %v1427, 0.0
        %v1611 = vmax.f32 %v1431, 0.0
        %v1612 = vmax.f32 %v1433, 0.0
        %v1613 = vmax.f32 %v1435, 0.0
        %v1614 = vmax.f32 %v1437, 0.0
        %v1615 = vmax.f32 %v1441, 0.0
        %v1616 = vmax.f32 %v1443, 0.0
        %v1617 = vmax.f32 %v1445, 0.0
        %v1618 = vmax.f32 %v1447, 0.0
        %v1619 = vmax.f32 %v1451, 0.0
        %v1620 = vmax.f32 %v1453, 0.0
        %v1621 = vmax.f32 %v1455, 0.0
        %v1622 = vmax.f32 %v1457, 0.0
        %v1623 = vmax.f32 %v1461, 0.0
        %v1624 = vmax.f32 %v1463, 0.0
        %v1625 = vmax.f32 %v1465, 0.0
        %v1626 = vmax.f32 %v1467, 0.0
        %v1627 = vmax.f32 %v1471, 0.0
        %v1628 = vmax.f32 %v1473, 0.0
        %v1629 = vmax.f32 %v1475, 0.0
        %v1630 = vmax.f32 %v1477, 0.0
        %v1631 = vmax.f32 %v1481, 0.0
        %v1632 = vmax.f32 %v1483, 0.0
        %v1633 = vmax.f32 %v1485, 0.0
        %v1634 = vmax.f32 %v1487, 0.0
        %v1635 = vmax.f32 %v1491, 0.0
        %v1636 = vmax.f32 %v1493, 0.0
        %v1637 = vmax.f32 %v1495, 0.0
        %v1638 = vmax.f32 %v1497, 0.0
        %v1639 = vmax.f32 %v1501, 0.0
        %v1640 = vmax.f32 %v1503, 0.0
        %v1641 = vmax.f32 %v1505, 0.0
        %v1642 = vmax.f32 %v1507, 0.0
        %v1643 = vmax.f32 %v1511, 0.0
        %v1644 = vmax.f32 %v1513, 0.0
        %v1645 = vmax.f32 %v1515, 0.0
        %v1646 = vmax.f32 %v1517, 0.0
        %v1647 = vpack.c.bf16 %v1521, %v1519
        %v1648 = vpack.c.bf16 %v1522, %v1520
        %v1649 = vpack.c.bf16 %v1525, %v1523
        %v1650 = vpack.c.bf16 %v1526, %v1524
        %v1651 = vpack.c.bf16 %v1529, %v1527
        %v1652 = vpack.c.bf16 %v1530, %v1528
        %v1653 = vpack.c.bf16 %v1533, %v1531
        %v1654 = vpack.c.bf16 %v1534, %v1532
        %v1655 = vpack.c.bf16 %v1537, %v1535
        %v1656 = vpack.c.bf16 %v1538, %v1536
        %v1657 = vpack.c.bf16 %v1541, %v1539
        %v1658 = vpack.c.bf16 %v1542, %v1540
        %v1659 = vpack.c.bf16 %v1545, %v1543
        %v1660 = vpack.c.bf16 %v1546, %v1544
        %v1661 = vpack.c.bf16 %v1549, %v1547
        %v1662 = vpack.c.bf16 %v1550, %v1548
        %v1663 = vpack.c.bf16 %v1553, %v1551
        %v1664 = vpack.c.bf16 %v1554, %v1552
        %v1665 = vpack.c.bf16 %v1557, %v1555
        %v1666 = vpack.c.bf16 %v1558, %v1556
        %v1667 = vpack.c.bf16 %v1561, %v1559
        %v1668 = vpack.c.bf16 %v1562, %v1560
        %v1669 = vpack.c.bf16 %v1565, %v1563
        %v1670 = vpack.c.bf16 %v1566, %v1564
        %v1671 = vpack.c.bf16 %v1569, %v1567
        %v1672 = vpack.c.bf16 %v1570, %v1568
        %v1673 = vpack.c.bf16 %v1573, %v1571
        %v1674 = vpack.c.bf16 %v1574, %v1572
        %v1675 = vpack.c.bf16 %v1577, %v1575
        %v1676 = vpack.c.bf16 %v1578, %v1576
        %v1677 = vpack.c.bf16 %v1581, %v1579
        %v1678 = vpack.c.bf16 %v1582, %v1580
        %v1679 = vpack.c.bf16 %v1585, %v1583
        %v1680 = vpack.c.bf16 %v1586, %v1584
        %v1681 = vpack.c.bf16 %v1589, %v1587
        %v1682 = vpack.c.bf16 %v1590, %v1588
        %v1683 = vpack.c.bf16 %v1593, %v1591
        %v1684 = vpack.c.bf16 %v1594, %v1592
        %v1685 = vpack.c.bf16 %v1597, %v1595
        %v1686 = vpack.c.bf16 %v1598, %v1596
        %v1687 = vpack.c.bf16 %v1601, %v1599
        %v1688 = vpack.c.bf16 %v1602, %v1600
        %v1689 = vpack.c.bf16 %v1605, %v1603
        %v1690 = vpack.c.bf16 %v1606, %v1604
        %v1691 = vpack.c.bf16 %v1609, %v1607
        %v1692 = vpack.c.bf16 %v1610, %v1608
        %v1693 = vpack.c.bf16 %v1613, %v1611
        %v1694 = vpack.c.bf16 %v1614, %v1612
        %v1695 = vpack.c.bf16 %v1617, %v1615
        %v1696 = vpack.c.bf16 %v1618, %v1616
        %v1697 = vpack.c.bf16 %v1621, %v1619
        %v1698 = vpack.c.bf16 %v1622, %v1620
        %v1699 = vpack.c.bf16 %v1625, %v1623
        %v1700 = vpack.c.bf16 %v1626, %v1624
        %v1701 = vpack.c.bf16 %v1629, %v1627
        %v1702 = vpack.c.bf16 %v1630, %v1628
        %v1703 = vpack.c.bf16 %v1633, %v1631
        %v1704 = vpack.c.bf16 %v1634, %v1632
        %v1705 = vpack.c.bf16 %v1637, %v1635
        %v1706 = vpack.c.bf16 %v1638, %v1636
        %v1707 = vpack.c.bf16 %v1641, %v1639
        %v1708 = vpack.c.bf16 %v1642, %v1640
        %v1709 = vpack.c.bf16 %v1645, %v1643
        %v1710 = vpack.c.bf16 %v1646, %v1644
        %v1711 = vld [vmem:[%s3] sm:$0xff]
        %v1712 = vld [vmem:[%s3 + $0x8] sm:$0xff]
        %v1713 = vld [vmem:[%s3 + $0x10] sm:$0xff]
        %v1714 = vld [vmem:[%s3 + $0x18] sm:$0xff]
        %v1715 = vld [vmem:[%s3 + $0x20] sm:$0xff]
        %v1716 = vld [vmem:[%s3 + $0x28] sm:$0xff]
        %v1717 = vld [vmem:[%s3 + $0x30] sm:$0xff]
        %v1718 = vld [vmem:[%s3 + $0x38] sm:$0xff]
        %v1719 = vld [vmem:[%s3 + $0x40] sm:$0xff]
        %v1720 = vld [vmem:[%s3 + $0x48] sm:$0xff]
        %v1721 = vld [vmem:[%s3 + $0x50] sm:$0xff]
        %v1722 = vld [vmem:[%s3 + $0x58] sm:$0xff]
        %v1723 = vld [vmem:[%s3 + $0x60] sm:$0xff]
        %v1724 = vld [vmem:[%s3 + $0x68] sm:$0xff]
        %v1725 = vld [vmem:[%s3 + $0x70] sm:$0xff]
        %v1726 = vld [vmem:[%s3 + $0x78] sm:$0xff]
        %v1727 = vld [vmem:[%s3 + $0x80] sm:$0xff]
        %v1728 = vld [vmem:[%s3 + $0x88] sm:$0xff]
        %v1729 = vld [vmem:[%s3 + $0x90] sm:$0xff]
        %v1730 = vld [vmem:[%s3 + $0x98] sm:$0xff]
        %v1731 = vld [vmem:[%s3 + $0xa0] sm:$0xff]
        %v1732 = vld [vmem:[%s3 + $0xa8] sm:$0xff]
        %v1733 = vld [vmem:[%s3 + $0xb0] sm:$0xff]
        %v1734 = vld [vmem:[%s3 + $0xb8] sm:$0xff]
        %v1735 = vld [vmem:[%s3 + $0xc0] sm:$0xff]
        %v1736 = vld [vmem:[%s3 + $0xc8] sm:$0xff]
        %v1737 = vld [vmem:[%s3 + $0xd0] sm:$0xff]
        %v1738 = vld [vmem:[%s3 + $0xd8] sm:$0xff]
        %v1739 = vld [vmem:[%s3 + $0xe0] sm:$0xff]
        %v1740 = vld [vmem:[%s3 + $0xe8] sm:$0xff]
        %v1741 = vld [vmem:[%s3 + $0xf0] sm:$0xff]
        %v1742 = vld [vmem:[%s3 + $0xf8] sm:$0xff]
        %v1743 = vld [vmem:[%s3 + $0x100] sm:$0xff]
        %v1744 = vld [vmem:[%s3 + $0x108] sm:$0xff]
        %v1745 = vld [vmem:[%s3 + $0x110] sm:$0xff]
        %v1746 = vld [vmem:[%s3 + $0x118] sm:$0xff]
        %v1747 = vld [vmem:[%s3 + $0x120] sm:$0xff]
        %v1748 = vld [vmem:[%s3 + $0x128] sm:$0xff]
        %v1749 = vld [vmem:[%s3 + $0x130] sm:$0xff]
        %v1750 = vld [vmem:[%s3 + $0x138] sm:$0xff]
        %v1751 = vld [vmem:[%s3 + $0x140] sm:$0xff]
        %v1752 = vld [vmem:[%s3 + $0x148] sm:$0xff]
        %v1753 = vld [vmem:[%s3 + $0x150] sm:$0xff]
        %v1754 = vld [vmem:[%s3 + $0x158] sm:$0xff]
        %v1755 = vld [vmem:[%s3 + $0x160] sm:$0xff]
        %v1756 = vld [vmem:[%s3 + $0x168] sm:$0xff]
        %v1757 = vld [vmem:[%s3 + $0x170] sm:$0xff]
        %v1758 = vld [vmem:[%s3 + $0x178] sm:$0xff]
        %v1759 = vld [vmem:[%s3 + $0x180] sm:$0xff]
        %v1760 = vld [vmem:[%s3 + $0x188] sm:$0xff]
        %v1761 = vld [vmem:[%s3 + $0x190] sm:$0xff]
        %v1762 = vld [vmem:[%s3 + $0x198] sm:$0xff]
        %v1763 = vld [vmem:[%s3 + $0x1a0] sm:$0xff]
        %v1764 = vld [vmem:[%s3 + $0x1a8] sm:$0xff]
        %v1765 = vld [vmem:[%s3 + $0x1b0] sm:$0xff]
        %v1766 = vld [vmem:[%s3 + $0x1b8] sm:$0xff]
        %v1767 = vld [vmem:[%s3 + $0x1c0] sm:$0xff]
        %v1768 = vld [vmem:[%s3 + $0x1c8] sm:$0xff]
        %v1769 = vld [vmem:[%s3 + $0x1d0] sm:$0xff]
        %v1770 = vld [vmem:[%s3 + $0x1d8] sm:$0xff]
        %v1771 = vld [vmem:[%s3 + $0x1e0] sm:$0xff]
        %v1772 = vld [vmem:[%s3 + $0x1e8] sm:$0xff]
        %v1773 = vld [vmem:[%s3 + $0x1f0] sm:$0xff]
        %v1774 = vld [vmem:[%s3 + $0x1f8] sm:$0xff]
        %v1775 = vld [vmem:[%s4] sm:$0xff]
        %v1776 = vld [vmem:[%s4 + $0x8] sm:$0xff]
        %v1777 = vld [vmem:[%s4 + $0x10] sm:$0xff]
        %v1778 = vld [vmem:[%s4 + $0x18] sm:$0xff]
        %v1779 = vld [vmem:[%s4 + $0x20] sm:$0xff]
        %v1780 = vld [vmem:[%s4 + $0x28] sm:$0xff]
        %v1781 = vld [vmem:[%s4 + $0x30] sm:$0xff]
        %v1782 = vld [vmem:[%s4 + $0x38] sm:$0xff]
        %v1783 = vld [vmem:[%s4 + $0x40] sm:$0xff]
        %v1784 = vld [vmem:[%s4 + $0x48] sm:$0xff]
        %v1785 = vld [vmem:[%s4 + $0x50] sm:$0xff]
        %v1786 = vld [vmem:[%s4 + $0x58] sm:$0xff]
        %v1787 = vld [vmem:[%s4 + $0x60] sm:$0xff]
        %v1788 = vld [vmem:[%s4 + $0x68] sm:$0xff]
        %v1789 = vld [vmem:[%s4 + $0x70] sm:$0xff]
        %v1790 = vld [vmem:[%s4 + $0x78] sm:$0xff]
        %v1791 = vld [vmem:[%s4 + $0x80] sm:$0xff]
        %v1792 = vld [vmem:[%s4 + $0x88] sm:$0xff]
        %v1793 = vld [vmem:[%s4 + $0x90] sm:$0xff]
        %v1794 = vld [vmem:[%s4 + $0x98] sm:$0xff]
        %v1795 = vld [vmem:[%s4 + $0xa0] sm:$0xff]
        %v1796 = vld [vmem:[%s4 + $0xa8] sm:$0xff]
        %v1797 = vld [vmem:[%s4 + $0xb0] sm:$0xff]
        %v1798 = vld [vmem:[%s4 + $0xb8] sm:$0xff]
        %v1799 = vld [vmem:[%s4 + $0xc0] sm:$0xff]
        %v1800 = vld [vmem:[%s4 + $0xc8] sm:$0xff]
        %v1801 = vld [vmem:[%s4 + $0xd0] sm:$0xff]
        %v1802 = vld [vmem:[%s4 + $0xd8] sm:$0xff]
        %v1803 = vld [vmem:[%s4 + $0xe0] sm:$0xff]
        %v1804 = vld [vmem:[%s4 + $0xe8] sm:$0xff]
        %v1805 = vld [vmem:[%s4 + $0xf0] sm:$0xff]
        %v1806 = vld [vmem:[%s4 + $0xf8] sm:$0xff]
        %1808 = vset.pattern.permute.xlu0 0
        %1809 = vperm.xlu0 %1808, %v1775
        %v1810 = vpop.permute.xlu0 %1809
        %1813 = vset.pattern.permute.xlu0 0
        %1814 = vperm.xlu0 %1813, %v1776
        %v1815 = vpop.permute.xlu0 %1814
        %1818 = vset.pattern.permute.xlu0 0
        %1819 = vperm.xlu0 %1818, %v1777
        %v1820 = vpop.permute.xlu0 %1819
        %1823 = vset.pattern.permute.xlu0 0
        %1824 = vperm.xlu0 %1823, %v1778
        %v1825 = vpop.permute.xlu0 %1824
        %1828 = vset.pattern.permute.xlu0 0
        %1829 = vperm.xlu0 %1828, %v1779
        %v1830 = vpop.permute.xlu0 %1829
        %1833 = vset.pattern.permute.xlu0 0
        %1834 = vperm.xlu0 %1833, %v1780
        %v1835 = vpop.permute.xlu0 %1834
        %1838 = vset.pattern.permute.xlu0 0
        %1839 = vperm.xlu0 %1838, %v1781
        %v1840 = vpop.permute.xlu0 %1839
        %1843 = vset.pattern.permute.xlu0 0
        %1844 = vperm.xlu0 %1843, %v1782
        %v1845 = vpop.permute.xlu0 %1844
        %1848 = vset.pattern.permute.xlu0 0
        %1849 = vperm.xlu0 %1848, %v1783
        %v1850 = vpop.permute.xlu0 %1849
        %1853 = vset.pattern.permute.xlu0 0
        %1854 = vperm.xlu0 %1853, %v1784
        %v1855 = vpop.permute.xlu0 %1854
        %1858 = vset.pattern.permute.xlu0 0
        %1859 = vperm.xlu0 %1858, %v1785
        %v1860 = vpop.permute.xlu0 %1859
        %1863 = vset.pattern.permute.xlu0 0
        %1864 = vperm.xlu0 %1863, %v1786
        %v1865 = vpop.permute.xlu0 %1864
        %1868 = vset.pattern.permute.xlu0 0
        %1869 = vperm.xlu0 %1868, %v1787
        %v1870 = vpop.permute.xlu0 %1869
        %1873 = vset.pattern.permute.xlu0 0
        %1874 = vperm.xlu0 %1873, %v1788
        %v1875 = vpop.permute.xlu0 %1874
        %1878 = vset.pattern.permute.xlu0 0
        %1879 = vperm.xlu0 %1878, %v1789
        %v1880 = vpop.permute.xlu0 %1879
        %1883 = vset.pattern.permute.xlu0 0
        %1884 = vperm.xlu0 %1883, %v1790
        %v1885 = vpop.permute.xlu0 %1884
        %1888 = vset.pattern.permute.xlu0 0
        %1889 = vperm.xlu0 %1888, %v1791
        %v1890 = vpop.permute.xlu0 %1889
        %1893 = vset.pattern.permute.xlu0 0
        %1894 = vperm.xlu0 %1893, %v1792
        %v1895 = vpop.permute.xlu0 %1894
        %1898 = vset.pattern.permute.xlu0 0
        %1899 = vperm.xlu0 %1898, %v1793
        %v1900 = vpop.permute.xlu0 %1899
        %1903 = vset.pattern.permute.xlu0 0
        %1904 = vperm.xlu0 %1903, %v1794
        %v1905 = vpop.permute.xlu0 %1904
        %1908 = vset.pattern.permute.xlu0 0
        %1909 = vperm.xlu0 %1908, %v1795
        %v1910 = vpop.permute.xlu0 %1909
        %1913 = vset.pattern.permute.xlu0 0
        %1914 = vperm.xlu0 %1913, %v1796
        %v1915 = vpop.permute.xlu0 %1914
        %1918 = vset.pattern.permute.xlu0 0
        %1919 = vperm.xlu0 %1918, %v1797
        %v1920 = vpop.permute.xlu0 %1919
        %1923 = vset.pattern.permute.xlu0 0
        %1924 = vperm.xlu0 %1923, %v1798
        %v1925 = vpop.permute.xlu0 %1924
        %1928 = vset.pattern.permute.xlu0 0
        %1929 = vperm.xlu0 %1928, %v1799
        %v1930 = vpop.permute.xlu0 %1929
        %1933 = vset.pattern.permute.xlu0 0
        %1934 = vperm.xlu0 %1933, %v1800
        %v1935 = vpop.permute.xlu0 %1934
        %1938 = vset.pattern.permute.xlu0 0
        %1939 = vperm.xlu0 %1938, %v1801
        %v1940 = vpop.permute.xlu0 %1939
        %1943 = vset.pattern.permute.xlu0 0
        %1944 = vperm.xlu0 %1943, %v1802
        %v1945 = vpop.permute.xlu0 %1944
        %1948 = vset.pattern.permute.xlu0 0
        %1949 = vperm.xlu0 %1948, %v1803
        %v1950 = vpop.permute.xlu0 %1949
        %1953 = vset.pattern.permute.xlu0 0
        %1954 = vperm.xlu0 %1953, %v1804
        %v1955 = vpop.permute.xlu0 %1954
        %1958 = vset.pattern.permute.xlu0 0
        %1959 = vperm.xlu0 %1958, %v1805
        %v1960 = vpop.permute.xlu0 %1959
        %1963 = vset.pattern.permute.xlu0 0
        %1964 = vperm.xlu0 %1963, %v1806
        %v1965 = vpop.permute.xlu0 %1964
        %v2031 = vunpack.c.l.b16 %v1711
        %v2032 = vunpack.c.h.b16 %v1711
        %v2033 = vunpack.c.l.b16 %v1712
        %v2034 = vunpack.c.h.b16 %v1712
        %v2035 = vunpack.c.l.b16 %v1713
        %v2036 = vunpack.c.h.b16 %v1713
        %v2037 = vunpack.c.l.b16 %v1714
        %v2038 = vunpack.c.h.b16 %v1714
        %v2039 = vunpack.c.l.b16 %v1715
        %v2040 = vunpack.c.h.b16 %v1715
        %v2041 = vunpack.c.l.b16 %v1716
        %v2042 = vunpack.c.h.b16 %v1716
        %v2043 = vunpack.c.l.b16 %v1717
        %v2044 = vunpack.c.h.b16 %v1717
        %v2045 = vunpack.c.l.b16 %v1718
        %v2046 = vunpack.c.h.b16 %v1718
        %v2047 = vunpack.c.l.b16 %v1719
        %v2048 = vunpack.c.h.b16 %v1719
        %v2049 = vunpack.c.l.b16 %v1720
        %v2050 = vunpack.c.h.b16 %v1720
        %v2051 = vunpack.c.l.b16 %v1721
        %v2052 = vunpack.c.h.b16 %v1721
        %v2053 = vunpack.c.l.b16 %v1722
        %v2054 = vunpack.c.h.b16 %v1722
        %v2055 = vunpack.c.l.b16 %v1723
        %v2056 = vunpack.c.h.b16 %v1723
        %v2057 = vunpack.c.l.b16 %v1724
        %v2058 = vunpack.c.h.b16 %v1724
        %v2059 = vunpack.c.l.b16 %v1725
        %v2060 = vunpack.c.h.b16 %v1725
        %v2061 = vunpack.c.l.b16 %v1726
        %v2062 = vunpack.c.h.b16 %v1726
        %v2063 = vunpack.c.l.b16 %v1727
        %v2064 = vunpack.c.h.b16 %v1727
        %v2065 = vunpack.c.l.b16 %v1728
        %v2066 = vunpack.c.h.b16 %v1728
        %v2067 = vunpack.c.l.b16 %v1729
        %v2068 = vunpack.c.h.b16 %v1729
        %v2069 = vunpack.c.l.b16 %v1730
        %v2070 = vunpack.c.h.b16 %v1730
        %v2071 = vunpack.c.l.b16 %v1731
        %v2072 = vunpack.c.h.b16 %v1731
        %v2073 = vunpack.c.l.b16 %v1732
        %v2074 = vunpack.c.h.b16 %v1732
        %v2075 = vunpack.c.l.b16 %v1733
        %v2076 = vunpack.c.h.b16 %v1733
        %v2077 = vunpack.c.l.b16 %v1734
        %v2078 = vunpack.c.h.b16 %v1734
        %v2079 = vunpack.c.l.b16 %v1735
        %v2080 = vunpack.c.h.b16 %v1735
        %v2081 = vunpack.c.l.b16 %v1736
        %v2082 = vunpack.c.h.b16 %v1736
        %v2083 = vunpack.c.l.b16 %v1737
        %v2084 = vunpack.c.h.b16 %v1737
        %v2085 = vunpack.c.l.b16 %v1738
        %v2086 = vunpack.c.h.b16 %v1738
        %v2087 = vunpack.c.l.b16 %v1739
        %v2088 = vunpack.c.h.b16 %v1739
        %v2089 = vunpack.c.l.b16 %v1740
        %v2090 = vunpack.c.h.b16 %v1740
        %v2091 = vunpack.c.l.b16 %v1741
        %v2092 = vunpack.c.h.b16 %v1741
        %v2093 = vunpack.c.l.b16 %v1742
        %v2094 = vunpack.c.h.b16 %v1742
        %v2095 = vunpack.c.l.b16 %v1743
        %v2096 = vunpack.c.h.b16 %v1743
        %v2097 = vunpack.c.l.b16 %v1744
        %v2098 = vunpack.c.h.b16 %v1744
        %v2099 = vunpack.c.l.b16 %v1745
        %v2100 = vunpack.c.h.b16 %v1745
        %v2101 = vunpack.c.l.b16 %v1746
        %v2102 = vunpack.c.h.b16 %v1746
        %v2103 = vunpack.c.l.b16 %v1747
        %v2104 = vunpack.c.h.b16 %v1747
        %v2105 = vunpack.c.l.b16 %v1748
        %v2106 = vunpack.c.h.b16 %v1748
        %v2107 = vunpack.c.l.b16 %v1749
        %v2108 = vunpack.c.h.b16 %v1749
        %v2109 = vunpack.c.l.b16 %v1750
        %v2110 = vunpack.c.h.b16 %v1750
        %v2111 = vunpack.c.l.b16 %v1751
        %v2112 = vunpack.c.h.b16 %v1751
        %v2113 = vunpack.c.l.b16 %v1752
        %v2114 = vunpack.c.h.b16 %v1752
        %v2115 = vunpack.c.l.b16 %v1753
        %v2116 = vunpack.c.h.b16 %v1753
        %v2117 = vunpack.c.l.b16 %v1754
        %v2118 = vunpack.c.h.b16 %v1754
        %v2119 = vunpack.c.l.b16 %v1755
        %v2120 = vunpack.c.h.b16 %v1755
        %v2121 = vunpack.c.l.b16 %v1756
        %v2122 = vunpack.c.h.b16 %v1756
        %v2123 = vunpack.c.l.b16 %v1757
        %v2124 = vunpack.c.h.b16 %v1757
        %v2125 = vunpack.c.l.b16 %v1758
        %v2126 = vunpack.c.h.b16 %v1758
        %v2127 = vunpack.c.l.b16 %v1759
        %v2128 = vunpack.c.h.b16 %v1759
        %v2129 = vunpack.c.l.b16 %v1760
        %v2130 = vunpack.c.h.b16 %v1760
        %v2131 = vunpack.c.l.b16 %v1761
        %v2132 = vunpack.c.h.b16 %v1761
        %v2133 = vunpack.c.l.b16 %v1762
        %v2134 = vunpack.c.h.b16 %v1762
        %v2135 = vunpack.c.l.b16 %v1763
        %v2136 = vunpack.c.h.b16 %v1763
        %v2137 = vunpack.c.l.b16 %v1764
        %v2138 = vunpack.c.h.b16 %v1764
        %v2139 = vunpack.c.l.b16 %v1765
        %v2140 = vunpack.c.h.b16 %v1765
        %v2141 = vunpack.c.l.b16 %v1766
        %v2142 = vunpack.c.h.b16 %v1766
        %v2143 = vunpack.c.l.b16 %v1767
        %v2144 = vunpack.c.h.b16 %v1767
        %v2145 = vunpack.c.l.b16 %v1768
        %v2146 = vunpack.c.h.b16 %v1768
        %v2147 = vunpack.c.l.b16 %v1769
        %v2148 = vunpack.c.h.b16 %v1769
        %v2149 = vunpack.c.l.b16 %v1770
        %v2150 = vunpack.c.h.b16 %v1770
        %v2151 = vunpack.c.l.b16 %v1771
        %v2152 = vunpack.c.h.b16 %v1771
        %v2153 = vunpack.c.l.b16 %v1772
        %v2154 = vunpack.c.h.b16 %v1772
        %v2155 = vunpack.c.l.b16 %v1773
        %v2156 = vunpack.c.h.b16 %v1773
        %v2157 = vunpack.c.l.b16 %v1774
        %v2158 = vunpack.c.h.b16 %v1774
        %v2159 = vpack.c.b16 %v2035, %v2031
        %v2160 = vpack.c.b16 %v2036, %v2032
        %v2161 = vpack.c.b16 %v2037, %v2033
        %v2162 = vpack.c.b16 %v2038, %v2034
        %v2163 = vpack.c.b16 %v2043, %v2039
        %v2164 = vpack.c.b16 %v2044, %v2040
        %v2165 = vpack.c.b16 %v2045, %v2041
        %v2166 = vpack.c.b16 %v2046, %v2042
        %v2167 = vpack.c.b16 %v2051, %v2047
        %v2168 = vpack.c.b16 %v2052, %v2048
        %v2169 = vpack.c.b16 %v2053, %v2049
        %v2170 = vpack.c.b16 %v2054, %v2050
        %v2171 = vpack.c.b16 %v2059, %v2055
        %v2172 = vpack.c.b16 %v2060, %v2056
        %v2173 = vpack.c.b16 %v2061, %v2057
        %v2174 = vpack.c.b16 %v2062, %v2058
        %v2175 = vpack.c.b16 %v2067, %v2063
        %v2176 = vpack.c.b16 %v2068, %v2064
        %v2177 = vpack.c.b16 %v2069, %v2065
        %v2178 = vpack.c.b16 %v2070, %v2066
        %v2179 = vpack.c.b16 %v2075, %v2071
        %v2180 = vpack.c.b16 %v2076, %v2072
        %v2181 = vpack.c.b16 %v2077, %v2073
        %v2182 = vpack.c.b16 %v2078, %v2074
        %v2183 = vpack.c.b16 %v2083, %v2079
        %v2184 = vpack.c.b16 %v2084, %v2080
        %v2185 = vpack.c.b16 %v2085, %v2081
        %v2186 = vpack.c.b16 %v2086, %v2082
        %v2187 = vpack.c.b16 %v2091, %v2087
        %v2188 = vpack.c.b16 %v2092, %v2088
        %v2189 = vpack.c.b16 %v2093, %v2089
        %v2190 = vpack.c.b16 %v2094, %v2090
        %v2191 = vpack.c.b16 %v2099, %v2095
        %v2192 = vpack.c.b16 %v2100, %v2096
        %v2193 = vpack.c.b16 %v2101, %v2097
        %v2194 = vpack.c.b16 %v2102, %v2098
        %v2195 = vpack.c.b16 %v2107, %v2103
        %v2196 = vpack.c.b16 %v2108, %v2104
        %v2197 = vpack.c.b16 %v2109, %v2105
        %v2198 = vpack.c.b16 %v2110, %v2106
        %v2199 = vpack.c.b16 %v2115, %v2111
        %v2200 = vpack.c.b16 %v2116, %v2112
        %v2201 = vpack.c.b16 %v2117, %v2113
        %v2202 = vpack.c.b16 %v2118, %v2114
        %v2203 = vpack.c.b16 %v2123, %v2119
        %v2204 = vpack.c.b16 %v2124, %v2120
        %v2205 = vpack.c.b16 %v2125, %v2121
        %v2206 = vpack.c.b16 %v2126, %v2122
        %v2207 = vpack.c.b16 %v2131, %v2127
        %v2208 = vpack.c.b16 %v2132, %v2128
        %v2209 = vpack.c.b16 %v2133, %v2129
        %v2210 = vpack.c.b16 %v2134, %v2130
        %v2211 = vpack.c.b16 %v2139, %v2135
        %v2212 = vpack.c.b16 %v2140, %v2136
        %v2213 = vpack.c.b16 %v2141, %v2137
        %v2214 = vpack.c.b16 %v2142, %v2138
        %v2215 = vpack.c.b16 %v2147, %v2143
        %v2216 = vpack.c.b16 %v2148, %v2144
        %v2217 = vpack.c.b16 %v2149, %v2145
        %v2218 = vpack.c.b16 %v2150, %v2146
        %v2219 = vpack.c.b16 %v2155, %v2151
        %v2220 = vpack.c.b16 %v2156, %v2152
        %v2221 = vpack.c.b16 %v2157, %v2153
        %v2222 = vpack.c.b16 %v2158, %v2154
        %2287 = vmatprep.subr.bf16.mxu0 %v1662
        %2288 = vmatpush1.bf16.msra.mxu0 %v1661
        %2289 = vmatprep.subr.bf16.mxu0 %v1660
        %2290 = vmatpush1.bf16.msra.mxu0 %v1659
        %2291 = vmatprep.subr.bf16.mxu0 %v1658
        %2292 = vmatpush1.bf16.msra.mxu0 %v1657
        %2293 = vmatprep.subr.bf16.mxu0 %v1656
        %2294 = vmatpush1.bf16.msra.mxu0 %v1655
        %2295 = vmatprep.subr.bf16.mxu0 %v1654
        %2296 = vmatpush1.bf16.msra.mxu0 %v1653
        %2297 = vmatprep.subr.bf16.mxu0 %v1652
        %2298 = vmatpush1.bf16.msra.mxu0 %v1651
        %2299 = vmatprep.subr.bf16.mxu0 %v1650
        %2300 = vmatpush1.bf16.msra.mxu0 %v1649
        %2301 = vmatprep.subr.bf16.mxu0 %v1648
        %2302 = vmatpush1.bf16.msra.mxu0 %v1647
        %2303 = vmatprep.subr.bf16.mxu0 %v1678
        %2304 = vmatpush2.bf16.msra.mxu0 %v1677
        %2305 = vmatprep.subr.bf16.mxu0 %v1676
        %2306 = vmatpush2.bf16.msra.mxu0 %v1675
        %2307 = vmatprep.subr.bf16.mxu0 %v1674
        %2308 = vmatpush2.bf16.msra.mxu0 %v1673
        %2309 = vmatprep.subr.bf16.mxu0 %v1672
        %2310 = vmatpush2.bf16.msra.mxu0 %v1671
        %2311 = vmatprep.subr.bf16.mxu0 %v1670
        %2312 = vmatpush2.bf16.msra.mxu0 %v1669
        %2313 = vmatprep.subr.bf16.mxu0 %v1668
        %2314 = vmatpush2.bf16.msra.mxu0 %v1667
        %2315 = vmatprep.subr.bf16.mxu0 %v1666
        %2316 = vmatpush2.bf16.msra.mxu0 %v1665
        %2317 = vmatprep.subr.bf16.mxu0 %v1664
        %2318 = vmatpush2.bf16.msra.mxu0 %v1663
        %2319 = vmatprep.mubr.bf16.mxu0 %v2160
        %2320 = vmatmul.mubr.bf16.gmra.mxu0 %v2159
        %v2321 = vpop.f32.mrf.mxu0
        %v2322 = vadd.f32 %v1810, %v2321
        %v2323 = vpop.f32.mrf.mxu0
        %v2324 = vadd.f32 %v1810, %v2323
        %v2325 = vpop.f32.mrf.mxu0
        %v2326 = vadd.f32 %v1815, %v2325
        %v2327 = vpop.f32.mrf.mxu0
        %v2328 = vadd.f32 %v1815, %v2327
        %2329 = vmatprep.mubr.bf16.mxu0 %v2164
        %2330 = vmatmul.mubr.bf16.gmra.mxu0 %v2163
        %v2331 = vpop.f32.mrf.mxu0
        %v2332 = vadd.f32 %v1820, %v2331
        %v2333 = vpop.f32.mrf.mxu0
        %v2334 = vadd.f32 %v1820, %v2333
        %v2335 = vpop.f32.mrf.mxu0
        %v2336 = vadd.f32 %v1825, %v2335
        %v2337 = vpop.f32.mrf.mxu0
        %v2338 = vadd.f32 %v1825, %v2337
        %2339 = vmatprep.mubr.bf16.mxu0 %v2168
        %2340 = vmatmul.mubr.bf16.gmra.mxu0 %v2167
        %v2341 = vpop.f32.mrf.mxu0
        %v2342 = vadd.f32 %v1830, %v2341
        %v2343 = vpop.f32.mrf.mxu0
        %v2344 = vadd.f32 %v1830, %v2343
        %v2345 = vpop.f32.mrf.mxu0
        %v2346 = vadd.f32 %v1835, %v2345
        %v2347 = vpop.f32.mrf.mxu0
        %v2348 = vadd.f32 %v1835, %v2347
        %2349 = vmatprep.mubr.bf16.mxu0 %v2172
        %2350 = vmatmul.mubr.bf16.gmra.mxu0 %v2171
        %v2351 = vpop.f32.mrf.mxu0
        %v2352 = vadd.f32 %v1840, %v2351
        %v2353 = vpop.f32.mrf.mxu0
        %v2354 = vadd.f32 %v1840, %v2353
        %v2355 = vpop.f32.mrf.mxu0
        %v2356 = vadd.f32 %v1845, %v2355
        %v2357 = vpop.f32.mrf.mxu0
        %v2358 = vadd.f32 %v1845, %v2357
        %2359 = vmatprep.mubr.bf16.mxu0 %v2176
        %2360 = vmatmul.mubr.bf16.gmra.mxu0 %v2175
        %v2361 = vpop.f32.mrf.mxu0
        %v2362 = vadd.f32 %v1850, %v2361
        %v2363 = vpop.f32.mrf.mxu0
        %v2364 = vadd.f32 %v1850, %v2363
        %v2365 = vpop.f32.mrf.mxu0
        %v2366 = vadd.f32 %v1855, %v2365
        %v2367 = vpop.f32.mrf.mxu0
        %v2368 = vadd.f32 %v1855, %v2367
        %2369 = vmatprep.mubr.bf16.mxu0 %v2180
        %2370 = vmatmul.mubr.bf16.gmra.mxu0 %v2179
        %v2371 = vpop.f32.mrf.mxu0
        %v2372 = vadd.f32 %v1860, %v2371
        %v2373 = vpop.f32.mrf.mxu0
        %v2374 = vadd.f32 %v1860, %v2373
        %v2375 = vpop.f32.mrf.mxu0
        %v2376 = vadd.f32 %v1865, %v2375
        %v2377 = vpop.f32.mrf.mxu0
        %v2378 = vadd.f32 %v1865, %v2377
        %2379 = vmatprep.mubr.bf16.mxu0 %v2184
        %2380 = vmatmul.mubr.bf16.gmra.mxu0 %v2183
        %v2381 = vpop.f32.mrf.mxu0
        %v2382 = vadd.f32 %v1870, %v2381
        %v2383 = vpop.f32.mrf.mxu0
        %v2384 = vadd.f32 %v1870, %v2383
        %v2385 = vpop.f32.mrf.mxu0
        %v2386 = vadd.f32 %v1875, %v2385
        %v2387 = vpop.f32.mrf.mxu0
        %v2388 = vadd.f32 %v1875, %v2387
        %2389 = vmatprep.mubr.bf16.mxu0 %v2188
        %2390 = vmatmul.mubr.bf16.gmra.mxu0 %v2187
        %v2391 = vpop.f32.mrf.mxu0
        %v2392 = vadd.f32 %v1880, %v2391
        %v2393 = vpop.f32.mrf.mxu0
        %v2394 = vadd.f32 %v1880, %v2393
        %v2395 = vpop.f32.mrf.mxu0
        %v2396 = vadd.f32 %v1885, %v2395
        %v2397 = vpop.f32.mrf.mxu0
        %v2398 = vadd.f32 %v1885, %v2397
        %2399 = vmatprep.mubr.bf16.mxu0 %v2192
        %2400 = vmatmul.mubr.bf16.gmra.mxu0 %v2191
        %v2401 = vpop.f32.mrf.mxu0
        %v2402 = vadd.f32 %v1890, %v2401
        %v2403 = vpop.f32.mrf.mxu0
        %v2404 = vadd.f32 %v1890, %v2403
        %v2405 = vpop.f32.mrf.mxu0
        %v2406 = vadd.f32 %v1895, %v2405
        %v2407 = vpop.f32.mrf.mxu0
        %v2408 = vadd.f32 %v1895, %v2407
        %2409 = vmatprep.mubr.bf16.mxu0 %v2196
        %2410 = vmatmul.mubr.bf16.gmra.mxu0 %v2195
        %v2411 = vpop.f32.mrf.mxu0
        %v2412 = vadd.f32 %v1900, %v2411
        %v2413 = vpop.f32.mrf.mxu0
        %v2414 = vadd.f32 %v1900, %v2413
        %v2415 = vpop.f32.mrf.mxu0
        %v2416 = vadd.f32 %v1905, %v2415
        %v2417 = vpop.f32.mrf.mxu0
        %v2418 = vadd.f32 %v1905, %v2417
        %2419 = vmatprep.mubr.bf16.mxu0 %v2200
        %2420 = vmatmul.mubr.bf16.gmra.mxu0 %v2199
        %v2421 = vpop.f32.mrf.mxu0
        %v2422 = vadd.f32 %v1910, %v2421
        %v2423 = vpop.f32.mrf.mxu0
        %v2424 = vadd.f32 %v1910, %v2423
        %v2425 = vpop.f32.mrf.mxu0
        %v2426 = vadd.f32 %v1915, %v2425
        %v2427 = vpop.f32.mrf.mxu0
        %v2428 = vadd.f32 %v1915, %v2427
        %2429 = vmatprep.mubr.bf16.mxu0 %v2204
        %2430 = vmatmul.mubr.bf16.gmra.mxu0 %v2203
        %v2431 = vpop.f32.mrf.mxu0
        %v2432 = vadd.f32 %v1920, %v2431
        %v2433 = vpop.f32.mrf.mxu0
        %v2434 = vadd.f32 %v1920, %v2433
        %v2435 = vpop.f32.mrf.mxu0
        %v2436 = vadd.f32 %v1925, %v2435
        %v2437 = vpop.f32.mrf.mxu0
        %v2438 = vadd.f32 %v1925, %v2437
        %2439 = vmatprep.mubr.bf16.mxu0 %v2208
        %2440 = vmatmul.mubr.bf16.gmra.mxu0 %v2207
        %v2441 = vpop.f32.mrf.mxu0
        %v2442 = vadd.f32 %v1930, %v2441
        %v2443 = vpop.f32.mrf.mxu0
        %v2444 = vadd.f32 %v1930, %v2443
        %v2445 = vpop.f32.mrf.mxu0
        %v2446 = vadd.f32 %v1935, %v2445
        %v2447 = vpop.f32.mrf.mxu0
        %v2448 = vadd.f32 %v1935, %v2447
        %2449 = vmatprep.mubr.bf16.mxu0 %v2212
        %2450 = vmatmul.mubr.bf16.gmra.mxu0 %v2211
        %v2451 = vpop.f32.mrf.mxu0
        %v2452 = vadd.f32 %v1940, %v2451
        %v2453 = vpop.f32.mrf.mxu0
        %v2454 = vadd.f32 %v1940, %v2453
        %v2455 = vpop.f32.mrf.mxu0
        %v2456 = vadd.f32 %v1945, %v2455
        %v2457 = vpop.f32.mrf.mxu0
        %v2458 = vadd.f32 %v1945, %v2457
        %2459 = vmatprep.mubr.bf16.mxu0 %v2216
        %2460 = vmatmul.mubr.bf16.gmra.mxu0 %v2215
        %v2461 = vpop.f32.mrf.mxu0
        %v2462 = vadd.f32 %v1950, %v2461
        %v2463 = vpop.f32.mrf.mxu0
        %v2464 = vadd.f32 %v1950, %v2463
        %v2465 = vpop.f32.mrf.mxu0
        %v2466 = vadd.f32 %v1955, %v2465
        %v2467 = vpop.f32.mrf.mxu0
        %v2468 = vadd.f32 %v1955, %v2467
        %2469 = vmatprep.mubr.bf16.mxu0 %v2220
        %2470 = vmatmul.mubr.bf16.gmra.mxu0 %v2219
        %v2471 = vpop.f32.mrf.mxu0
        %v2472 = vadd.f32 %v1960, %v2471
        %v2473 = vpop.f32.mrf.mxu0
        %v2474 = vadd.f32 %v1960, %v2473
        %v2475 = vpop.f32.mrf.mxu0
        %v2476 = vadd.f32 %v1965, %v2475
        %v2477 = vpop.f32.mrf.mxu0
        %v2478 = vadd.f32 %v1965, %v2477
        %2479 = vdwg.mxu0
        %2480 = vmatprep.subr.bf16.mxu0 %v1694
        %2481 = vmatpush1.bf16.msra.mxu0 %v1693
        %2482 = vmatprep.subr.bf16.mxu0 %v1692
        %2483 = vmatpush1.bf16.msra.mxu0 %v1691
        %2484 = vmatprep.subr.bf16.mxu0 %v1690
        %2485 = vmatpush1.bf16.msra.mxu0 %v1689
        %2486 = vmatprep.subr.bf16.mxu0 %v1688
        %2487 = vmatpush1.bf16.msra.mxu0 %v1687
        %2488 = vmatprep.subr.bf16.mxu0 %v1686
        %2489 = vmatpush1.bf16.msra.mxu0 %v1685
        %2490 = vmatprep.subr.bf16.mxu0 %v1684
        %2491 = vmatpush1.bf16.msra.mxu0 %v1683
        %2492 = vmatprep.subr.bf16.mxu0 %v1682
        %2493 = vmatpush1.bf16.msra.mxu0 %v1681
        %2494 = vmatprep.subr.bf16.mxu0 %v1680
        %2495 = vmatpush1.bf16.msra.mxu0 %v1679
        %2496 = vmatprep.subr.bf16.mxu0 %v1710
        %2497 = vmatpush2.bf16.msra.mxu0 %v1709
        %2498 = vmatprep.subr.bf16.mxu0 %v1708
        %2499 = vmatpush2.bf16.msra.mxu0 %v1707
        %2500 = vmatprep.subr.bf16.mxu0 %v1706
        %2501 = vmatpush2.bf16.msra.mxu0 %v1705
        %2502 = vmatprep.subr.bf16.mxu0 %v1704
        %2503 = vmatpush2.bf16.msra.mxu0 %v1703
        %2504 = vmatprep.subr.bf16.mxu0 %v1702
        %2505 = vmatpush2.bf16.msra.mxu0 %v1701
        %2506 = vmatprep.subr.bf16.mxu0 %v1700
        %2507 = vmatpush2.bf16.msra.mxu0 %v1699
        %2508 = vmatprep.subr.bf16.mxu0 %v1698
        %2509 = vmatpush2.bf16.msra.mxu0 %v1697
        %2510 = vmatprep.subr.bf16.mxu0 %v1696
        %2511 = vmatpush2.bf16.msra.mxu0 %v1695
        %2512 = vmatprep.mubr.bf16.mxu0 %v2162
        %2513 = vmatmul.mubr.bf16.gmra.mxu0 %v2161
        %v2514 = vpop.f32.mrf.mxu0
        %v2515 = vadd.f32 %v2322, %v2514
        %v2516 = vpop.f32.mrf.mxu0
        %v2517 = vadd.f32 %v2324, %v2516
        %v2518 = vpop.f32.mrf.mxu0
        %v2519 = vadd.f32 %v2326, %v2518
        %v2520 = vpop.f32.mrf.mxu0
        %v2521 = vadd.f32 %v2328, %v2520
        %2522 = vmatprep.mubr.bf16.mxu0 %v2166
        %2523 = vmatmul.mubr.bf16.gmra.mxu0 %v2165
        %v2524 = vpop.f32.mrf.mxu0
        %v2525 = vadd.f32 %v2332, %v2524
        %v2526 = vpop.f32.mrf.mxu0
        %v2527 = vadd.f32 %v2334, %v2526
        %v2528 = vpop.f32.mrf.mxu0
        %v2529 = vadd.f32 %v2336, %v2528
        %v2530 = vpop.f32.mrf.mxu0
        %v2531 = vadd.f32 %v2338, %v2530
        %2532 = vmatprep.mubr.bf16.mxu0 %v2170
        %2533 = vmatmul.mubr.bf16.gmra.mxu0 %v2169
        %v2534 = vpop.f32.mrf.mxu0
        %v2535 = vadd.f32 %v2342, %v2534
        %v2536 = vpop.f32.mrf.mxu0
        %v2537 = vadd.f32 %v2344, %v2536
        %v2538 = vpop.f32.mrf.mxu0
        %v2539 = vadd.f32 %v2346, %v2538
        %v2540 = vpop.f32.mrf.mxu0
        %v2541 = vadd.f32 %v2348, %v2540
        %2542 = vmatprep.mubr.bf16.mxu0 %v2174
        %2543 = vmatmul.mubr.bf16.gmra.mxu0 %v2173
        %v2544 = vpop.f32.mrf.mxu0
        %v2545 = vadd.f32 %v2352, %v2544
        %v2546 = vpop.f32.mrf.mxu0
        %v2547 = vadd.f32 %v2354, %v2546
        %v2548 = vpop.f32.mrf.mxu0
        %v2549 = vadd.f32 %v2356, %v2548
        %v2550 = vpop.f32.mrf.mxu0
        %v2551 = vadd.f32 %v2358, %v2550
        %2552 = vmatprep.mubr.bf16.mxu0 %v2178
        %2553 = vmatmul.mubr.bf16.gmra.mxu0 %v2177
        %v2554 = vpop.f32.mrf.mxu0
        %v2555 = vadd.f32 %v2362, %v2554
        %v2556 = vpop.f32.mrf.mxu0
        %v2557 = vadd.f32 %v2364, %v2556
        %v2558 = vpop.f32.mrf.mxu0
        %v2559 = vadd.f32 %v2366, %v2558
        %v2560 = vpop.f32.mrf.mxu0
        %v2561 = vadd.f32 %v2368, %v2560
        %2562 = vmatprep.mubr.bf16.mxu0 %v2182
        %2563 = vmatmul.mubr.bf16.gmra.mxu0 %v2181
        %v2564 = vpop.f32.mrf.mxu0
        %v2565 = vadd.f32 %v2372, %v2564
        %v2566 = vpop.f32.mrf.mxu0
        %v2567 = vadd.f32 %v2374, %v2566
        %v2568 = vpop.f32.mrf.mxu0
        %v2569 = vadd.f32 %v2376, %v2568
        %v2570 = vpop.f32.mrf.mxu0
        %v2571 = vadd.f32 %v2378, %v2570
        %2572 = vmatprep.mubr.bf16.mxu0 %v2186
        %2573 = vmatmul.mubr.bf16.gmra.mxu0 %v2185
        %v2574 = vpop.f32.mrf.mxu0
        %v2575 = vadd.f32 %v2382, %v2574
        %v2576 = vpop.f32.mrf.mxu0
        %v2577 = vadd.f32 %v2384, %v2576
        %v2578 = vpop.f32.mrf.mxu0
        %v2579 = vadd.f32 %v2386, %v2578
        %v2580 = vpop.f32.mrf.mxu0
        %v2581 = vadd.f32 %v2388, %v2580
        %2582 = vmatprep.mubr.bf16.mxu0 %v2190
        %2583 = vmatmul.mubr.bf16.gmra.mxu0 %v2189
        %v2584 = vpop.f32.mrf.mxu0
        %v2585 = vadd.f32 %v2392, %v2584
        %v2586 = vpop.f32.mrf.mxu0
        %v2587 = vadd.f32 %v2394, %v2586
        %v2588 = vpop.f32.mrf.mxu0
        %v2589 = vadd.f32 %v2396, %v2588
        %v2590 = vpop.f32.mrf.mxu0
        %v2591 = vadd.f32 %v2398, %v2590
        %2592 = vmatprep.mubr.bf16.mxu0 %v2194
        %2593 = vmatmul.mubr.bf16.gmra.mxu0 %v2193
        %v2594 = vpop.f32.mrf.mxu0
        %v2595 = vadd.f32 %v2402, %v2594
        %v2596 = vpop.f32.mrf.mxu0
        %v2597 = vadd.f32 %v2404, %v2596
        %v2598 = vpop.f32.mrf.mxu0
        %v2599 = vadd.f32 %v2406, %v2598
        %v2600 = vpop.f32.mrf.mxu0
        %v2601 = vadd.f32 %v2408, %v2600
        %2602 = vmatprep.mubr.bf16.mxu0 %v2198
        %2603 = vmatmul.mubr.bf16.gmra.mxu0 %v2197
        %v2604 = vpop.f32.mrf.mxu0
        %v2605 = vadd.f32 %v2412, %v2604
        %v2606 = vpop.f32.mrf.mxu0
        %v2607 = vadd.f32 %v2414, %v2606
        %v2608 = vpop.f32.mrf.mxu0
        %v2609 = vadd.f32 %v2416, %v2608
        %v2610 = vpop.f32.mrf.mxu0
        %v2611 = vadd.f32 %v2418, %v2610
        %2612 = vmatprep.mubr.bf16.mxu0 %v2202
        %2613 = vmatmul.mubr.bf16.gmra.mxu0 %v2201
        %v2614 = vpop.f32.mrf.mxu0
        %v2615 = vadd.f32 %v2422, %v2614
        %v2616 = vpop.f32.mrf.mxu0
        %v2617 = vadd.f32 %v2424, %v2616
        %v2618 = vpop.f32.mrf.mxu0
        %v2619 = vadd.f32 %v2426, %v2618
        %v2620 = vpop.f32.mrf.mxu0
        %v2621 = vadd.f32 %v2428, %v2620
        %2622 = vmatprep.mubr.bf16.mxu0 %v2206
        %2623 = vmatmul.mubr.bf16.gmra.mxu0 %v2205
        %v2624 = vpop.f32.mrf.mxu0
        %v2625 = vadd.f32 %v2432, %v2624
        %v2626 = vpop.f32.mrf.mxu0
        %v2627 = vadd.f32 %v2434, %v2626
        %v2628 = vpop.f32.mrf.mxu0
        %v2629 = vadd.f32 %v2436, %v2628
        %v2630 = vpop.f32.mrf.mxu0
        %v2631 = vadd.f32 %v2438, %v2630
        %2632 = vmatprep.mubr.bf16.mxu0 %v2210
        %2633 = vmatmul.mubr.bf16.gmra.mxu0 %v2209
        %v2634 = vpop.f32.mrf.mxu0
        %v2635 = vadd.f32 %v2442, %v2634
        %v2636 = vpop.f32.mrf.mxu0
        %v2637 = vadd.f32 %v2444, %v2636
        %v2638 = vpop.f32.mrf.mxu0
        %v2639 = vadd.f32 %v2446, %v2638
        %v2640 = vpop.f32.mrf.mxu0
        %v2641 = vadd.f32 %v2448, %v2640
        %2642 = vmatprep.mubr.bf16.mxu0 %v2214
        %2643 = vmatmul.mubr.bf16.gmra.mxu0 %v2213
        %v2644 = vpop.f32.mrf.mxu0
        %v2645 = vadd.f32 %v2452, %v2644
        %v2646 = vpop.f32.mrf.mxu0
        %v2647 = vadd.f32 %v2454, %v2646
        %v2648 = vpop.f32.mrf.mxu0
        %v2649 = vadd.f32 %v2456, %v2648
        %v2650 = vpop.f32.mrf.mxu0
        %v2651 = vadd.f32 %v2458, %v2650
        %2652 = vmatprep.mubr.bf16.mxu0 %v2218
        %2653 = vmatmul.mubr.bf16.gmra.mxu0 %v2217
        %v2654 = vpop.f32.mrf.mxu0
        %v2655 = vadd.f32 %v2462, %v2654
        %v2656 = vpop.f32.mrf.mxu0
        %v2657 = vadd.f32 %v2464, %v2656
        %v2658 = vpop.f32.mrf.mxu0
        %v2659 = vadd.f32 %v2466, %v2658
        %v2660 = vpop.f32.mrf.mxu0
        %v2661 = vadd.f32 %v2468, %v2660
        %2662 = vmatprep.mubr.bf16.mxu0 %v2222
        %2663 = vmatmul.mubr.bf16.gmra.mxu0 %v2221
        %v2664 = vpop.f32.mrf.mxu0
        %v2665 = vadd.f32 %v2472, %v2664
        %v2666 = vpop.f32.mrf.mxu0
        %v2667 = vadd.f32 %v2474, %v2666
        %v2668 = vpop.f32.mrf.mxu0
        %v2669 = vadd.f32 %v2476, %v2668
        %v2670 = vpop.f32.mrf.mxu0
        %v2671 = vadd.f32 %v2478, %v2670
        %2672 = vdwg.mxu0
        %v2673 = vmax.f32 %v2515, 0.0
        %v2674 = vmax.f32 %v2517, 0.0
        %v2675 = vmax.f32 %v2519, 0.0
        %v2676 = vmax.f32 %v2521, 0.0
        %v2677 = vmax.f32 %v2525, 0.0
        %v2678 = vmax.f32 %v2527, 0.0
        %v2679 = vmax.f32 %v2529, 0.0
        %v2680 = vmax.f32 %v2531, 0.0
        %v2681 = vmax.f32 %v2535, 0.0
        %v2682 = vmax.f32 %v2537, 0.0
        %v2683 = vmax.f32 %v2539, 0.0
        %v2684 = vmax.f32 %v2541, 0.0
        %v2685 = vmax.f32 %v2545, 0.0
        %v2686 = vmax.f32 %v2547, 0.0
        %v2687 = vmax.f32 %v2549, 0.0
        %v2688 = vmax.f32 %v2551, 0.0
        %v2689 = vmax.f32 %v2555, 0.0
        %v2690 = vmax.f32 %v2557, 0.0
        %v2691 = vmax.f32 %v2559, 0.0
        %v2692 = vmax.f32 %v2561, 0.0
        %v2693 = vmax.f32 %v2565, 0.0
        %v2694 = vmax.f32 %v2567, 0.0
        %v2695 = vmax.f32 %v2569, 0.0
        %v2696 = vmax.f32 %v2571, 0.0
        %v2697 = vmax.f32 %v2575, 0.0
        %v2698 = vmax.f32 %v2577, 0.0
        %v2699 = vmax.f32 %v2579, 0.0
        %v2700 = vmax.f32 %v2581, 0.0
        %v2701 = vmax.f32 %v2585, 0.0
        %v2702 = vmax.f32 %v2587, 0.0
        %v2703 = vmax.f32 %v2589, 0.0
        %v2704 = vmax.f32 %v2591, 0.0
        %v2705 = vmax.f32 %v2595, 0.0
        %v2706 = vmax.f32 %v2597, 0.0
        %v2707 = vmax.f32 %v2599, 0.0
        %v2708 = vmax.f32 %v2601, 0.0
        %v2709 = vmax.f32 %v2605, 0.0
        %v2710 = vmax.f32 %v2607, 0.0
        %v2711 = vmax.f32 %v2609, 0.0
        %v2712 = vmax.f32 %v2611, 0.0
        %v2713 = vmax.f32 %v2615, 0.0
        %v2714 = vmax.f32 %v2617, 0.0
        %v2715 = vmax.f32 %v2619, 0.0
        %v2716 = vmax.f32 %v2621, 0.0
        %v2717 = vmax.f32 %v2625, 0.0
        %v2718 = vmax.f32 %v2627, 0.0
        %v2719 = vmax.f32 %v2629, 0.0
        %v2720 = vmax.f32 %v2631, 0.0
        %v2721 = vmax.f32 %v2635, 0.0
        %v2722 = vmax.f32 %v2637, 0.0
        %v2723 = vmax.f32 %v2639, 0.0
        %v2724 = vmax.f32 %v2641, 0.0
        %v2725 = vmax.f32 %v2645, 0.0
        %v2726 = vmax.f32 %v2647, 0.0
        %v2727 = vmax.f32 %v2649, 0.0
        %v2728 = vmax.f32 %v2651, 0.0
        %v2729 = vmax.f32 %v2655, 0.0
        %v2730 = vmax.f32 %v2657, 0.0
        %v2731 = vmax.f32 %v2659, 0.0
        %v2732 = vmax.f32 %v2661, 0.0
        %v2733 = vmax.f32 %v2665, 0.0
        %v2734 = vmax.f32 %v2667, 0.0
        %v2735 = vmax.f32 %v2669, 0.0
        %v2736 = vmax.f32 %v2671, 0.0
        %v2737 = vpack.c.bf16 %v2675, %v2673
        %v2738 = vpack.c.bf16 %v2676, %v2674
        %v2739 = vpack.c.bf16 %v2679, %v2677
        %v2740 = vpack.c.bf16 %v2680, %v2678
        %v2741 = vpack.c.bf16 %v2683, %v2681
        %v2742 = vpack.c.bf16 %v2684, %v2682
        %v2743 = vpack.c.bf16 %v2687, %v2685
        %v2744 = vpack.c.bf16 %v2688, %v2686
        %v2745 = vpack.c.bf16 %v2691, %v2689
        %v2746 = vpack.c.bf16 %v2692, %v2690
        %v2747 = vpack.c.bf16 %v2695, %v2693
        %v2748 = vpack.c.bf16 %v2696, %v2694
        %v2749 = vpack.c.bf16 %v2699, %v2697
        %v2750 = vpack.c.bf16 %v2700, %v2698
        %v2751 = vpack.c.bf16 %v2703, %v2701
        %v2752 = vpack.c.bf16 %v2704, %v2702
        %v2753 = vpack.c.bf16 %v2707, %v2705
        %v2754 = vpack.c.bf16 %v2708, %v2706
        %v2755 = vpack.c.bf16 %v2711, %v2709
        %v2756 = vpack.c.bf16 %v2712, %v2710
        %v2757 = vpack.c.bf16 %v2715, %v2713
        %v2758 = vpack.c.bf16 %v2716, %v2714
        %v2759 = vpack.c.bf16 %v2719, %v2717
        %v2760 = vpack.c.bf16 %v2720, %v2718
        %v2761 = vpack.c.bf16 %v2723, %v2721
        %v2762 = vpack.c.bf16 %v2724, %v2722
        %v2763 = vpack.c.bf16 %v2727, %v2725
        %v2764 = vpack.c.bf16 %v2728, %v2726
        %v2765 = vpack.c.bf16 %v2731, %v2729
        %v2766 = vpack.c.bf16 %v2732, %v2730
        %v2767 = vpack.c.bf16 %v2735, %v2733
        %v2768 = vpack.c.bf16 %v2736, %v2734
        %v2769 = vld [vmem:[%s5] sm:$0xff]
        %v2770 = vld [vmem:[%s5 + $0x8] sm:$0xff]
        %v2771 = vld [vmem:[%s5 + $0x10] sm:$0xff]
        %v2772 = vld [vmem:[%s5 + $0x18] sm:$0xff]
        %v2773 = vld [vmem:[%s5 + $0x20] sm:$0xff]
        %v2774 = vld [vmem:[%s5 + $0x28] sm:$0xff]
        %v2775 = vld [vmem:[%s5 + $0x30] sm:$0xff]
        %v2776 = vld [vmem:[%s5 + $0x38] sm:$0xff]
        %v2777 = vld [vmem:[%s5 + $0x40] sm:$0xff]
        %v2778 = vld [vmem:[%s5 + $0x48] sm:$0xff]
        %v2779 = vld [vmem:[%s5 + $0x50] sm:$0xff]
        %v2780 = vld [vmem:[%s5 + $0x58] sm:$0xff]
        %v2781 = vld [vmem:[%s5 + $0x60] sm:$0xff]
        %v2782 = vld [vmem:[%s5 + $0x68] sm:$0xff]
        %v2783 = vld [vmem:[%s5 + $0x70] sm:$0xff]
        %v2784 = vld [vmem:[%s5 + $0x78] sm:$0xff]
        %v2785 = vld [vmem:[%s6] sm:$0xff]
        %v2786 = vld [vmem:[%s6 + $0x8] sm:$0xff]
        %v2787 = vld [vmem:[%s6 + $0x10] sm:$0xff]
        %v2788 = vld [vmem:[%s6 + $0x18] sm:$0xff]
        %v2789 = vld [vmem:[%s6 + $0x20] sm:$0xff]
        %v2790 = vld [vmem:[%s6 + $0x28] sm:$0xff]
        %v2791 = vld [vmem:[%s6 + $0x30] sm:$0xff]
        %v2792 = vld [vmem:[%s6 + $0x38] sm:$0xff]
        %v2793 = vld [vmem:[%s6 + $0x40] sm:$0xff]
        %v2794 = vld [vmem:[%s6 + $0x48] sm:$0xff]
        %v2795 = vld [vmem:[%s6 + $0x50] sm:$0xff]
        %v2796 = vld [vmem:[%s6 + $0x58] sm:$0xff]
        %v2797 = vld [vmem:[%s6 + $0x60] sm:$0xff]
        %v2798 = vld [vmem:[%s6 + $0x68] sm:$0xff]
        %v2799 = vld [vmem:[%s6 + $0x70] sm:$0xff]
        %v2800 = vld [vmem:[%s6 + $0x78] sm:$0xff]
        %2802 = vset.pattern.permute.xlu0 0
        %2803 = vperm.xlu0 %2802, %v2785
        %v2804 = vpop.permute.xlu0 %2803
        %2807 = vset.pattern.permute.xlu0 0
        %2808 = vperm.xlu0 %2807, %v2786
        %v2809 = vpop.permute.xlu0 %2808
        %2812 = vset.pattern.permute.xlu0 0
        %2813 = vperm.xlu0 %2812, %v2787
        %v2814 = vpop.permute.xlu0 %2813
        %2817 = vset.pattern.permute.xlu0 0
        %2818 = vperm.xlu0 %2817, %v2788
        %v2819 = vpop.permute.xlu0 %2818
        %2822 = vset.pattern.permute.xlu0 0
        %2823 = vperm.xlu0 %2822, %v2789
        %v2824 = vpop.permute.xlu0 %2823
        %2827 = vset.pattern.permute.xlu0 0
        %2828 = vperm.xlu0 %2827, %v2790
        %v2829 = vpop.permute.xlu0 %2828
        %2832 = vset.pattern.permute.xlu0 0
        %2833 = vperm.xlu0 %2832, %v2791
        %v2834 = vpop.permute.xlu0 %2833
        %2837 = vset.pattern.permute.xlu0 0
        %2838 = vperm.xlu0 %2837, %v2792
        %v2839 = vpop.permute.xlu0 %2838
        %2842 = vset.pattern.permute.xlu0 0
        %2843 = vperm.xlu0 %2842, %v2793
        %v2844 = vpop.permute.xlu0 %2843
        %2847 = vset.pattern.permute.xlu0 0
        %2848 = vperm.xlu0 %2847, %v2794
        %v2849 = vpop.permute.xlu0 %2848
        %2852 = vset.pattern.permute.xlu0 0
        %2853 = vperm.xlu0 %2852, %v2795
        %v2854 = vpop.permute.xlu0 %2853
        %2857 = vset.pattern.permute.xlu0 0
        %2858 = vperm.xlu0 %2857, %v2796
        %v2859 = vpop.permute.xlu0 %2858
        %2862 = vset.pattern.permute.xlu0 0
        %2863 = vperm.xlu0 %2862, %v2797
        %v2864 = vpop.permute.xlu0 %2863
        %2867 = vset.pattern.permute.xlu0 0
        %2868 = vperm.xlu0 %2867, %v2798
        %v2869 = vpop.permute.xlu0 %2868
        %2872 = vset.pattern.permute.xlu0 0
        %2873 = vperm.xlu0 %2872, %v2799
        %v2874 = vpop.permute.xlu0 %2873
        %2877 = vset.pattern.permute.xlu0 0
        %2878 = vperm.xlu0 %2877, %v2800
        %v2879 = vpop.permute.xlu0 %2878
        %v2897 = vunpack.c.l.b16 %v2769
        %v2898 = vunpack.c.h.b16 %v2769
        %v2899 = vunpack.c.l.b16 %v2770
        %v2900 = vunpack.c.h.b16 %v2770
        %v2901 = vunpack.c.l.b16 %v2771
        %v2902 = vunpack.c.h.b16 %v2771
        %v2903 = vunpack.c.l.b16 %v2772
        %v2904 = vunpack.c.h.b16 %v2772
        %v2905 = vunpack.c.l.b16 %v2773
        %v2906 = vunpack.c.h.b16 %v2773
        %v2907 = vunpack.c.l.b16 %v2774
        %v2908 = vunpack.c.h.b16 %v2774
        %v2909 = vunpack.c.l.b16 %v2775
        %v2910 = vunpack.c.h.b16 %v2775
        %v2911 = vunpack.c.l.b16 %v2776
        %v2912 = vunpack.c.h.b16 %v2776
        %v2913 = vunpack.c.l.b16 %v2777
        %v2914 = vunpack.c.h.b16 %v2777
        %v2915 = vunpack.c.l.b16 %v2778
        %v2916 = vunpack.c.h.b16 %v2778
        %v2917 = vunpack.c.l.b16 %v2779
        %v2918 = vunpack.c.h.b16 %v2779
        %v2919 = vunpack.c.l.b16 %v2780
        %v2920 = vunpack.c.h.b16 %v2780
        %v2921 = vunpack.c.l.b16 %v2781
        %v2922 = vunpack.c.h.b16 %v2781
        %v2923 = vunpack.c.l.b16 %v2782
        %v2924 = vunpack.c.h.b16 %v2782
        %v2925 = vunpack.c.l.b16 %v2783
        %v2926 = vunpack.c.h.b16 %v2783
        %v2927 = vunpack.c.l.b16 %v2784
        %v2928 = vunpack.c.h.b16 %v2784
        %v2929 = vpack.c.b16 %v2899, %v2897
        %v2930 = vpack.c.b16 %v2900, %v2898
        %v2931 = vpack.c.b16 %v2903, %v2901
        %v2932 = vpack.c.b16 %v2904, %v2902
        %v2933 = vpack.c.b16 %v2907, %v2905
        %v2934 = vpack.c.b16 %v2908, %v2906
        %v2935 = vpack.c.b16 %v2911, %v2909
        %v2936 = vpack.c.b16 %v2912, %v2910
        %v2937 = vpack.c.b16 %v2915, %v2913
        %v2938 = vpack.c.b16 %v2916, %v2914
        %v2939 = vpack.c.b16 %v2919, %v2917
        %v2940 = vpack.c.b16 %v2920, %v2918
        %v2941 = vpack.c.b16 %v2923, %v2921
        %v2942 = vpack.c.b16 %v2924, %v2922
        %v2943 = vpack.c.b16 %v2927, %v2925
        %v2944 = vpack.c.b16 %v2928, %v2926
        %2961 = vmatprep.subr.bf16.mxu0 %v2752
        %2962 = vmatpush1.bf16.msra.mxu0 %v2751
        %2963 = vmatprep.subr.bf16.mxu0 %v2750
        %2964 = vmatpush1.bf16.msra.mxu0 %v2749
        %2965 = vmatprep.subr.bf16.mxu0 %v2748
        %2966 = vmatpush1.bf16.msra.mxu0 %v2747
        %2967 = vmatprep.subr.bf16.mxu0 %v2746
        %2968 = vmatpush1.bf16.msra.mxu0 %v2745
        %2969 = vmatprep.subr.bf16.mxu0 %v2744
        %2970 = vmatpush1.bf16.msra.mxu0 %v2743
        %2971 = vmatprep.subr.bf16.mxu0 %v2742
        %2972 = vmatpush1.bf16.msra.mxu0 %v2741
        %2973 = vmatprep.subr.bf16.mxu0 %v2740
        %2974 = vmatpush1.bf16.msra.mxu0 %v2739
        %2975 = vmatprep.subr.bf16.mxu0 %v2738
        %2976 = vmatpush1.bf16.msra.mxu0 %v2737
        %2977 = vmatprep.subr.bf16.mxu0 %v2768
        %2978 = vmatpush2.bf16.msra.mxu0 %v2767
        %2979 = vmatprep.subr.bf16.mxu0 %v2766
        %2980 = vmatpush2.bf16.msra.mxu0 %v2765
        %2981 = vmatprep.subr.bf16.mxu0 %v2764
        %2982 = vmatpush2.bf16.msra.mxu0 %v2763
        %2983 = vmatprep.subr.bf16.mxu0 %v2762
        %2984 = vmatpush2.bf16.msra.mxu0 %v2761
        %2985 = vmatprep.subr.bf16.mxu0 %v2760
        %2986 = vmatpush2.bf16.msra.mxu0 %v2759
        %2987 = vmatprep.subr.bf16.mxu0 %v2758
        %2988 = vmatpush2.bf16.msra.mxu0 %v2757
        %2989 = vmatprep.subr.bf16.mxu0 %v2756
        %2990 = vmatpush2.bf16.msra.mxu0 %v2755
        %2991 = vmatprep.subr.bf16.mxu0 %v2754
        %2992 = vmatpush2.bf16.msra.mxu0 %v2753
        %2993 = vmatprep.mubr.bf16.mxu0 %v2930
        %2994 = vmatmul.mubr.bf16.gmra.mxu0 %v2929
        %v2995 = vpop.f32.mrf.mxu0
        %v2996 = vadd.f32 %v2804, %v2995
        %v2997 = vpop.f32.mrf.mxu0
        %v2998 = vadd.f32 %v2804, %v2997
        %v2999 = vpop.f32.mrf.mxu0
        %v3000 = vadd.f32 %v2809, %v2999
        %v3001 = vpop.f32.mrf.mxu0
        %v3002 = vadd.f32 %v2809, %v3001
        %3003 = vmatprep.mubr.bf16.mxu0 %v2932
        %3004 = vmatmul.mubr.bf16.gmra.mxu0 %v2931
        %v3005 = vpop.f32.mrf.mxu0
        %v3006 = vadd.f32 %v2814, %v3005
        %v3007 = vpop.f32.mrf.mxu0
        %v3008 = vadd.f32 %v2814, %v3007
        %v3009 = vpop.f32.mrf.mxu0
        %v3010 = vadd.f32 %v2819, %v3009
        %v3011 = vpop.f32.mrf.mxu0
        %v3012 = vadd.f32 %v2819, %v3011
        %3013 = vmatprep.mubr.bf16.mxu0 %v2934
        %3014 = vmatmul.mubr.bf16.gmra.mxu0 %v2933
        %v3015 = vpop.f32.mrf.mxu0
        %v3016 = vadd.f32 %v2824, %v3015
        %v3017 = vpop.f32.mrf.mxu0
        %v3018 = vadd.f32 %v2824, %v3017
        %v3019 = vpop.f32.mrf.mxu0
        %v3020 = vadd.f32 %v2829, %v3019
        %v3021 = vpop.f32.mrf.mxu0
        %v3022 = vadd.f32 %v2829, %v3021
        %3023 = vmatprep.mubr.bf16.mxu0 %v2936
        %3024 = vmatmul.mubr.bf16.gmra.mxu0 %v2935
        %v3025 = vpop.f32.mrf.mxu0
        %v3026 = vadd.f32 %v2834, %v3025
        %v3027 = vpop.f32.mrf.mxu0
        %v3028 = vadd.f32 %v2834, %v3027
        %v3029 = vpop.f32.mrf.mxu0
        %v3030 = vadd.f32 %v2839, %v3029
        %v3031 = vpop.f32.mrf.mxu0
        %v3032 = vadd.f32 %v2839, %v3031
        %3033 = vmatprep.mubr.bf16.mxu0 %v2938
        %3034 = vmatmul.mubr.bf16.gmra.mxu0 %v2937
        %v3035 = vpop.f32.mrf.mxu0
        %v3036 = vadd.f32 %v2844, %v3035
        %v3037 = vpop.f32.mrf.mxu0
        %v3038 = vadd.f32 %v2844, %v3037
        %v3039 = vpop.f32.mrf.mxu0
        %v3040 = vadd.f32 %v2849, %v3039
        %v3041 = vpop.f32.mrf.mxu0
        %v3042 = vadd.f32 %v2849, %v3041
        %3043 = vmatprep.mubr.bf16.mxu0 %v2940
        %3044 = vmatmul.mubr.bf16.gmra.mxu0 %v2939
        %v3045 = vpop.f32.mrf.mxu0
        %v3046 = vadd.f32 %v2854, %v3045
        %v3047 = vpop.f32.mrf.mxu0
        %v3048 = vadd.f32 %v2854, %v3047
        %v3049 = vpop.f32.mrf.mxu0
        %v3050 = vadd.f32 %v2859, %v3049
        %v3051 = vpop.f32.mrf.mxu0
        %v3052 = vadd.f32 %v2859, %v3051
        %3053 = vmatprep.mubr.bf16.mxu0 %v2942
        %3054 = vmatmul.mubr.bf16.gmra.mxu0 %v2941
        %v3055 = vpop.f32.mrf.mxu0
        %v3056 = vadd.f32 %v2864, %v3055
        %v3057 = vpop.f32.mrf.mxu0
        %v3058 = vadd.f32 %v2864, %v3057
        %v3059 = vpop.f32.mrf.mxu0
        %v3060 = vadd.f32 %v2869, %v3059
        %v3061 = vpop.f32.mrf.mxu0
        %v3062 = vadd.f32 %v2869, %v3061
        %3063 = vmatprep.mubr.bf16.mxu0 %v2944
        %3064 = vmatmul.mubr.bf16.gmra.mxu0 %v2943
        %v3065 = vpop.f32.mrf.mxu0
        %v3066 = vadd.f32 %v2874, %v3065
        %v3067 = vpop.f32.mrf.mxu0
        %v3068 = vadd.f32 %v2874, %v3067
        %v3069 = vpop.f32.mrf.mxu0
        %v3070 = vadd.f32 %v2879, %v3069
        %v3071 = vpop.f32.mrf.mxu0
        %v3072 = vadd.f32 %v2879, %v3071
        %3073 = vdwg.mxu0
        %v3074 = vmax.f32 %v2996, 0.0
        %v3075 = vmax.f32 %v2998, 0.0
        %v3076 = vmax.f32 %v3000, 0.0
        %v3077 = vmax.f32 %v3002, 0.0
        %v3078 = vmax.f32 %v3006, 0.0
        %v3079 = vmax.f32 %v3008, 0.0
        %v3080 = vmax.f32 %v3010, 0.0
        %v3081 = vmax.f32 %v3012, 0.0
        %v3082 = vmax.f32 %v3016, 0.0
        %v3083 = vmax.f32 %v3018, 0.0
        %v3084 = vmax.f32 %v3020, 0.0
        %v3085 = vmax.f32 %v3022, 0.0
        %v3086 = vmax.f32 %v3026, 0.0
        %v3087 = vmax.f32 %v3028, 0.0
        %v3088 = vmax.f32 %v3030, 0.0
        %v3089 = vmax.f32 %v3032, 0.0
        %v3090 = vmax.f32 %v3036, 0.0
        %v3091 = vmax.f32 %v3038, 0.0
        %v3092 = vmax.f32 %v3040, 0.0
        %v3093 = vmax.f32 %v3042, 0.0
        %v3094 = vmax.f32 %v3046, 0.0
        %v3095 = vmax.f32 %v3048, 0.0
        %v3096 = vmax.f32 %v3050, 0.0
        %v3097 = vmax.f32 %v3052, 0.0
        %v3098 = vmax.f32 %v3056, 0.0
        %v3099 = vmax.f32 %v3058, 0.0
        %v3100 = vmax.f32 %v3060, 0.0
        %v3101 = vmax.f32 %v3062, 0.0
        %v3102 = vmax.f32 %v3066, 0.0
        %v3103 = vmax.f32 %v3068, 0.0
        %v3104 = vmax.f32 %v3070, 0.0
        %v3105 = vmax.f32 %v3072, 0.0
        %v3106 = vpack.c.bf16 %v3076, %v3074
        %v3107 = vpack.c.bf16 %v3077, %v3075
        %v3108 = vpack.c.bf16 %v3080, %v3078
        %v3109 = vpack.c.bf16 %v3081, %v3079
        %v3110 = vpack.c.bf16 %v3084, %v3082
        %v3111 = vpack.c.bf16 %v3085, %v3083
        %v3112 = vpack.c.bf16 %v3088, %v3086
        %v3113 = vpack.c.bf16 %v3089, %v3087
        %v3114 = vpack.c.bf16 %v3092, %v3090
        %v3115 = vpack.c.bf16 %v3093, %v3091
        %v3116 = vpack.c.bf16 %v3096, %v3094
        %v3117 = vpack.c.bf16 %v3097, %v3095
        %v3118 = vpack.c.bf16 %v3100, %v3098
        %v3119 = vpack.c.bf16 %v3101, %v3099
        %v3120 = vpack.c.bf16 %v3104, %v3102
        %v3121 = vpack.c.bf16 %v3105, %v3103
        %v3122 = vld [vmem:[%s7] sm:$0xf]
        %v3123 = vld [vmem:[%s7 + $0x4] sm:$0xf]
        %v3124 = vld [vmem:[%s7 + $0x8] sm:$0xf]
        %v3125 = vld [vmem:[%s7 + $0xc] sm:$0xf]
        %v3126 = vld [vmem:[%s7 + $0x10] sm:$0xf]
        %v3127 = vld [vmem:[%s7 + $0x14] sm:$0xf]
        %v3128 = vld [vmem:[%s7 + $0x18] sm:$0xf]
        %v3129 = vld [vmem:[%s7 + $0x1c] sm:$0xf]
        %v3130 = vld [vmem:[%s7 + $0x20] sm:$0xf]
        %v3131 = vld [vmem:[%s7 + $0x24] sm:$0xf]
        %v3132 = vld [vmem:[%s7 + $0x28] sm:$0xf]
        %v3133 = vld [vmem:[%s7 + $0x2c] sm:$0xf]
        %v3134 = vld [vmem:[%s7 + $0x30] sm:$0xf]
        %v3135 = vld [vmem:[%s7 + $0x34] sm:$0xf]
        %v3136 = vld [vmem:[%s7 + $0x38] sm:$0xf]
        %v3137 = vld [vmem:[%s7 + $0x3c] sm:$0xf]
        %v3138 = vld [vmem:[%s8] sm:$0xff]
        %v3139 = vld [vmem:[%s8 + $0x8] sm:$0xff]
        %v3140 = vld [vmem:[%s8 + $0x10] sm:$0xff]
        %v3141 = vld [vmem:[%s8 + $0x18] sm:$0xff]
        %v3142 = vld [vmem:[%s8 + $0x20] sm:$0xff]
        %v3143 = vld [vmem:[%s8 + $0x28] sm:$0xff]
        %v3144 = vld [vmem:[%s8 + $0x30] sm:$0xff]
        %v3145 = vld [vmem:[%s8 + $0x38] sm:$0xff]
        %v3146 = vld [vmem:[%s8 + $0x40] sm:$0xff]
        %v3147 = vld [vmem:[%s8 + $0x48] sm:$0xff]
        %v3148 = vld [vmem:[%s8 + $0x50] sm:$0xff]
        %v3149 = vld [vmem:[%s8 + $0x58] sm:$0xff]
        %v3150 = vld [vmem:[%s8 + $0x60] sm:$0xff]
        %v3151 = vld [vmem:[%s8 + $0x68] sm:$0xff]
        %v3152 = vld [vmem:[%s8 + $0x70] sm:$0xff]
        %v3153 = vld [vmem:[%s8 + $0x78] sm:$0xff]
        %3155 = vset.pattern.permute.xlu0 0
        %3156 = vperm.xlu0 %3155, %v3138
        %v3157 = vpop.permute.xlu0 %3156
        %3160 = vset.pattern.permute.xlu0 0
        %3161 = vperm.xlu0 %3160, %v3139
        %v3162 = vpop.permute.xlu0 %3161
        %3165 = vset.pattern.permute.xlu0 0
        %3166 = vperm.xlu0 %3165, %v3140
        %v3167 = vpop.permute.xlu0 %3166
        %3170 = vset.pattern.permute.xlu0 0
        %3171 = vperm.xlu0 %3170, %v3141
        %v3172 = vpop.permute.xlu0 %3171
        %3175 = vset.pattern.permute.xlu0 0
        %3176 = vperm.xlu0 %3175, %v3142
        %v3177 = vpop.permute.xlu0 %3176
        %3180 = vset.pattern.permute.xlu0 0
        %3181 = vperm.xlu0 %3180, %v3143
        %v3182 = vpop.permute.xlu0 %3181
        %3185 = vset.pattern.permute.xlu0 0
        %3186 = vperm.xlu0 %3185, %v3144
        %v3187 = vpop.permute.xlu0 %3186
        %3190 = vset.pattern.permute.xlu0 0
        %3191 = vperm.xlu0 %3190, %v3145
        %v3192 = vpop.permute.xlu0 %3191
        %3195 = vset.pattern.permute.xlu0 0
        %3196 = vperm.xlu0 %3195, %v3146
        %v3197 = vpop.permute.xlu0 %3196
        %3200 = vset.pattern.permute.xlu0 0
        %3201 = vperm.xlu0 %3200, %v3147
        %v3202 = vpop.permute.xlu0 %3201
        %3205 = vset.pattern.permute.xlu0 0
        %3206 = vperm.xlu0 %3205, %v3148
        %v3207 = vpop.permute.xlu0 %3206
        %3210 = vset.pattern.permute.xlu0 0
        %3211 = vperm.xlu0 %3210, %v3149
        %v3212 = vpop.permute.xlu0 %3211
        %3215 = vset.pattern.permute.xlu0 0
        %3216 = vperm.xlu0 %3215, %v3150
        %v3217 = vpop.permute.xlu0 %3216
        %3220 = vset.pattern.permute.xlu0 0
        %3221 = vperm.xlu0 %3220, %v3151
        %v3222 = vpop.permute.xlu0 %3221
        %3225 = vset.pattern.permute.xlu0 0
        %3226 = vperm.xlu0 %3225, %v3152
        %v3227 = vpop.permute.xlu0 %3226
        %3230 = vset.pattern.permute.xlu0 0
        %3231 = vperm.xlu0 %3230, %v3153
        %v3232 = vpop.permute.xlu0 %3231
        %v3250 = vunpack.c.l.b16 %v3122
        %v3251 = vunpack.c.l.b16 %v3123
        %v3252 = vunpack.c.l.b16 %v3124
        %v3253 = vunpack.c.l.b16 %v3125
        %v3254 = vunpack.c.l.b16 %v3126
        %v3255 = vunpack.c.l.b16 %v3127
        %v3256 = vunpack.c.l.b16 %v3128
        %v3257 = vunpack.c.l.b16 %v3129
        %v3258 = vunpack.c.l.b16 %v3130
        %v3259 = vunpack.c.l.b16 %v3131
        %v3260 = vunpack.c.l.b16 %v3132
        %v3261 = vunpack.c.l.b16 %v3133
        %v3262 = vunpack.c.l.b16 %v3134
        %v3263 = vunpack.c.l.b16 %v3135
        %v3264 = vunpack.c.l.b16 %v3136
        %v3265 = vunpack.c.l.b16 %v3137
        %v3266 = vpack.c.b16 %v3251, %v3250
        %v3267 = vpack.c.b16 %v3253, %v3252
        %v3268 = vpack.c.b16 %v3255, %v3254
        %v3269 = vpack.c.b16 %v3257, %v3256
        %v3270 = vpack.c.b16 %v3259, %v3258
        %v3271 = vpack.c.b16 %v3261, %v3260
        %v3272 = vpack.c.b16 %v3263, %v3262
        %v3273 = vpack.c.b16 %v3265, %v3264
        %3282 = vmatprep.subr.bf16.mxu0 %v3121
        %3283 = vmatpush1.bf16.msra.mxu0 %v3120
        %3284 = vmatprep.subr.bf16.mxu0 %v3119
        %3285 = vmatpush1.bf16.msra.mxu0 %v3118
        %3286 = vmatprep.subr.bf16.mxu0 %v3117
        %3287 = vmatpush1.bf16.msra.mxu0 %v3116
        %3288 = vmatprep.subr.bf16.mxu0 %v3115
        %3289 = vmatpush1.bf16.msra.mxu0 %v3114
        %3290 = vmatprep.subr.bf16.mxu0 %v3113
        %3291 = vmatpush1.bf16.msra.mxu0 %v3112
        %3292 = vmatprep.subr.bf16.mxu0 %v3111
        %3293 = vmatpush1.bf16.msra.mxu0 %v3110
        %3294 = vmatprep.subr.bf16.mxu0 %v3109
        %3295 = vmatpush1.bf16.msra.mxu0 %v3108
        %3296 = vmatprep.subr.bf16.mxu0 %v3107
        %3297 = vmatpush1.bf16.msra.mxu0 %v3106
        %3298 = vmatprep.subr.bf16.mxu0 0
        %3299 = vmatpush2.bf16.msra.mxu0 0
        %3300 = vmatprep.subr.bf16.mxu0 0
        %3301 = vmatpush2.bf16.msra.mxu0 0
        %3302 = vmatprep.subr.bf16.mxu0 0
        %3303 = vmatpush2.bf16.msra.mxu0 0
        %3304 = vmatprep.subr.bf16.mxu0 0
        %3305 = vmatpush2.bf16.msra.mxu0 0
        %3306 = vmatprep.subr.bf16.mxu0 0
        %3307 = vmatpush2.bf16.msra.mxu0 0
        %3308 = vmatprep.subr.bf16.mxu0 0
        %3309 = vmatpush2.bf16.msra.mxu0 0
        %3310 = vmatprep.subr.bf16.mxu0 0
        %3311 = vmatpush2.bf16.msra.mxu0 0
        %3312 = vmatprep.subr.bf16.mxu0 0
        %3313 = vmatpush2.bf16.msra.mxu0 0
        %3314 = vmatprep.mubr.bf16.mxu0 0
        %3315 = vmatmul.mubr.bf16.gmra.mxu0 %v3266
        %v3316 = vpop.f32.mrf.mxu0
        %v3317 = vadd.f32 %v3157, %v3316
        %v3318 = vpop.f32.mrf.mxu0
        %v3319 = vadd.f32 %v3157, %v3318
        %v3320 = vpop.f32.mrf.mxu0
        %v3321 = vadd.f32 %v3162, %v3320
        %v3322 = vpop.f32.mrf.mxu0
        %v3323 = vadd.f32 %v3162, %v3322
        %3324 = vmatprep.mubr.bf16.mxu0 0
        %3325 = vmatmul.mubr.bf16.gmra.mxu0 %v3267
        %v3326 = vpop.f32.mrf.mxu0
        %v3327 = vadd.f32 %v3167, %v3326
        %v3328 = vpop.f32.mrf.mxu0
        %v3329 = vadd.f32 %v3167, %v3328
        %v3330 = vpop.f32.mrf.mxu0
        %v3331 = vadd.f32 %v3172, %v3330
        %v3332 = vpop.f32.mrf.mxu0
        %v3333 = vadd.f32 %v3172, %v3332
        %3334 = vmatprep.mubr.bf16.mxu0 0
        %3335 = vmatmul.mubr.bf16.gmra.mxu0 %v3268
        %v3336 = vpop.f32.mrf.mxu0
        %v3337 = vadd.f32 %v3177, %v3336
        %v3338 = vpop.f32.mrf.mxu0
        %v3339 = vadd.f32 %v3177, %v3338
        %v3340 = vpop.f32.mrf.mxu0
        %v3341 = vadd.f32 %v3182, %v3340
        %v3342 = vpop.f32.mrf.mxu0
        %v3343 = vadd.f32 %v3182, %v3342
        %3344 = vmatprep.mubr.bf16.mxu0 0
        %3345 = vmatmul.mubr.bf16.gmra.mxu0 %v3269
        %v3346 = vpop.f32.mrf.mxu0
        %v3347 = vadd.f32 %v3187, %v3346
        %v3348 = vpop.f32.mrf.mxu0
        %v3349 = vadd.f32 %v3187, %v3348
        %v3350 = vpop.f32.mrf.mxu0
        %v3351 = vadd.f32 %v3192, %v3350
        %v3352 = vpop.f32.mrf.mxu0
        %v3353 = vadd.f32 %v3192, %v3352
        %3354 = vmatprep.mubr.bf16.mxu0 0
        %3355 = vmatmul.mubr.bf16.gmra.mxu0 %v3270
        %v3356 = vpop.f32.mrf.mxu0
        %v3357 = vadd.f32 %v3197, %v3356
        %v3358 = vpop.f32.mrf.mxu0
        %v3359 = vadd.f32 %v3197, %v3358
        %v3360 = vpop.f32.mrf.mxu0
        %v3361 = vadd.f32 %v3202, %v3360
        %v3362 = vpop.f32.mrf.mxu0
        %v3363 = vadd.f32 %v3202, %v3362
        %3364 = vmatprep.mubr.bf16.mxu0 0
        %3365 = vmatmul.mubr.bf16.gmra.mxu0 %v3271
        %v3366 = vpop.f32.mrf.mxu0
        %v3367 = vadd.f32 %v3207, %v3366
        %v3368 = vpop.f32.mrf.mxu0
        %v3369 = vadd.f32 %v3207, %v3368
        %v3370 = vpop.f32.mrf.mxu0
        %v3371 = vadd.f32 %v3212, %v3370
        %v3372 = vpop.f32.mrf.mxu0
        %v3373 = vadd.f32 %v3212, %v3372
        %3374 = vmatprep.mubr.bf16.mxu0 0
        %3375 = vmatmul.mubr.bf16.gmra.mxu0 %v3272
        %v3376 = vpop.f32.mrf.mxu0
        %v3377 = vadd.f32 %v3217, %v3376
        %v3378 = vpop.f32.mrf.mxu0
        %v3379 = vadd.f32 %v3217, %v3378
        %v3380 = vpop.f32.mrf.mxu0
        %v3381 = vadd.f32 %v3222, %v3380
        %v3382 = vpop.f32.mrf.mxu0
        %v3383 = vadd.f32 %v3222, %v3382
        %3384 = vmatprep.mubr.bf16.mxu0 0
        %3385 = vmatmul.mubr.bf16.gmra.mxu0 %v3273
        %v3386 = vpop.f32.mrf.mxu0
        %v3387 = vadd.f32 %v3227, %v3386
        %v3388 = vpop.f32.mrf.mxu0
        %v3389 = vadd.f32 %v3227, %v3388
        %v3390 = vpop.f32.mrf.mxu0
        %v3391 = vadd.f32 %v3232, %v3390
        %v3392 = vpop.f32.mrf.mxu0
        %v3393 = vadd.f32 %v3232, %v3392
        %3394 = vdwg.mxu0
        %v3395 = vmax.f32 %v3317, 0.0
        %v3396 = vmax.f32 %v3319, 0.0
        %v3397 = vmax.f32 %v3321, 0.0
        %v3398 = vmax.f32 %v3323, 0.0
        %v3399 = vmax.f32 %v3327, 0.0
        %v3400 = vmax.f32 %v3329, 0.0
        %v3401 = vmax.f32 %v3331, 0.0
        %v3402 = vmax.f32 %v3333, 0.0
        %v3403 = vmax.f32 %v3337, 0.0
        %v3404 = vmax.f32 %v3339, 0.0
        %v3405 = vmax.f32 %v3341, 0.0
        %v3406 = vmax.f32 %v3343, 0.0
        %v3407 = vmax.f32 %v3347, 0.0
        %v3408 = vmax.f32 %v3349, 0.0
        %v3409 = vmax.f32 %v3351, 0.0
        %v3410 = vmax.f32 %v3353, 0.0
        %v3411 = vmax.f32 %v3357, 0.0
        %v3412 = vmax.f32 %v3359, 0.0
        %v3413 = vmax.f32 %v3361, 0.0
        %v3414 = vmax.f32 %v3363, 0.0
        %v3415 = vmax.f32 %v3367, 0.0
        %v3416 = vmax.f32 %v3369, 0.0
        %v3417 = vmax.f32 %v3371, 0.0
        %v3418 = vmax.f32 %v3373, 0.0
        %v3419 = vmax.f32 %v3377, 0.0
        %v3420 = vmax.f32 %v3379, 0.0
        %v3421 = vmax.f32 %v3381, 0.0
        %v3422 = vmax.f32 %v3383, 0.0
        %v3423 = vmax.f32 %v3387, 0.0
        %v3424 = vmax.f32 %v3389, 0.0
        %v3425 = vmax.f32 %v3391, 0.0
        %v3426 = vmax.f32 %v3393, 0.0
        %v3427 = vpack.c.bf16 %v3397, %v3395
        %v3428 = vpack.c.bf16 %v3398, %v3396
        %v3429 = vpack.c.bf16 %v3401, %v3399
        %v3430 = vpack.c.bf16 %v3402, %v3400
        %v3431 = vpack.c.bf16 %v3405, %v3403
        %v3432 = vpack.c.bf16 %v3406, %v3404
        %v3433 = vpack.c.bf16 %v3409, %v3407
        %v3434 = vpack.c.bf16 %v3410, %v3408
        %v3435 = vpack.c.bf16 %v3413, %v3411
        %v3436 = vpack.c.bf16 %v3414, %v3412
        %v3437 = vpack.c.bf16 %v3417, %v3415
        %v3438 = vpack.c.bf16 %v3418, %v3416
        %v3439 = vpack.c.bf16 %v3421, %v3419
        %v3440 = vpack.c.bf16 %v3422, %v3420
        %v3441 = vpack.c.bf16 %v3425, %v3423
        %v3442 = vpack.c.bf16 %v3426, %v3424
        %v3443 = vld [vmem:[%s9] sm:$0xf]
        %v3444 = vld [vmem:[%s10] sm:$0xff]
        %3446 = vset.pattern.permute.xlu0 0
        %3447 = vperm.xlu0 %3446, %v3444
        %v3448 = vpop.permute.xlu0 %3447
        %3450 = vmatprep.subr.bf16.mxu0 %v3442
        %3451 = vmatpush1.bf16.msra.mxu0 %v3441
        %3452 = vmatprep.subr.bf16.mxu0 %v3440
        %3453 = vmatpush1.bf16.msra.mxu0 %v3439
        %3454 = vmatprep.subr.bf16.mxu0 %v3438
        %3455 = vmatpush1.bf16.msra.mxu0 %v3437
        %3456 = vmatprep.subr.bf16.mxu0 %v3436
        %3457 = vmatpush1.bf16.msra.mxu0 %v3435
        %3458 = vmatprep.subr.bf16.mxu0 %v3434
        %3459 = vmatpush1.bf16.msra.mxu0 %v3433
        %3460 = vmatprep.subr.bf16.mxu0 %v3432
        %3461 = vmatpush1.bf16.msra.mxu0 %v3431
        %3462 = vmatprep.subr.bf16.mxu0 %v3430
        %3463 = vmatpush1.bf16.msra.mxu0 %v3429
        %3464 = vmatprep.subr.bf16.mxu0 %v3428
        %3465 = vmatpush1.bf16.msra.mxu0 %v3427
        %3466 = vmatprep.subr.bf16.mxu0 0
        %3467 = vmatpush2.bf16.msra.mxu0 0
        %3468 = vmatprep.subr.bf16.mxu0 0
        %3469 = vmatpush2.bf16.msra.mxu0 0
        %3470 = vmatprep.subr.bf16.mxu0 0
        %3471 = vmatpush2.bf16.msra.mxu0 0
        %3472 = vmatprep.subr.bf16.mxu0 0
        %3473 = vmatpush2.bf16.msra.mxu0 0
        %3474 = vmatprep.subr.bf16.mxu0 0
        %3475 = vmatpush2.bf16.msra.mxu0 0
        %3476 = vmatprep.subr.bf16.mxu0 0
        %3477 = vmatpush2.bf16.msra.mxu0 0
        %3478 = vmatprep.subr.bf16.mxu0 0
        %3479 = vmatpush2.bf16.msra.mxu0 0
        %3480 = vmatprep.subr.bf16.mxu0 0
        %3481 = vmatpush2.bf16.msra.mxu0 0
        %3482 = vmatprep.mubr.bf16.mxu0 0
        %3483 = vmatmul.mubr.bf16.gmra.mxu0 %v3443
        %v3484 = vpop.f32.mrf.mxu0
        %v3485 = vadd.f32 %v3448, %v3484
        %v3486 = vpop.f32.mrf.mxu0
        %v3487 = vadd.f32 %v3448, %v3486
        %v3488 = vpop.f32.mrf.mxu0
        %v3489 = vpop.f32.mrf.mxu0
        %3490 = vdwg.mxu0
        %3491 = vst [vmem:[%s419] sm:$0xff] %v3485
        %3492 = vst [vmem:[%s419 + $0x8] sm:$0xff] %v3487
        %s3493 = sand.u32 %s290, 1
        %s3494 = scalar_lea.sflag [#allocation3], %s3493
        %s3495 = sand.u32 %s290, 1
        %s3496 = smul.addr %s3495, 16
        %s3497 = scalar_lea.vmem [#allocation2], %s3496
        // Predicated region
        $region65: #{tpu_custom_call.1} parent=63 // pred_check
          %p3498 = pneg %p300
        $region66: #{tpu_custom_call.1} parent=63 // pred_check_branch
          %3500 = sbr.rel (%p3498) target = $region68
        $region67: #{tpu_custom_call.1} parent=63 // pred_region
          %s3501 = smul.u32 2, %s30
          %s3503 = ssub.s32 256, 256
          %3504 = vsyncadd %s3494, %s3503
          %s3505 = smul.addr %s29, 2
          %s3506 = sadd.s32 %s3501, %s3505
          %s3507 = smul.addr %s3506, 128
          %s3508 = scalar_lea.hbm %s11, %s3507
          %s3510 = sshll.u32 %s3497, 4
          %s3511 = int_to_ptr.vmem [resolvable:$true] %s3510
          %3513 = dma.vmem_to_hbm [thread:$0]  %s3511, 256, %s3508, %s3494
        $region68: #{tpu_custom_call.1} parent=63 // pred_fallthru
          _
      $region64: #{tpu_custom_call.1} parent=5 // pred_fallthru
        _
      %p3514 = scmp.le.s32.totalorder 2, %s20
      // Predicated region
      $region69: #{tpu_custom_call.1} parent=5 // pred_check
        %p3515 = pneg %p3514
      $region70: #{tpu_custom_call.1} parent=5 // pred_check_branch
        %3517 = sbr.rel (%p3515) target = $region72
      $region71: #{tpu_custom_call.1} parent=5 // pred_region
        %s3518 = ssub.s32 %s20, 2
        // Predicated region
        $region73: #{tpu_custom_call.1} parent=71 // pred_check
          %p3519 = pneg %p306
        $region74: #{tpu_custom_call.1} parent=71 // pred_check_branch
          %3521 = sbr.rel (%p3519) target = $region76
        $region75: #{tpu_custom_call.1} parent=71 // pred_region
          %s3522 = sand.u32 %s291, 1
          %s3523 = scalar_lea.sflag [#allocation3], %s3522
          %s3524 = sand.u32 %s291, 1
          %s3525 = smul.addr %s3524, 16
          %s3526 = scalar_lea.vmem [#allocation2], %s3525
          %3527 = dma.done %s3523, 256
        $region76: #{tpu_custom_call.1} parent=71 // pred_fallthru
          _
      $region72: #{tpu_custom_call.1} parent=5 // pred_fallthru
        _
    $region6: #{tpu_custom_call.1} parent=1 // loop_footer
      %s24 = sadd.s32 1, %s20
    $region7: #{tpu_custom_call.1} parent=1 // loop_footer_branch
      %19 = sbr.rel target = $region3
    $region8: #{tpu_custom_call.1} parent=1 // loop_exit
      _
    %3528 = vsyncpa [#allocation3], 1
    %s3529 = scalar_lea.sflag [#allocation3], 1
    %3530 = vsyncpa %s3529, 1

</llo_original>
